<compile_context>
chip_gen: v6e
topology: v6e:2x2x1
jax: 0.10.0
libtpu: 0.0.40
codegen_flags: <defaults>
</compile_context>

<pallas_src>
import functools

import numpy as np
import jax
import jax.numpy as jnp
from jax import lax
from jax.experimental import pallas as pl
from jax.experimental.pallas import tpu as pltpu

# ----------------------------- hyperparameters ------------------------------
INPUT_CHANNEL = 4            # args.input_channel
NGF = 8                      # args.ngf
IN_EPS = 1e-5                # nn.InstanceNorm2d default eps

H0 = 8                       # decoder input spatial size (toy)
H1 = 2 * H0                  # after first Upsample(2x)  -> 16
H2 = 4 * H0                  # after second Upsample(2x) -> 32
P1 = H1 * H1                 # 256  (lane-dense)
P2 = H2 * H2                 # 1024 (lane-dense)
WEXT = H2 + 4                # 36: row width of the reflect-extended conv3 grid
P4 = H2 * WEXT               # 1152 = 9*128: conv4 extended (lane-dense) output
PEXT = ((2 * WEXT + 2 + P4) + 127) // 128 * 128   # 1280: conv3 extended grid


# --------------------------- static index-map glue --------------------------
def _reflect(i, n):
    """ReflectionPad(1) index map for i in [-1, n]."""
    i = np.where(i < 0, -i, i)
    return np.where(i >= n, 2 * (n - 1) - i, i)


def _upsample_conv_indices(src, out):
    """Fused nearest-Upsample(2x) + reflect-pad(1) + 3x3 im2col index map.

    Returns (9, out*out) int32 flat indices into the (src*src)-flattened source
    activation, tap-ordered (ky, kx) to match W.reshape(Cout, Cin*9).
    """
    h = np.arange(out)
    hh, ww = np.meshgrid(h, h, indexing="ij")
    idx = np.empty((3, 3, out, out), np.int64)
    for ky in range(3):
        for kx in range(3):
            uh = _reflect(hh - 1 + ky, out) // 2     # reflect-pad then undo 2x upsample
            uw = _reflect(ww - 1 + kx, out) // 2
            idx[ky, kx] = uh * src + uw
    return jnp.asarray(idx.reshape(9, out * out), dtype=jnp.int32)


def _dec34_indices(h, wext, pext):
    """Index map + IN mask for the fused conv3+conv4 kernel.

    conv3 is evaluated on a reflect-extended (h+2)x(h+2) grid stored in rows of
    width `wext`, so that conv4's 3x3 reflect-padded taps become constant flat
    lane offsets ky*wext+kx (contiguous static slices inside the kernel).
    The reflected border cells are exact duplicates of interior conv3 outputs,
    so normalizing them with the (masked, interior-only) IN statistics keeps
    conv4's input bit-consistent with reflect-padding the real conv3 output.
    """
    p = np.arange(pext)
    rr, cc = p // wext, p % wext
    r = np.minimum(rr, h + 1)
    c = np.minimum(cc, h + 1)
    h3 = _reflect(r - 1, h)                  # conv4's reflect padding of y3
    w3 = _reflect(c - 1, h)
    idx = np.empty((3, 3, pext), np.int64)
    for ky in range(3):
        for kx in range(3):
            sh = _reflect(h3 - 1 + ky, h)    # conv3's own reflect padding
            sw = _reflect(w3 - 1 + kx, h)
            idx[ky, kx] = sh * h + sw
    mask = ((rr >= 1) & (rr <= h) & (cc >= 1) & (cc <= h)).astype(np.float32)
    return (jnp.asarray(idx.reshape(9, pext), dtype=jnp.int32),
            jnp.asarray(mask[None, :]))


def _gather_patches(x_flat, idx):
    """x_flat: (N, C, S) ; idx: (9, P) -> transposed im2col patches (N, C*9, P)."""
    n, c, _ = x_flat.shape
    t, p = idx.shape
    g = jnp.take(x_flat, idx, axis=2)        # (N, C, 9, P)
    return g.reshape(n, c * t, p)


# ------------------------------ Pallas kernels -------------------------------
def _conv_in_relu_kernel(p_ref, w_ref, o_ref):
    """(Upsample+)Conv + InstanceNorm + ReLU, transposed / lane-dense.

    p_ref: (1, K, P) bf16 patches, w_ref: (Cout, K) bf16, o_ref: (1, Cout, P) bf16.
    """
    y = jnp.dot(w_ref[...], p_ref[0], preferred_element_type=jnp.float32)  # (Cout,P)
    # conv bias omitted: InstanceNorm(affine=False) subtracts the per-channel
    # mean, so a constant per-channel bias cancels exactly.
    n = y.shape[1]
    s1 = jnp.sum(y, axis=1, keepdims=True)
    s2 = jnp.sum(y * y, axis=1, keepdims=True)
    mean = s1 * (1.0 / n)
    var = jnp.maximum(s2 * (1.0 / n) - mean * mean, 0.0)
    y = jnp.maximum((y - mean) * lax.rsqrt(var + IN_EPS), 0.0)
    o_ref[0] = y.astype(o_ref.dtype)


def _conv34_kernel(wext, n_valid, p_ref, m_ref, w3_ref, w4_ref, b4_ref, o_ref):
    """Fused conv3 + IN + ReLU + conv4 + Tanh on the reflect-extended grid.

    p_ref: (1, Cin3*9, PEXT) bf16, m_ref: (1, PEXT) f32 valid-position mask,
    w3_ref: (C3, Cin3*9) bf16, w4_ref: (9, C4, C3) bf16, b4_ref: (C4, 1) f32,
    o_ref: (1, C4, P4) f32.
    """
    y3 = jnp.dot(w3_ref[...], p_ref[0], preferred_element_type=jnp.float32)
    mask = m_ref[...]
    inv = 1.0 / n_valid
    s1 = jnp.sum(y3 * mask, axis=1, keepdims=True)
    s2 = jnp.sum(y3 * y3 * mask, axis=1, keepdims=True)
    mean = s1 * inv
    var = jnp.maximum(s2 * inv - mean * mean, 0.0)
    y3 = jnp.maximum((y3 - mean) * lax.rsqrt(var + IN_EPS), 0.0)
    y3 = y3.astype(jnp.bfloat16)

    cout, p_out = o_ref.shape[1], o_ref.shape[2]
    acc = jnp.zeros((cout, p_out), jnp.float32)
    for ky in range(3):                       # unrolled: conv4 taps are constant
        for kx in range(3):                   # lane offsets into the extended grid
            t = ky * 3 + kx
            off = ky * wext + kx
            acc = acc + jnp.dot(w4_ref[t], y3[:, off:off + p_out],
                                preferred_element_type=jnp.float32)
    o_ref[0] = jnp.tanh(acc + b4_ref[...])


def _conv_in_relu(patches, wmat, cout):
    n, k, p = patches.shape
    return pl.pallas_call(
        _conv_in_relu_kernel,
        grid=(n,),
        in_specs=[pl.BlockSpec((1, k, p), lambda i: (i, 0, 0)),
                  pl.BlockSpec((cout, k), lambda i: (0, 0))],
        out_specs=pl.BlockSpec((1, cout, p), lambda i: (i, 0, 0)),
        out_shape=jax.ShapeDtypeStruct((n, cout, p), jnp.bfloat16),
        compiler_params=pltpu.CompilerParams(dimension_semantics=("parallel",)),
    )(patches, wmat)


def _conv34(patches, mask, w3, w4t, b4, cout, p_out, wext, n_valid):
    n, k3, pext = patches.shape
    kern = functools.partial(_conv34_kernel, wext, n_valid)
    return pl.pallas_call(
        kern,
        grid=(n,),
        in_specs=[pl.BlockSpec((1, k3, pext), lambda i: (i, 0, 0)),
                  pl.BlockSpec((1, pext), lambda i: (0, 0)),
                  pl.BlockSpec(w3.shape, lambda i: (0, 0)),
                  pl.BlockSpec(w4t.shape, lambda i: (0, 0, 0)),
                  pl.BlockSpec(b4.shape, lambda i: (0, 0))],
        out_specs=pl.BlockSpec((1, cout, p_out), lambda i: (i, 0, 0)),
        out_shape=jax.ShapeDtypeStruct((n, cout, p_out), jnp.float32),
        compiler_params=pltpu.CompilerParams(dimension_semantics=("parallel",)),
    )(patches, mask, w3, w4t, b4)


# --------------------------- parameter construction --------------------------
def spectral_normalize(w, iters=30, eps=1e-12):
    """Deterministic power-iteration spectral normalization (setup-time only)."""
    wm = w.reshape(w.shape[0], -1)
    u = jnp.ones((wm.shape[0],), jnp.float32)
    u = u / (jnp.linalg.norm(u) + eps)
    v = None
    for _ in range(iters):
        v = wm.T @ u
        v = v / (jnp.linalg.norm(v) + eps)
        u = wm @ v
        u = u / (jnp.linalg.norm(u) + eps)
    sigma = u @ (wm @ v)
    return w / sigma


def init_decoder_params(key):
    def conv(k, cout, cin):
        kw, kb = jax.random.split(k)
        w = jax.random.normal(kw, (cout, cin, 3, 3), jnp.float32) * 0.1
        b = jax.random.normal(kb, (cout,), jnp.float32) * 0.01
        return spectral_normalize(w), b

    k1, k2, k3, k4 = jax.random.split(key, 4)
    return {
        "conv1": conv(k1, 2 * NGF, 4 * NGF),
        "conv2": conv(k2, NGF, 2 * NGF),
        "conv3": conv(k3, INPUT_CHANNEL, NGF),
        "conv4": conv(k4, INPUT_CHANNEL, INPUT_CHANNEL),
    }


def prepare_decoder(params):
    """Kernel-friendly parameter layouts + static fused index maps."""
    (w1, _b1), (w2, _b2), (w3, _b3), (w4, b4) = (
        params["conv1"], params["conv2"], params["conv3"], params["conv4"])
    idx3, mask3 = _dec34_indices(H2, WEXT, PEXT)
    return {
        # (Cout, Cin*9) bf16 weight matrices for the transposed lane-dense matmul
        "w1": w1.reshape(2 * NGF, -1).astype(jnp.bfloat16),
        "w2": w2.reshape(NGF, -1).astype(jnp.bfloat16),
        "w3": w3.reshape(INPUT_CHANNEL, -1).astype(jnp.bfloat16),
        # conv4 per-tap (Cout, Cin) weights, tap-major
        "w4": jnp.transpose(w4, (2, 3, 0, 1))
                .reshape(9, INPUT_CHANNEL, INPUT_CHANNEL).astype(jnp.bfloat16),
        "b4": b4.reshape(INPUT_CHANNEL, 1).astype(jnp.float32),
        # fused (upsample + reflect-pad + im2col) gather maps
        "idx1": _upsample_conv_indices(H0, H1),
        "idx2": _upsample_conv_indices(H1, H2),
        "idx3": idx3,
        "mask3": mask3,
    }


# --------------------------------- forward -----------------------------------
def decoder_forward(x_nchw, prep):
    n = x_nchw.shape[0]
    x = x_nchw.reshape(n, 4 * NGF, H0 * H0).astype(jnp.bfloat16)   # NCHW -> (N,C,P)

    # Upsample(2x) -> conv1 -> IN -> ReLU           (pallas_call #1)
    p1 = _gather_patches(x, prep["idx1"])                           # (N, 288, 256)
    y1 = _conv_in_relu(p1, prep["w1"], 2 * NGF)                     # (N, 16, 256)

    # Upsample(2x) -> conv2 -> IN -> ReLU           (pallas_call #2)
    p2 = _gather_patches(y1, prep["idx2"])                          # (N, 144, 1024)
    y2 = _conv_in_relu(p2, prep["w2"], NGF)                         # (N, 8, 1024)

    # conv3 -> IN -> ReLU -> conv4 -> Tanh          (pallas_call #3, fused)
    p3 = _gather_patches(y2, prep["idx3"])                          # (N, 72, PEXT)
    y4 = _conv34(p3, prep["mask3"], prep["w3"], prep["w4"], prep["b4"],
                 INPUT_CHANNEL, P4, WEXT, float(H2 * H2))           # (N, 4, 1152)

    # drop the extended columns of the conv4 grid -> NCHW output
    return y4.reshape(n, INPUT_CHANNEL, H2, WEXT)[:, :, :, :H2].astype(jnp.float32)


# --------------------------- pure-JAX f32 reference --------------------------
def _reflect_pad(x):
    return jnp.pad(x, ((0, 0), (0, 0), (1, 1), (1, 1)), mode="reflect")


def _conv2d_ref(x, w, b):
    y = lax.conv_general_dilated(_reflect_pad(x), w, (1, 1), "VALID",
                                 dimension_numbers=("NCHW", "OIHW", "NCHW"))
    return y + b[None, :, None, None]


def _instance_norm_ref(x):
    m = jnp.mean(x, axis=(2, 3), keepdims=True)
    v = jnp.mean((x - m) ** 2, axis=(2, 3), keepdims=True)
    return (x - m) * lax.rsqrt(v + IN_EPS)


def _upsample2x_ref(x):
    return jnp.repeat(jnp.repeat(x, 2, axis=2), 2, axis=3)


def decoder_reference(x, params):
    w1, b1 = params["conv1"]; w2, b2 = params["conv2"]
    w3, b3 = params["conv3"]; w4, b4 = params["conv4"]
    x = jax.nn.relu(_instance_norm_ref(_conv2d_ref(_upsample2x_ref(x), w1, b1)))
    x = jax.nn.relu(_instance_norm_ref(_conv2d_ref(_upsample2x_ref(x), w2, b2)))
    x = jax.nn.relu(_instance_norm_ref(_conv2d_ref(x, w3, b3)))
    return jnp.tanh(_conv2d_ref(x, w4, b4))


# ----------------------------------- main ------------------------------------
if __name__ == "__main__":
    key = jax.random.PRNGKey(0)
    kx, kp = jax.random.split(key)

    # Decoder input: (N, 4*ngf, H, W) = (2, 32, 8, 8) -> output (2, 4, 32, 32)
    x = jax.random.normal(kx, (2, 4 * NGF, H0, H0), jnp.float32)
    params = init_decoder_params(kp)
    prep = prepare_decoder(params)

    fwd = jax.jit(decoder_forward)
    y = fwd(x, prep)
    jax.block_until_ready(y)

    assert y.shape == (2, INPUT_CHANNEL, H2, H2), y.shape
    assert bool(jnp.all(jnp.isfinite(y)))
    assert bool(jnp.all(jnp.abs(y) <= 1.0 + 1e-6))       # tanh output range

    # Correctness vs the pure-JAX f32 reference (kernel uses bf16 MXU inputs,
    # hence the loose tolerance).
    y_ref = decoder_reference(x, params)
    err = float(jnp.max(jnp.abs(y - y_ref)))
    assert err < 0.2, f"max abs diff vs reference: {err}"

    print("KERNEL_OK")
</pallas_src>

<mosaic_0001>
module attributes {stable_mosaic.version = 11 : i64} {
  func.func @_conv_in_relu_kernel(%arg0: i32, %arg1: memref<1x288x256xbf16, #tpu.memory_space<vmem>>, %arg2: memref<16x288xbf16, #tpu.memory_space<vmem>>, %arg3: memref<1x16x256xbf16, #tpu.memory_space<vmem>>) attributes {dimension_semantics = [#tpu.dimension_semantics<parallel>], iteration_bounds = array<i64: 2>, scalar_prefetch = 0 : i64, scratch_operands = 0 : i64, tpu.core_type = #tpu.core_type<tc>, window_params = [{transform_indices = @transform_0, window_bounds = array<i64: 1, 288, 256>}, {pipeline_mode = #tpu.pipeline_mode<synchronous>, transform_indices = @transform_1, window_bounds = array<i64: 16, 288>}, {transform_indices = @transform_2, window_bounds = array<i64: 1, 16, 256>}]} {
    %c0 = arith.constant 0 : index
    %c0_0 = arith.constant 0 : index
    %0 = vector.load %arg2[%c0, %c0_0] : memref<16x288xbf16, #tpu.memory_space<vmem>>, vector<16x288xbf16>
    %c0_1 = arith.constant 0 : index
    %c0_2 = arith.constant 0 : index
    %c0_3 = arith.constant 0 : index
    %1 = vector.load %arg1[%c0_1, %c0_2, %c0_3] : memref<1x288x256xbf16, #tpu.memory_space<vmem>>, vector<1x288x256xbf16>
    %2 = vector.shape_cast %1 : vector<1x288x256xbf16> to vector<288x256xbf16>
    %cst = arith.constant dense<0.000000e+00> : vector<16x256xf32>
    %3 = tpu.matmul %0, %2, %cst {dimension_numbers = #tpu.dot_dimension_numbers<[1], [0], [0], [1], [0, 0, 1, 1], [], []>} : vector<16x288xbf16>, vector<288x256xbf16>, vector<16x256xf32> -> vector<16x256xf32>
    %cst_4 = arith.constant dense<0.000000e+00> : vector<16xf32>
    %4 = vector.multi_reduction <add>, %3, %cst_4 [1] : vector<16x256xf32> to vector<16xf32>
    %5 = vector.shape_cast %4 : vector<16xf32> to vector<16x1xf32>
    %6 = arith.mulf %3, %3 : vector<16x256xf32>
    %cst_5 = arith.constant dense<0.000000e+00> : vector<16xf32>
    %7 = vector.multi_reduction <add>, %6, %cst_5 [1] : vector<16x256xf32> to vector<16xf32>
    %8 = vector.shape_cast %7 : vector<16xf32> to vector<16x1xf32>
    %cst_6 = arith.constant 3.906250e-03 : f32
    %9 = vector.broadcast %cst_6 : f32 to vector<16x1xf32>
    %10 = arith.mulf %5, %9 : vector<16x1xf32>
    %cst_7 = arith.constant 3.906250e-03 : f32
    %11 = vector.broadcast %cst_7 : f32 to vector<16x1xf32>
    %12 = arith.mulf %8, %11 : vector<16x1xf32>
    %13 = arith.mulf %10, %10 : vector<16x1xf32>
    %14 = arith.subf %12, %13 : vector<16x1xf32>
    %cst_8 = arith.constant 0.000000e+00 : f32
    %15 = vector.broadcast %cst_8 : f32 to vector<16x1xf32>
    %16 = arith.maximumf %14, %15 : vector<16x1xf32>
    %17 = vector.broadcast %10 : vector<16x1xf32> to vector<16x256xf32>
    %18 = arith.subf %3, %17 : vector<16x256xf32>
    %cst_9 = arith.constant 9.99999974E-6 : f32
    %19 = vector.broadcast %cst_9 : f32 to vector<16x1xf32>
    %20 = arith.addf %16, %19 : vector<16x1xf32>
    %21 = math.rsqrt %20 : vector<16x1xf32>
    %22 = vector.broadcast %21 : vector<16x1xf32> to vector<16x256xf32>
    %23 = arith.mulf %18, %22 : vector<16x256xf32>
    %cst_10 = arith.constant 0.000000e+00 : f32
    %24 = vector.broadcast %cst_10 : f32 to vector<16x256xf32>
    %25 = arith.maximumf %23, %24 : vector<16x256xf32>
    %26 = arith.truncf %25 : vector<16x256xf32> to vector<16x256xbf16>
    %c0_11 = arith.constant 0 : index
    %c0_12 = arith.constant 0 : index
    %c0_13 = arith.constant 0 : index
    %27 = vector.load %arg3[%c0_11, %c0_12, %c0_13] : memref<1x16x256xbf16, #tpu.memory_space<vmem>>, vector<1x16x256xbf16>
    %28 = vector.shape_cast %27 : vector<1x16x256xbf16> to vector<16x256xbf16>
    %29 = vector.shape_cast %26 : vector<16x256xbf16> to vector<1x16x256xbf16>
    tpu.vector_store %arg3[%c0_11, %c0_12, %c0_13], %29 {strides = array<i32>} : memref<1x16x256xbf16, #tpu.memory_space<vmem>>, vector<1x16x256xbf16>,
    return
  }
  func.func @transform_0(%arg0: i32) -> (i32, i32, i32) {
    %c0_i32 = arith.constant 0 : i32
    %c0_i32_0 = arith.constant 0 : i32
    %c0_i32_1 = arith.constant 0 : i32
    return %arg0, %c0_i32, %c0_i32_0 : i32, i32, i32
  }
  func.func @transform_1(%arg0: i32) -> (i32, i32) {
    %c0_i32 = arith.constant 0 : i32
    %c0_i32_0 = arith.constant 0 : i32
    %c0_i32_1 = arith.constant 0 : i32
    return %c0_i32, %c0_i32_0 : i32, i32
  }
  func.func @transform_2(%arg0: i32) -> (i32, i32, i32) {
    %c0_i32 = arith.constant 0 : i32
    %c0_i32_0 = arith.constant 0 : i32
    %c0_i32_1 = arith.constant 0 : i32
    return %arg0, %c0_i32, %c0_i32_0 : i32, i32, i32
  }
}

module attributes {stable_mosaic.version = 11 : i64} {
  func.func @_conv_in_relu_kernel(%arg0: i32, %arg1: memref<1x144x1024xbf16, #tpu.memory_space<vmem>>, %arg2: memref<8x144xbf16, #tpu.memory_space<vmem>>, %arg3: memref<1x8x1024xbf16, #tpu.memory_space<vmem>>) attributes {dimension_semantics = [#tpu.dimension_semantics<parallel>], iteration_bounds = array<i64: 2>, scalar_prefetch = 0 : i64, scratch_operands = 0 : i64, tpu.core_type = #tpu.core_type<tc>, window_params = [{transform_indices = @transform_0, window_bounds = array<i64: 1, 144, 1024>}, {pipeline_mode = #tpu.pipeline_mode<synchronous>, transform_indices = @transform_1, window_bounds = array<i64: 8, 144>}, {transform_indices = @transform_2, window_bounds = array<i64: 1, 8, 1024>}]} {
    %c0 = arith.constant 0 : index
    %c0_0 = arith.constant 0 : index
    %0 = vector.load %arg2[%c0, %c0_0] : memref<8x144xbf16, #tpu.memory_space<vmem>>, vector<8x144xbf16>
    %c0_1 = arith.constant 0 : index
    %c0_2 = arith.constant 0 : index
    %c0_3 = arith.constant 0 : index
    %1 = vector.load %arg1[%c0_1, %c0_2, %c0_3] : memref<1x144x1024xbf16, #tpu.memory_space<vmem>>, vector<1x144x1024xbf16>
    %2 = vector.shape_cast %1 : vector<1x144x1024xbf16> to vector<144x1024xbf16>
    %cst = arith.constant dense<0.000000e+00> : vector<8x1024xf32>
    %3 = tpu.matmul %0, %2, %cst {dimension_numbers = #tpu.dot_dimension_numbers<[1], [0], [0], [1], [0, 0, 1, 1], [], []>} : vector<8x144xbf16>, vector<144x1024xbf16>, vector<8x1024xf32> -> vector<8x1024xf32>
    %cst_4 = arith.constant dense<0.000000e+00> : vector<8xf32>
    %4 = vector.multi_reduction <add>, %3, %cst_4 [1] : vector<8x1024xf32> to vector<8xf32>
    %5 = vector.shape_cast %4 : vector<8xf32> to vector<8x1xf32>
    %6 = arith.mulf %3, %3 : vector<8x1024xf32>
    %cst_5 = arith.constant dense<0.000000e+00> : vector<8xf32>
    %7 = vector.multi_reduction <add>, %6, %cst_5 [1] : vector<8x1024xf32> to vector<8xf32>
    %8 = vector.shape_cast %7 : vector<8xf32> to vector<8x1xf32>
    %cst_6 = arith.constant 9.765625E-4 : f32
    %9 = vector.broadcast %cst_6 : f32 to vector<8x1xf32>
    %10 = arith.mulf %5, %9 : vector<8x1xf32>
    %cst_7 = arith.constant 9.765625E-4 : f32
    %11 = vector.broadcast %cst_7 : f32 to vector<8x1xf32>
    %12 = arith.mulf %8, %11 : vector<8x1xf32>
    %13 = arith.mulf %10, %10 : vector<8x1xf32>
    %14 = arith.subf %12, %13 : vector<8x1xf32>
    %cst_8 = arith.constant 0.000000e+00 : f32
    %15 = vector.broadcast %cst_8 : f32 to vector<8x1xf32>
    %16 = arith.maximumf %14, %15 : vector<8x1xf32>
    %17 = vector.broadcast %10 : vector<8x1xf32> to vector<8x1024xf32>
    %18 = arith.subf %3, %17 : vector<8x1024xf32>
    %cst_9 = arith.constant 9.99999974E-6 : f32
    %19 = vector.broadcast %cst_9 : f32 to vector<8x1xf32>
    %20 = arith.addf %16, %19 : vector<8x1xf32>
    %21 = math.rsqrt %20 : vector<8x1xf32>
    %22 = vector.broadcast %21 : vector<8x1xf32> to vector<8x1024xf32>
    %23 = arith.mulf %18, %22 : vector<8x1024xf32>
    %cst_10 = arith.constant 0.000000e+00 : f32
    %24 = vector.broadcast %cst_10 : f32 to vector<8x1024xf32>
    %25 = arith.maximumf %23, %24 : vector<8x1024xf32>
    %26 = arith.truncf %25 : vector<8x1024xf32> to vector<8x1024xbf16>
    %c0_11 = arith.constant 0 : index
    %c0_12 = arith.constant 0 : index
    %c0_13 = arith.constant 0 : index
    %27 = vector.load %arg3[%c0_11, %c0_12, %c0_13] : memref<1x8x1024xbf16, #tpu.memory_space<vmem>>, vector<1x8x1024xbf16>
    %28 = vector.shape_cast %27 : vector<1x8x1024xbf16> to vector<8x1024xbf16>
    %29 = vector.shape_cast %26 : vector<8x1024xbf16> to vector<1x8x1024xbf16>
    tpu.vector_store %arg3[%c0_11, %c0_12, %c0_13], %29 {strides = array<i32>} : memref<1x8x1024xbf16, #tpu.memory_space<vmem>>, vector<1x8x1024xbf16>,
    return
  }
  func.func @transform_0(%arg0: i32) -> (i32, i32, i32) {
    %c0_i32 = arith.constant 0 : i32
    %c0_i32_0 = arith.constant 0 : i32
    %c0_i32_1 = arith.constant 0 : i32
    return %arg0, %c0_i32, %c0_i32_0 : i32, i32, i32
  }
  func.func @transform_1(%arg0: i32) -> (i32, i32) {
    %c0_i32 = arith.constant 0 : i32
    %c0_i32_0 = arith.constant 0 : i32
    %c0_i32_1 = arith.constant 0 : i32
    return %c0_i32, %c0_i32_0 : i32, i32
  }
  func.func @transform_2(%arg0: i32) -> (i32, i32, i32) {
    %c0_i32 = arith.constant 0 : i32
    %c0_i32_0 = arith.constant 0 : i32
    %c0_i32_1 = arith.constant 0 : i32
    return %arg0, %c0_i32, %c0_i32_0 : i32, i32, i32
  }
}

module attributes {stable_mosaic.version = 11 : i64} {
  func.func @_conv34_kernel(%arg0: i32, %arg1: memref<1x72x1280xbf16, #tpu.memory_space<vmem>>, %arg2: memref<1x1280xf32, #tpu.memory_space<vmem>>, %arg3: memref<4x72xbf16, #tpu.memory_space<vmem>>, %arg4: memref<9x4x4xbf16, #tpu.memory_space<vmem>>, %arg5: memref<4x1xf32, #tpu.memory_space<vmem>>, %arg6: memref<1x4x1152xf32, #tpu.memory_space<vmem>>) attributes {dimension_semantics = [#tpu.dimension_semantics<parallel>], iteration_bounds = array<i64: 2>, scalar_prefetch = 0 : i64, scratch_operands = 0 : i64, tpu.core_type = #tpu.core_type<tc>, window_params = [{transform_indices = @transform_0, window_bounds = array<i64: 1, 72, 1280>}, {pipeline_mode = #tpu.pipeline_mode<synchronous>, transform_indices = @transform_1, window_bounds = array<i64: 1, 1280>}, {pipeline_mode = #tpu.pipeline_mode<synchronous>, transform_indices = @transform_2, window_bounds = array<i64: 4, 72>}, {pipeline_mode = #tpu.pipeline_mode<synchronous>, transform_indices = @transform_3, window_bounds = array<i64: 9, 4, 4>}, {pipeline_mode = #tpu.pipeline_mode<synchronous>, transform_indices = @transform_4, window_bounds = array<i64: 4, 1>}, {transform_indices = @transform_5, window_bounds = array<i64: 1, 4, 1152>}]} {
    %c0 = arith.constant 0 : index
    %c0_0 = arith.constant 0 : index
    %0 = vector.load %arg3[%c0, %c0_0] : memref<4x72xbf16, #tpu.memory_space<vmem>>, vector<4x72xbf16>
    %c0_1 = arith.constant 0 : index
    %c0_2 = arith.constant 0 : index
    %c0_3 = arith.constant 0 : index
    %1 = vector.load %arg1[%c0_1, %c0_2, %c0_3] : memref<1x72x1280xbf16, #tpu.memory_space<vmem>>, vector<1x72x1280xbf16>
    %2 = vector.shape_cast %1 : vector<1x72x1280xbf16> to vector<72x1280xbf16>
    %cst = arith.constant dense<0.000000e+00> : vector<4x1280xf32>
    %3 = tpu.matmul %0, %2, %cst {dimension_numbers = #tpu.dot_dimension_numbers<[1], [0], [0], [1], [0, 0, 1, 1], [], []>} : vector<4x72xbf16>, vector<72x1280xbf16>, vector<4x1280xf32> -> vector<4x1280xf32>
    %c0_4 = arith.constant 0 : index
    %c0_5 = arith.constant 0 : index
    %4 = vector.load %arg2[%c0_4, %c0_5] : memref<1x1280xf32, #tpu.memory_space<vmem>>, vector<1x1280xf32>
    %5 = vector.broadcast %4 : vector<1x1280xf32> to vector<4x1280xf32>
    %6 = arith.mulf %3, %5 : vector<4x1280xf32>
    %cst_6 = arith.constant dense<0.000000e+00> : vector<4xf32>
    %7 = vector.multi_reduction <add>, %6, %cst_6 [1] : vector<4x1280xf32> to vector<4xf32>
    %8 = vector.shape_cast %7 : vector<4xf32> to vector<4x1xf32>
    %9 = arith.mulf %3, %3 : vector<4x1280xf32>
    %10 = vector.broadcast %4 : vector<1x1280xf32> to vector<4x1280xf32>
    %11 = arith.mulf %9, %10 : vector<4x1280xf32>
    %cst_7 = arith.constant dense<0.000000e+00> : vector<4xf32>
    %12 = vector.multi_reduction <add>, %11, %cst_7 [1] : vector<4x1280xf32> to vector<4xf32>
    %13 = vector.shape_cast %12 : vector<4xf32> to vector<4x1xf32>
    %cst_8 = arith.constant 9.765625E-4 : f32
    %14 = vector.broadcast %cst_8 : f32 to vector<4x1xf32>
    %15 = arith.mulf %8, %14 : vector<4x1xf32>
    %cst_9 = arith.constant 9.765625E-4 : f32
    %16 = vector.broadcast %cst_9 : f32 to vector<4x1xf32>
    %17 = arith.mulf %13, %16 : vector<4x1xf32>
    %18 = arith.mulf %15, %15 : vector<4x1xf32>
    %19 = arith.subf %17, %18 : vector<4x1xf32>
    %cst_10 = arith.constant 0.000000e+00 : f32
    %20 = vector.broadcast %cst_10 : f32 to vector<4x1xf32>
    %21 = arith.maximumf %19, %20 : vector<4x1xf32>
    %22 = vector.broadcast %15 : vector<4x1xf32> to vector<4x1280xf32>
    %23 = arith.subf %3, %22 : vector<4x1280xf32>
    %cst_11 = arith.constant 9.99999974E-6 : f32
    %24 = vector.broadcast %cst_11 : f32 to vector<4x1xf32>
    %25 = arith.addf %21, %24 : vector<4x1xf32>
    %26 = math.rsqrt %25 : vector<4x1xf32>
    %27 = vector.broadcast %26 : vector<4x1xf32> to vector<4x1280xf32>
    %28 = arith.mulf %23, %27 : vector<4x1280xf32>
    %cst_12 = arith.constant 0.000000e+00 : f32
    %29 = vector.broadcast %cst_12 : f32 to vector<4x1280xf32>
    %30 = arith.maximumf %28, %29 : vector<4x1280xf32>
    %31 = arith.truncf %30 : vector<4x1280xf32> to vector<4x1280xbf16>
    %cst_13 = arith.constant 0.000000e+00 : f32
    %32 = vector.broadcast %cst_13 : f32 to vector<4x1152xf32>
    %c0_14 = arith.constant 0 : index
    %c0_15 = arith.constant 0 : index
    %c0_16 = arith.constant 0 : index
    %33 = vector.load %arg4[%c0_14, %c0_15, %c0_16] : memref<9x4x4xbf16, #tpu.memory_space<vmem>>, vector<1x4x4xbf16>
    %34 = vector.shape_cast %33 : vector<1x4x4xbf16> to vector<4x4xbf16>
    %35 = vector.extract_strided_slice %31 {offsets = [0, 0], sizes = [4, 1152], strides = [1, 1]} : vector<4x1280xbf16> to vector<4x1152xbf16>
    %cst_17 = arith.constant dense<0.000000e+00> : vector<4x1152xf32>
    %36 = tpu.matmul %34, %35, %cst_17 {dimension_numbers = #tpu.dot_dimension_numbers<[1], [0], [0], [1], [0, 0, 1, 1], [], []>} : vector<4x4xbf16>, vector<4x1152xbf16>, vector<4x1152xf32> -> vector<4x1152xf32>
    %37 = arith.addf %32, %36 : vector<4x1152xf32>
    %c1 = arith.constant 1 : index
    %c0_18 = arith.constant 0 : index
    %c0_19 = arith.constant 0 : index
    %38 = vector.load %arg4[%c1, %c0_18, %c0_19] : memref<9x4x4xbf16, #tpu.memory_space<vmem>>, vector<1x4x4xbf16>
    %39 = vector.shape_cast %38 : vector<1x4x4xbf16> to vector<4x4xbf16>
    %40 = vector.extract_strided_slice %31 {offsets = [0, 1], sizes = [4, 1152], strides = [1, 1]} : vector<4x1280xbf16> to vector<4x1152xbf16>
    %cst_20 = arith.constant dense<0.000000e+00> : vector<4x1152xf32>
    %41 = tpu.matmul %39, %40, %cst_20 {dimension_numbers = #tpu.dot_dimension_numbers<[1], [0], [0], [1], [0, 0, 1, 1], [], []>} : vector<4x4xbf16>, vector<4x1152xbf16>, vector<4x1152xf32> -> vector<4x1152xf32>
    %42 = arith.addf %37, %41 : vector<4x1152xf32>
    %c2 = arith.constant 2 : index
    %c0_21 = arith.constant 0 : index
    %c0_22 = arith.constant 0 : index
    %43 = vector.load %arg4[%c2, %c0_21, %c0_22] : memref<9x4x4xbf16, #tpu.memory_space<vmem>>, vector<1x4x4xbf16>
    %44 = vector.shape_cast %43 : vector<1x4x4xbf16> to vector<4x4xbf16>
    %45 = vector.extract_strided_slice %31 {offsets = [0, 2], sizes = [4, 1152], strides = [1, 1]} : vector<4x1280xbf16> to vector<4x1152xbf16>
    %cst_23 = arith.constant dense<0.000000e+00> : vector<4x1152xf32>
    %46 = tpu.matmul %44, %45, %cst_23 {dimension_numbers = #tpu.dot_dimension_numbers<[1], [0], [0], [1], [0, 0, 1, 1], [], []>} : vector<4x4xbf16>, vector<4x1152xbf16>, vector<4x1152xf32> -> vector<4x1152xf32>
    %47 = arith.addf %42, %46 : vector<4x1152xf32>
    %c3 = arith.constant 3 : index
    %c0_24 = arith.constant 0 : index
    %c0_25 = arith.constant 0 : index
    %48 = vector.load %arg4[%c3, %c0_24, %c0_25] : memref<9x4x4xbf16, #tpu.memory_space<vmem>>, vector<1x4x4xbf16>
    %49 = vector.shape_cast %48 : vector<1x4x4xbf16> to vector<4x4xbf16>
    %50 = vector.extract_strided_slice %31 {offsets = [0, 36], sizes = [4, 1152], strides = [1, 1]} : vector<4x1280xbf16> to vector<4x1152xbf16>
    %cst_26 = arith.constant dense<0.000000e+00> : vector<4x1152xf32>
    %51 = tpu.matmul %49, %50, %cst_26 {dimension_numbers = #tpu.dot_dimension_numbers<[1], [0], [0], [1], [0, 0, 1, 1], [], []>} : vector<4x4xbf16>, vector<4x1152xbf16>, vector<4x1152xf32> -> vector<4x1152xf32>
    %52 = arith.addf %47, %51 : vector<4x1152xf32>
    %c4 = arith.constant 4 : index
    %c0_27 = arith.constant 0 : index
    %c0_28 = arith.constant 0 : index
    %53 = vector.load %arg4[%c4, %c0_27, %c0_28] : memref<9x4x4xbf16, #tpu.memory_space<vmem>>, vector<1x4x4xbf16>
    %54 = vector.shape_cast %53 : vector<1x4x4xbf16> to vector<4x4xbf16>
    %55 = vector.extract_strided_slice %31 {offsets = [0, 37], sizes = [4, 1152], strides = [1, 1]} : vector<4x1280xbf16> to vector<4x1152xbf16>
    %cst_29 = arith.constant dense<0.000000e+00> : vector<4x1152xf32>
    %56 = tpu.matmul %54, %55, %cst_29 {dimension_numbers = #tpu.dot_dimension_numbers<[1], [0], [0], [1], [0, 0, 1, 1], [], []>} : vector<4x4xbf16>, vector<4x1152xbf16>, vector<4x1152xf32> -> vector<4x1152xf32>
    %57 = arith.addf %52, %56 : vector<4x1152xf32>
    %c5 = arith.constant 5 : index
    %c0_30 = arith.constant 0 : index
    %c0_31 = arith.constant 0 : index
    %58 = vector.load %arg4[%c5, %c0_30, %c0_31] : memref<9x4x4xbf16, #tpu.memory_space<vmem>>, vector<1x4x4xbf16>
    %59 = vector.shape_cast %58 : vector<1x4x4xbf16> to vector<4x4xbf16>
    %60 = vector.extract_strided_slice %31 {offsets = [0, 38], sizes = [4, 1152], strides = [1, 1]} : vector<4x1280xbf16> to vector<4x1152xbf16>
    %cst_32 = arith.constant dense<0.000000e+00> : vector<4x1152xf32>
    %61 = tpu.matmul %59, %60, %cst_32 {dimension_numbers = #tpu.dot_dimension_numbers<[1], [0], [0], [1], [0, 0, 1, 1], [], []>} : vector<4x4xbf16>, vector<4x1152xbf16>, vector<4x1152xf32> -> vector<4x1152xf32>
    %62 = arith.addf %57, %61 : vector<4x1152xf32>
    %c6 = arith.constant 6 : index
    %c0_33 = arith.constant 0 : index
    %c0_34 = arith.constant 0 : index
    %63 = vector.load %arg4[%c6, %c0_33, %c0_34] : memref<9x4x4xbf16, #tpu.memory_space<vmem>>, vector<1x4x4xbf16>
    %64 = vector.shape_cast %63 : vector<1x4x4xbf16> to vector<4x4xbf16>
    %65 = vector.extract_strided_slice %31 {offsets = [0, 72], sizes = [4, 1152], strides = [1, 1]} : vector<4x1280xbf16> to vector<4x1152xbf16>
    %cst_35 = arith.constant dense<0.000000e+00> : vector<4x1152xf32>
    %66 = tpu.matmul %64, %65, %cst_35 {dimension_numbers = #tpu.dot_dimension_numbers<[1], [0], [0], [1], [0, 0, 1, 1], [], []>} : vector<4x4xbf16>, vector<4x1152xbf16>, vector<4x1152xf32> -> vector<4x1152xf32>
    %67 = arith.addf %62, %66 : vector<4x1152xf32>
    %c7 = arith.constant 7 : index
    %c0_36 = arith.constant 0 : index
    %c0_37 = arith.constant 0 : index
    %68 = vector.load %arg4[%c7, %c0_36, %c0_37] : memref<9x4x4xbf16, #tpu.memory_space<vmem>>, vector<1x4x4xbf16>
    %69 = vector.shape_cast %68 : vector<1x4x4xbf16> to vector<4x4xbf16>
    %70 = vector.extract_strided_slice %31 {offsets = [0, 73], sizes = [4, 1152], strides = [1, 1]} : vector<4x1280xbf16> to vector<4x1152xbf16>
    %cst_38 = arith.constant dense<0.000000e+00> : vector<4x1152xf32>
    %71 = tpu.matmul %69, %70, %cst_38 {dimension_numbers = #tpu.dot_dimension_numbers<[1], [0], [0], [1], [0, 0, 1, 1], [], []>} : vector<4x4xbf16>, vector<4x1152xbf16>, vector<4x1152xf32> -> vector<4x1152xf32>
    %72 = arith.addf %67, %71 : vector<4x1152xf32>
    %c8 = arith.constant 8 : index
    %c0_39 = arith.constant 0 : index
    %c0_40 = arith.constant 0 : index
    %73 = vector.load %arg4[%c8, %c0_39, %c0_40] : memref<9x4x4xbf16, #tpu.memory_space<vmem>>, vector<1x4x4xbf16>
    %74 = vector.shape_cast %73 : vector<1x4x4xbf16> to vector<4x4xbf16>
    %75 = vector.extract_strided_slice %31 {offsets = [0, 74], sizes = [4, 1152], strides = [1, 1]} : vector<4x1280xbf16> to vector<4x1152xbf16>
    %cst_41 = arith.constant dense<0.000000e+00> : vector<4x1152xf32>
    %76 = tpu.matmul %74, %75, %cst_41 {dimension_numbers = #tpu.dot_dimension_numbers<[1], [0], [0], [1], [0, 0, 1, 1], [], []>} : vector<4x4xbf16>, vector<4x1152xbf16>, vector<4x1152xf32> -> vector<4x1152xf32>
    %77 = arith.addf %72, %76 : vector<4x1152xf32>
    %c0_42 = arith.constant 0 : index
    %c0_43 = arith.constant 0 : index
    %78 = vector.load %arg5[%c0_42, %c0_43] : memref<4x1xf32, #tpu.memory_space<vmem>>, vector<4x1xf32>
    %79 = vector.broadcast %78 : vector<4x1xf32> to vector<4x1152xf32>
    %80 = arith.addf %77, %79 : vector<4x1152xf32>
    %81 = math.tanh %80 : vector<4x1152xf32>
    %c0_44 = arith.constant 0 : index
    %c0_45 = arith.constant 0 : index
    %c0_46 = arith.constant 0 : index
    %82 = vector.load %arg6[%c0_44, %c0_45, %c0_46] : memref<1x4x1152xf32, #tpu.memory_space<vmem>>, vector<1x4x1152xf32>
    %83 = vector.shape_cast %82 : vector<1x4x1152xf32> to vector<4x1152xf32>
    %84 = vector.shape_cast %81 : vector<4x1152xf32> to vector<1x4x1152xf32>
    tpu.vector_store %arg6[%c0_44, %c0_45, %c0_46], %84 {strides = array<i32>} : memref<1x4x1152xf32, #tpu.memory_space<vmem>>, vector<1x4x1152xf32>,
    return
  }
  func.func @transform_0(%arg0: i32) -> (i32, i32, i32) {
    %c0_i32 = arith.constant 0 : i32
    %c0_i32_0 = arith.constant 0 : i32
    %c0_i32_1 = arith.constant 0 : i32
    return %arg0, %c0_i32, %c0_i32_0 : i32, i32, i32
  }
  func.func @transform_1(%arg0: i32) -> (i32, i32) {
    %c0_i32 = arith.constant 0 : i32
    %c0_i32_0 = arith.constant 0 : i32
    %c0_i32_1 = arith.constant 0 : i32
    return %c0_i32, %c0_i32_0 : i32, i32
  }
  func.func @transform_2(%arg0: i32) -> (i32, i32) {
    %c0_i32 = arith.constant 0 : i32
    %c0_i32_0 = arith.constant 0 : i32
    %c0_i32_1 = arith.constant 0 : i32
    return %c0_i32, %c0_i32_0 : i32, i32
  }
  func.func @transform_3(%arg0: i32) -> (i32, i32, i32) {
    %c0_i32 = arith.constant 0 : i32
    %c0_i32_0 = arith.constant 0 : i32
    %c0_i32_1 = arith.constant 0 : i32
    %c0_i32_2 = arith.constant 0 : i32
    return %c0_i32, %c0_i32_0, %c0_i32_1 : i32, i32, i32
  }
  func.func @transform_4(%arg0: i32) -> (i32, i32) {
    %c0_i32 = arith.constant 0 : i32
    %c0_i32_0 = arith.constant 0 : i32
    %c0_i32_1 = arith.constant 0 : i32
    return %c0_i32, %c0_i32_0 : i32, i32
  }
  func.func @transform_5(%arg0: i32) -> (i32, i32, i32) {
    %c0_i32 = arith.constant 0 : i32
    %c0_i32_0 = arith.constant 0 : i32
    %c0_i32_1 = arith.constant 0 : i32
    return %arg0, %c0_i32, %c0_i32_0 : i32, i32, i32
  }
}

</mosaic_0001>

<llo_original>
// kernel: decoder_forward.3
$region0: #{decoder_forward.3}
  #allocation0 [shape = 'u32[]', space=smem, size = 0x4, offset = 0x4, fixed_abs, tag = 'smem constant byte address 0x4 - core index']
  #allocation1 [shape = 'u32[144,128]{1,0:T(1,128)}', space=vmem, size = 0x12000, scoped, tag = 'internal scratch']
  %s0 = inlined_call_operand.vmem [shape: bf16[2,288,256], index: 0, kind: input, shape index: {}]
  %s1 = inlined_call_operand.vmem [shape: bf16[16,288], index: 1, kind: input, shape index: {}]
  %s2 = inlined_call_operand.vmem [shape: bf16[2,16,256], index: 2, kind: output, shape index: {}]
  %s3 = sld [smem:[#allocation0]]
  $region41: #{decoder_forward.3} parent=0
    _
  %s5 = ssub.s32 1, %s3
  %s6 = scalar_select 0, %s5, %s3
  loop: start=0, step=1, limit=4
  $region2: #{decoder_forward.3} parent=0 // loop_pre_header
    _
  $region3: #{decoder_forward.3} parent=0 // loop_header
    %s8 = sphi 0, %s12
    %p9 = scmp.ge.s32.totalorder %s8, 4
    %s18 = sphi 0, %s20
    %s21 = sphi 0, %s18
    %s22 = sphi 0, %s21
    %s38 = sphi 0, %s22
    %s42 = sphi 0, %s42
    %s44 = sphi 0, %s42
    %s45 = sphi 0, %s44
    %s59 = sphi 0, %s45
    %s65 = sphi 0, %s67
    %s68 = sphi 0, %s65
    %s69 = sphi 0, %s68
    %s85 = sphi 0, %s69
  $region4: #{decoder_forward.3} parent=0 // loop_header_branch
    %11 = sbr.rel (%p9) target = $region8
  $region5: #{decoder_forward.3} parent=0 // loop_body
    %s13 = ssub.s32 %s8, 1
    %s14 = ssub.s32 %s8, 2
    %s15 = sadd.s32 %s8, 1
    %s16 = ssub.s32 %s8, %s15
    %p17 = scmp.eq.s32.totalorder %s16, 0
    %s19 = sadd.s32 %s18, 1
    %s20 = scalar_select %p17, %s18, %s19
    %p23 = pneg %p17
    %p24 = scmp.eq.s32.totalorder %s8, 1
    %p25 = por %p23, %p24
    %p26 = scmp.ne.s32.totalorder %s18, %s21
    %p27 = scmp.eq.s32.totalorder %s8, 0
    %p28 = por %p26, %p27
    %p29 = scmp.ne.s32.totalorder %s18, %s21
    %p30 = scmp.eq.s32.totalorder %s13, 1
    %p31 = por %p29, %p30
    %p32 = scmp.ne.s32.totalorder %s21, %s22
    %p33 = scmp.eq.s32.totalorder %s13, 0
    %p34 = por %p32, %p33
    %p35 = scmp.ne.s32.totalorder %s21, %s22
    %p36 = scmp.eq.s32.totalorder %s14, 1
    %p37 = por %p35, %p36
    %p39 = scmp.ne.s32.totalorder %s22, %s38
    %p40 = scmp.eq.s32.totalorder %s14, 0
    %p41 = por %p39, %p40
    %s43 = sadd.s32 %s42, 1
    %p46 = scmp.eq.s32.totalorder %s8, 1
    %p47 = scmp.ne.s32.totalorder %s42, %s44
    %p48 = scmp.eq.s32.totalorder %s8, 0
    %p49 = por %p47, %p48
    %p50 = scmp.ne.s32.totalorder %s42, %s44
    %p51 = scmp.eq.s32.totalorder %s13, 1
    %p52 = por %p50, %p51
    %p53 = scmp.ne.s32.totalorder %s44, %s45
    %p54 = scmp.eq.s32.totalorder %s13, 0
    %p55 = por %p53, %p54
    %p56 = scmp.ne.s32.totalorder %s44, %s45
    %p57 = scmp.eq.s32.totalorder %s14, 1
    %p58 = por %p56, %p57
    %p60 = scmp.ne.s32.totalorder %s45, %s59
    %p61 = scmp.eq.s32.totalorder %s14, 0
    %p62 = por %p60, %p61
    %s63 = ssub.s32 %s8, %s15
    %p64 = scmp.eq.s32.totalorder %s63, 0
    %s66 = sadd.s32 %s65, 1
    %s67 = scalar_select %p64, %s65, %s66
    %p70 = pneg %p64
    %p71 = scmp.eq.s32.totalorder %s8, 1
    %p72 = por %p70, %p71
    %p73 = scmp.ne.s32.totalorder %s65, %s68
    %p74 = scmp.eq.s32.totalorder %s8, 0
    %p75 = por %p73, %p74
    %p76 = scmp.ne.s32.totalorder %s65, %s68
    %p77 = scmp.eq.s32.totalorder %s13, 1
    %p78 = por %p76, %p77
    %p79 = scmp.ne.s32.totalorder %s68, %s69
    %p80 = scmp.eq.s32.totalorder %s13, 0
    %p81 = por %p79, %p80
    %p82 = scmp.ne.s32.totalorder %s68, %s69
    %p83 = scmp.eq.s32.totalorder %s14, 1
    %p84 = por %p82, %p83
    %p86 = scmp.ne.s32.totalorder %s69, %s85
    %p87 = scmp.eq.s32.totalorder %s14, 0
    %p88 = por %p86, %p87
    %p89 = scmp.le.s32.totalorder 1, %s8
    %p90 = scmp.lt.s32.totalorder %s8, 3
    %p91 = pnand %p89, %p90
    %p92 = pneg %p91
    // Predicated region
    $region9: #{decoder_forward.3} parent=5 // pred_check
      _
    $region10: #{decoder_forward.3} parent=5 // pred_check_branch
      %94 = sbr.rel (%p91) target = $region12
    $region11: #{decoder_forward.3} parent=5 // pred_region
      %s95 = ssub.s32 %s8, 1
      // Predicated region
      $region13: #{decoder_forward.3} parent=11 // pred_check
        %p96 = pneg %p55
      $region14: #{decoder_forward.3} parent=11 // pred_check_branch
        %98 = sbr.rel (%p96) target = $region16
      $region15: #{decoder_forward.3} parent=11 // pred_region
        _
      $region16: #{decoder_forward.3} parent=11 // pred_fallthru
        _
    $region12: #{decoder_forward.3} parent=5 // pred_fallthru
      _
    %p99 = scmp.lt.s32.totalorder %s8, 2
    // Predicated region
    $region17: #{decoder_forward.3} parent=5 // pred_check
      %p100 = pneg %p99
    $region18: #{decoder_forward.3} parent=5 // pred_check_branch
      %102 = sbr.rel (%p100) target = $region20
    $region19: #{decoder_forward.3} parent=5 // pred_region
      // Predicated region
      $region21: #{decoder_forward.3} parent=19 // pred_check
        %p103 = pneg %p28
      $region22: #{decoder_forward.3} parent=19 // pred_check_branch
        %105 = sbr.rel (%p103) target = $region24
      $region23: #{decoder_forward.3} parent=19 // pred_region
        %p106 = scmp.lt.s32.totalorder %s8, 1
        %s107 = scalar_select %p106, %s8, 1
        %s108 = smul.addr %s107, 72
        %s109 = smul.addr %s108, 4
        %s110 = scalar_lea.vmem %s0, %s109
      $region24: #{decoder_forward.3} parent=19 // pred_fallthru
        _
    $region20: #{decoder_forward.3} parent=5 // pred_fallthru
      _
    %p111 = scmp.le.s32.totalorder 1, %s8
    %p112 = scmp.lt.s32.totalorder %s8, 3
    %p113 = pnand %p111, %p112
    %p114 = pneg %p113
    // Predicated region
    $region25: #{decoder_forward.3} parent=5 // pred_check
      _
    $region26: #{decoder_forward.3} parent=5 // pred_check_branch
      %116 = sbr.rel (%p113) target = $region28
    $region27: #{decoder_forward.3} parent=5 // pred_region
      %s117 = ssub.s32 %s8, 1
      %p118 = scmp.lt.s32.totalorder %s13, 1
      %s119 = scalar_select %p118, %s13, 1
      %s120 = smul.addr %s119, 72
      %s121 = smul.addr %s120, 4
      %s122 = scalar_lea.vmem %s0, %s121
      %p123 = pneg %p34
      %p124 = pneg %p31
      %p125 = pneg %p55
      %p126 = pneg %p52
      %p127 = pneg %p81
      %p128 = pneg %p78
      %p129 = scmp.lt.s32.totalorder %s13, 1
      %s130 = scalar_select %p129, %s13, 1
      %s131 = smul.addr %s130, 4
      %s132 = smul.addr %s131, 4
      %s133 = scalar_lea.vmem %s2, %s132
      %p134 = scmp.lt.s32.totalorder %s13, 1
      %s135 = scalar_select %p134, %s13, 1
      %s136 = smul.addr %s135, 72
      %s137 = smul.addr %s136, 4
      %s138 = scalar_lea.vmem %s0, %s137
      %p139 = scmp.lt.s32.totalorder %s13, 1
      %s140 = scalar_select %p139, %s13, 1
      %s141 = smul.addr %s140, 4
      %s142 = smul.addr %s141, 4
      %s143 = scalar_lea.vmem %s2, %s142
      %v145 = vld [vmem:[%s1] sm:$0xff]
      %v146 = vld [vmem:[%s1 + $0x8] sm:$0xf]
      %v147 = vld [vmem:[%s1 + $0xc] sm:$0xff]
      %v148 = vld [vmem:[%s1 + $0x14] sm:$0xf]
      %v149 = vld [vmem:[%s138] sm:$0xff]
      %v150 = vld [vmem:[%s138 + $0x8] sm:$0xff]
      %v151 = vld [vmem:[%s138 + $0x10] sm:$0xff]
      %v152 = vld [vmem:[%s138 + $0x18] sm:$0xff]
      %v153 = vld [vmem:[%s138 + $0x20] sm:$0xff]
      %v154 = vld [vmem:[%s138 + $0x28] sm:$0xff]
      %v155 = vld [vmem:[%s138 + $0x30] sm:$0xff]
      %v156 = vld [vmem:[%s138 + $0x38] sm:$0xff]
      %v157 = vld [vmem:[%s138 + $0x40] sm:$0xff]
      %v158 = vld [vmem:[%s138 + $0x48] sm:$0xff]
      %v159 = vld [vmem:[%s138 + $0x50] sm:$0xff]
      %v160 = vld [vmem:[%s138 + $0x58] sm:$0xff]
      %v161 = vld [vmem:[%s138 + $0x60] sm:$0xff]
      %v162 = vld [vmem:[%s138 + $0x68] sm:$0xff]
      %v163 = vld [vmem:[%s138 + $0x70] sm:$0xff]
      %v164 = vld [vmem:[%s138 + $0x78] sm:$0xff]
      %v165 = vld [vmem:[%s138 + $0x80] sm:$0xff]
      %v166 = vld [vmem:[%s138 + $0x88] sm:$0xff]
      %v167 = vld [vmem:[%s138 + $0x90] sm:$0xff]
      %v168 = vld [vmem:[%s138 + $0x98] sm:$0xff]
      %v169 = vld [vmem:[%s138 + $0xa0] sm:$0xff]
      %v170 = vld [vmem:[%s138 + $0xa8] sm:$0xff]
      %v171 = vld [vmem:[%s138 + $0xb0] sm:$0xff]
      %v172 = vld [vmem:[%s138 + $0xb8] sm:$0xff]
      %v173 = vld [vmem:[%s138 + $0xc0] sm:$0xff]
      %v174 = vld [vmem:[%s138 + $0xc8] sm:$0xff]
      %v175 = vld [vmem:[%s138 + $0xd0] sm:$0xff]
      %v176 = vld [vmem:[%s138 + $0xd8] sm:$0xff]
      %v177 = vld [vmem:[%s138 + $0xe0] sm:$0xff]
      %v178 = vld [vmem:[%s138 + $0xe8] sm:$0xff]
      %v179 = vld [vmem:[%s138 + $0xf0] sm:$0xff]
      %v180 = vld [vmem:[%s138 + $0xf8] sm:$0xff]
      %v181 = vld [vmem:[%s138 + $0x100] sm:$0xff]
      %v182 = vld [vmem:[%s138 + $0x108] sm:$0xff]
      %v183 = vld [vmem:[%s138 + $0x110] sm:$0xff]
      %v184 = vld [vmem:[%s138 + $0x118] sm:$0xff]
      %v189 = vunpack.c.l.b16 %v145
      %v190 = vunpack.c.h.b16 %v145
      %v191 = vunpack.c.l.b16 %v146
      %v192 = vunpack.c.l.b16 %v147
      %v193 = vunpack.c.h.b16 %v147
      %v194 = vunpack.c.l.b16 %v148
      %v195 = vpack.c.b16 %v192, %v189
      %v196 = vpack.c.b16 %v193, %v190
      %v197 = vpack.c.b16 %v194, %v191
      %v236 = vunpack.c.l.b16 %v149
      %v237 = vunpack.c.h.b16 %v149
      %v238 = vunpack.c.l.b16 %v150
      %v239 = vunpack.c.h.b16 %v150
      %v240 = vunpack.c.l.b16 %v151
      %v241 = vunpack.c.h.b16 %v151
      %v242 = vunpack.c.l.b16 %v152
      %v243 = vunpack.c.h.b16 %v152
      %v244 = vunpack.c.l.b16 %v153
      %v245 = vunpack.c.h.b16 %v153
      %v246 = vunpack.c.l.b16 %v154
      %v247 = vunpack.c.h.b16 %v154
      %v248 = vunpack.c.l.b16 %v155
      %v249 = vunpack.c.h.b16 %v155
      %v250 = vunpack.c.l.b16 %v156
      %v251 = vunpack.c.h.b16 %v156
      %v252 = vunpack.c.l.b16 %v157
      %v253 = vunpack.c.h.b16 %v157
      %v254 = vunpack.c.l.b16 %v158
      %v255 = vunpack.c.h.b16 %v158
      %v256 = vunpack.c.l.b16 %v159
      %v257 = vunpack.c.h.b16 %v159
      %v258 = vunpack.c.l.b16 %v160
      %v259 = vunpack.c.h.b16 %v160
      %v260 = vunpack.c.l.b16 %v161
      %v261 = vunpack.c.h.b16 %v161
      %v262 = vunpack.c.l.b16 %v162
      %v263 = vunpack.c.h.b16 %v162
      %v264 = vunpack.c.l.b16 %v163
      %v265 = vunpack.c.h.b16 %v163
      %v266 = vunpack.c.l.b16 %v164
      %v267 = vunpack.c.h.b16 %v164
      %v268 = vunpack.c.l.b16 %v165
      %v269 = vunpack.c.h.b16 %v165
      %v270 = vunpack.c.l.b16 %v166
      %v271 = vunpack.c.h.b16 %v166
      %v272 = vunpack.c.l.b16 %v167
      %v273 = vunpack.c.h.b16 %v167
      %v274 = vunpack.c.l.b16 %v168
      %v275 = vunpack.c.h.b16 %v168
      %v276 = vunpack.c.l.b16 %v169
      %v277 = vunpack.c.h.b16 %v169
      %v278 = vunpack.c.l.b16 %v170
      %v279 = vunpack.c.h.b16 %v170
      %v280 = vunpack.c.l.b16 %v171
      %v281 = vunpack.c.h.b16 %v171
      %v282 = vunpack.c.l.b16 %v172
      %v283 = vunpack.c.h.b16 %v172
      %v284 = vunpack.c.l.b16 %v173
      %v285 = vunpack.c.h.b16 %v173
      %v286 = vunpack.c.l.b16 %v174
      %v287 = vunpack.c.h.b16 %v174
      %v288 = vunpack.c.l.b16 %v175
      %v289 = vunpack.c.h.b16 %v175
      %v290 = vunpack.c.l.b16 %v176
      %v291 = vunpack.c.h.b16 %v176
      %v292 = vunpack.c.l.b16 %v177
      %v293 = vunpack.c.h.b16 %v177
      %v294 = vunpack.c.l.b16 %v178
      %v295 = vunpack.c.h.b16 %v178
      %v296 = vunpack.c.l.b16 %v179
      %v297 = vunpack.c.h.b16 %v179
      %v298 = vunpack.c.l.b16 %v180
      %v299 = vunpack.c.h.b16 %v180
      %v300 = vunpack.c.l.b16 %v181
      %v301 = vunpack.c.h.b16 %v181
      %v302 = vunpack.c.l.b16 %v182
      %v303 = vunpack.c.h.b16 %v182
      %v304 = vunpack.c.l.b16 %v183
      %v305 = vunpack.c.h.b16 %v183
      %v306 = vunpack.c.l.b16 %v184
      %v307 = vunpack.c.h.b16 %v184
      %v308 = vpack.c.b16 %v238, %v236
      %v309 = vpack.c.b16 %v239, %v237
      %v310 = vpack.c.b16 %v242, %v240
      %v311 = vpack.c.b16 %v243, %v241
      %v312 = vpack.c.b16 %v246, %v244
      %v313 = vpack.c.b16 %v247, %v245
      %v314 = vpack.c.b16 %v250, %v248
      %v315 = vpack.c.b16 %v251, %v249
      %v316 = vpack.c.b16 %v254, %v252
      %v317 = vpack.c.b16 %v255, %v253
      %v318 = vpack.c.b16 %v258, %v256
      %v319 = vpack.c.b16 %v259, %v257
      %v320 = vpack.c.b16 %v262, %v260
      %v321 = vpack.c.b16 %v263, %v261
      %v322 = vpack.c.b16 %v266, %v264
      %v323 = vpack.c.b16 %v267, %v265
      %v324 = vpack.c.b16 %v270, %v268
      %v325 = vpack.c.b16 %v271, %v269
      %v326 = vpack.c.b16 %v274, %v272
      %v327 = vpack.c.b16 %v275, %v273
      %v328 = vpack.c.b16 %v278, %v276
      %v329 = vpack.c.b16 %v279, %v277
      %v330 = vpack.c.b16 %v282, %v280
      %v331 = vpack.c.b16 %v283, %v281
      %v332 = vpack.c.b16 %v286, %v284
      %v333 = vpack.c.b16 %v287, %v285
      %v334 = vpack.c.b16 %v290, %v288
      %v335 = vpack.c.b16 %v291, %v289
      %v336 = vpack.c.b16 %v294, %v292
      %v337 = vpack.c.b16 %v295, %v293
      %v338 = vpack.c.b16 %v298, %v296
      %v339 = vpack.c.b16 %v299, %v297
      %v340 = vpack.c.b16 %v302, %v300
      %v341 = vpack.c.b16 %v303, %v301
      %v342 = vpack.c.b16 %v306, %v304
      %v343 = vpack.c.b16 %v307, %v305
      %vm380 = vcmask 261120
      %v382 = vsel %vm380, %v197, 0
      %384 = vmatprep.subr.bf16.mxu0 %v323
      %385 = vmatpush1.bf16.msra.mxu0 %v322
      %386 = vmatprep.subr.bf16.mxu0 %v321
      %387 = vmatpush1.bf16.msra.mxu0 %v320
      %388 = vmatprep.subr.bf16.mxu0 %v319
      %389 = vmatpush1.bf16.msra.mxu0 %v318
      %390 = vmatprep.subr.bf16.mxu0 %v317
      %391 = vmatpush1.bf16.msra.mxu0 %v316
      %392 = vmatprep.subr.bf16.mxu0 %v315
      %393 = vmatpush1.bf16.msra.mxu0 %v314
      %394 = vmatprep.subr.bf16.mxu0 %v313
      %395 = vmatpush1.bf16.msra.mxu0 %v312
      %396 = vmatprep.subr.bf16.mxu0 %v311
      %397 = vmatpush1.bf16.msra.mxu0 %v310
      %398 = vmatprep.subr.bf16.mxu0 %v309
      %399 = vmatpush1.bf16.msra.mxu0 %v308
      %400 = vmatprep.subr.bf16.mxu0 %v339
      %401 = vmatpush2.bf16.msra.mxu0 %v338
      %402 = vmatprep.subr.bf16.mxu0 %v337
      %403 = vmatpush2.bf16.msra.mxu0 %v336
      %404 = vmatprep.subr.bf16.mxu0 %v335
      %405 = vmatpush2.bf16.msra.mxu0 %v334
      %406 = vmatprep.subr.bf16.mxu0 %v333
      %407 = vmatpush2.bf16.msra.mxu0 %v332
      %408 = vmatprep.subr.bf16.mxu0 %v331
      %409 = vmatpush2.bf16.msra.mxu0 %v330
      %410 = vmatprep.subr.bf16.mxu0 %v329
      %411 = vmatpush2.bf16.msra.mxu0 %v328
      %412 = vmatprep.subr.bf16.mxu0 %v327
      %413 = vmatpush2.bf16.msra.mxu0 %v326
      %414 = vmatprep.subr.bf16.mxu0 %v325
      %415 = vmatpush2.bf16.msra.mxu0 %v324
      %416 = vmatprep.mubr.bf16.mxu0 %v196
      %417 = vmatmul.mubr.bf16.gmra.mxu0 %v195
      %v418 = vpop.f32.mrf.mxu0
      %v419 = vadd.f32 0.0, %v418
      %v420 = vpop.f32.mrf.mxu0
      %v421 = vadd.f32 0.0, %v420
      %v422 = vpop.f32.mrf.mxu0
      %v423 = vadd.f32 0.0, %v422
      %v424 = vpop.f32.mrf.mxu0
      %v425 = vadd.f32 0.0, %v424
      %426 = vdwg.mxu0
      %427 = vmatprep.subr.bf16.mxu0 0
      %428 = vmatpush1.bf16.msra.mxu0 0
      %429 = vmatprep.subr.bf16.mxu0 0
      %430 = vmatpush1.bf16.msra.mxu0 0
      %431 = vmatprep.subr.bf16.mxu0 0
      %432 = vmatpush1.bf16.msra.mxu0 0
      %433 = vmatprep.subr.bf16.mxu0 0
      %434 = vmatpush1.bf16.msra.mxu0 0
      %435 = vmatprep.subr.bf16.mxu0 0
      %436 = vmatpush1.bf16.msra.mxu0 0
      %437 = vmatprep.subr.bf16.mxu0 0
      %438 = vmatpush1.bf16.msra.mxu0 0
      %439 = vmatprep.subr.bf16.mxu0 %v343
      %440 = vmatpush1.bf16.msra.mxu0 %v342
      %441 = vmatprep.subr.bf16.mxu0 %v341
      %442 = vmatpush1.bf16.msra.mxu0 %v340
      %443 = vmatprep.subr.bf16.mxu0 0
      %444 = vmatpush2.bf16.msra.mxu0 0
      %445 = vmatprep.subr.bf16.mxu0 0
      %446 = vmatpush2.bf16.msra.mxu0 0
      %447 = vmatprep.subr.bf16.mxu0 0
      %448 = vmatpush2.bf16.msra.mxu0 0
      %449 = vmatprep.subr.bf16.mxu0 0
      %450 = vmatpush2.bf16.msra.mxu0 0
      %451 = vmatprep.subr.bf16.mxu0 0
      %452 = vmatpush2.bf16.msra.mxu0 0
      %453 = vmatprep.subr.bf16.mxu0 0
      %454 = vmatpush2.bf16.msra.mxu0 0
      %455 = vmatprep.subr.bf16.mxu0 0
      %456 = vmatpush2.bf16.msra.mxu0 0
      %457 = vmatprep.subr.bf16.mxu0 0
      %458 = vmatpush2.bf16.msra.mxu0 0
      %459 = vmatprep.mubr.bf16.mxu0 0
      %460 = vmatmul.mubr.bf16.gmra.mxu0 %v382
      %v461 = vpop.f32.mrf.mxu0
      %v462 = vadd.f32 %v419, %v461
      %v463 = vpop.f32.mrf.mxu0
      %v464 = vadd.f32 %v421, %v463
      %v465 = vpop.f32.mrf.mxu0
      %v466 = vadd.f32 %v423, %v465
      %v467 = vpop.f32.mrf.mxu0
      %v468 = vadd.f32 %v425, %v467
      %469 = vdwg.mxu0
      %v470 = vadd.f32 %v462, %v464
      %471 = vadd.xlane.f32.xlu0 %v470
      %v472 = vpop.xlane.xlu0 %471
      %v473 = vadd.f32 %v466, %v468
      %474 = vadd.xlane.f32.xlu0 %v473
      %v475 = vpop.xlane.xlu0 %474
      %v476 = vmul.f32 %v462, %v462
      %v477 = vmul.f32 %v464, %v464
      %v478 = vmul.f32 %v466, %v466
      %v479 = vmul.f32 %v468, %v468
      %v480 = vadd.f32 %v476, %v477
      %481 = vadd.xlane.f32.xlu0 %v480
      %v482 = vpop.xlane.xlu0 %481
      %v483 = vadd.f32 %v478, %v479
      %484 = vadd.xlane.f32.xlu0 %v483
      %v485 = vpop.xlane.xlu0 %484
      %v486 = vmul.f32 %v472, 0.00390625
      %v487 = vmul.f32 %v475, 0.00390625
      %v488 = vmul.f32 %v482, 0.00390625
      %v489 = vmul.f32 %v485, 0.00390625
      %v490 = vmul.f32 %v486, %v486
      %v491 = vmul.f32 %v487, %v487
      %v492 = vsub.f32 %v488, %v490
      %v493 = vsub.f32 %v489, %v491
      %v494 = vmax.f32 %v492, 0.0
      %v495 = vmax.f32 %v493, 0.0
      %v496 = vsub.f32 %v462, %v486
      %v497 = vsub.f32 %v464, %v486
      %v498 = vsub.f32 %v466, %v487
      %v499 = vsub.f32 %v468, %v487
      %v500 = vadd.f32 %v494, 1e-05
      %v501 = vadd.f32 %v495, 1e-05
      %v502 = vrsqrt.pop %v500
      %v503 = vrsqrt.pop %v501
      %v504 = vmul.f32 %v496, %v502
      %v505 = vmul.f32 %v497, %v502
      %v506 = vmul.f32 %v498, %v503
      %v507 = vmul.f32 %v499, %v503
      %v508 = vmax.f32 %v504, 0.0
      %v509 = vmax.f32 %v505, 0.0
      %v510 = vmax.f32 %v506, 0.0
      %v511 = vmax.f32 %v507, 0.0
      %v512 = vpack.c.bf16 %v510, %v508
      %v513 = vpack.c.bf16 %v511, %v509
      %v516 = vunpack.c.l.b16 %v512
      %v517 = vunpack.c.l.b16 %v513
      %v518 = vunpack.c.h.b16 %v512
      %v519 = vunpack.c.h.b16 %v513
      %v520 = vpack.c.b16 %v517, %v516
      %v521 = vpack.c.b16 %v519, %v518
      %524 = vst [vmem:[%s143] sm:$0xff] %v520
      %525 = vst [vmem:[%s143 + $0x8] sm:$0xff] %v521
      %p526 = scmp.lt.s32.totalorder %s13, 1
      %s527 = scalar_select %p526, %s13, 1
      %s528 = smul.addr %s527, 4
      %s529 = smul.addr %s528, 4
      %s530 = scalar_lea.vmem %s2, %s529
      // Predicated region
      $region29: #{decoder_forward.3} parent=27 // pred_check
        %p531 = pneg %p78
      $region30: #{decoder_forward.3} parent=27 // pred_check_branch
        %533 = sbr.rel (%p531) target = $region32
      $region31: #{decoder_forward.3} parent=27 // pred_region
        _
      $region32: #{decoder_forward.3} parent=27 // pred_fallthru
        _
    $region28: #{decoder_forward.3} parent=5 // pred_fallthru
      _
    %p534 = scmp.le.s32.totalorder 2, %s8
    // Predicated region
    $region33: #{decoder_forward.3} parent=5 // pred_check
      %p535 = pneg %p534
    $region34: #{decoder_forward.3} parent=5 // pred_check_branch
      %537 = sbr.rel (%p535) target = $region36
    $region35: #{decoder_forward.3} parent=5 // pred_region
      %s538 = ssub.s32 %s8, 2
      // Predicated region
      $region37: #{decoder_forward.3} parent=35 // pred_check
        %p539 = pneg %p84
      $region38: #{decoder_forward.3} parent=35 // pred_check_branch
        %541 = sbr.rel (%p539) target = $region40
      $region39: #{decoder_forward.3} parent=35 // pred_region
        %p542 = scmp.lt.s32.totalorder %s14, 1
        %s543 = scalar_select %p542, %s14, 1
        %s544 = smul.addr %s543, 4
        %s545 = smul.addr %s544, 4
        %s546 = scalar_lea.vmem %s2, %s545
      $region40: #{decoder_forward.3} parent=35 // pred_fallthru
        _
    $region36: #{decoder_forward.3} parent=5 // pred_fallthru
      _
  $region6: #{decoder_forward.3} parent=0 // loop_footer
    %s12 = sadd.s32 1, %s8
  $region7: #{decoder_forward.3} parent=0 // loop_footer_branch
    %7 = sbr.rel target = $region3
  $region8: #{decoder_forward.3} parent=0 // loop_exit
    _

// kernel: decoder_forward.4
$region0: #{decoder_forward.4}
  #allocation0 [shape = 'u32[]', space=smem, size = 0x4, offset = 0x4, fixed_abs, tag = 'smem constant byte address 0x4 - core index']
  #allocation1 [shape = 'u32[144,128]{1,0:T(1,128)}', space=vmem, size = 0x12000, scoped, tag = 'internal scratch']
  %s0 = inlined_call_operand.vmem [shape: bf16[2,144,1024], index: 0, kind: input, shape index: {}]
  %s1 = inlined_call_operand.vmem [shape: bf16[8,144], index: 1, kind: input, shape index: {}]
  %s2 = inlined_call_operand.vmem [shape: bf16[2,8,1024], index: 2, kind: output, shape index: {}]
  %s3 = sld [smem:[#allocation0]]
  $region41: #{decoder_forward.4} parent=0
    _
  %s5 = ssub.s32 1, %s3
  %s6 = scalar_select 0, %s5, %s3
  loop: start=0, step=1, limit=4
  $region2: #{decoder_forward.4} parent=0 // loop_pre_header
    _
  $region3: #{decoder_forward.4} parent=0 // loop_header
    %s8 = sphi 0, %s12
    %p9 = scmp.ge.s32.totalorder %s8, 4
    %s18 = sphi 0, %s20
    %s21 = sphi 0, %s18
    %s22 = sphi 0, %s21
    %s38 = sphi 0, %s22
    %s42 = sphi 0, %s42
    %s44 = sphi 0, %s42
    %s45 = sphi 0, %s44
    %s59 = sphi 0, %s45
    %s65 = sphi 0, %s67
    %s68 = sphi 0, %s65
    %s69 = sphi 0, %s68
    %s85 = sphi 0, %s69
  $region4: #{decoder_forward.4} parent=0 // loop_header_branch
    %11 = sbr.rel (%p9) target = $region8
  $region5: #{decoder_forward.4} parent=0 // loop_body
    %s13 = ssub.s32 %s8, 1
    %s14 = ssub.s32 %s8, 2
    %s15 = sadd.s32 %s8, 1
    %s16 = ssub.s32 %s8, %s15
    %p17 = scmp.eq.s32.totalorder %s16, 0
    %s19 = sadd.s32 %s18, 1
    %s20 = scalar_select %p17, %s18, %s19
    %p23 = pneg %p17
    %p24 = scmp.eq.s32.totalorder %s8, 1
    %p25 = por %p23, %p24
    %p26 = scmp.ne.s32.totalorder %s18, %s21
    %p27 = scmp.eq.s32.totalorder %s8, 0
    %p28 = por %p26, %p27
    %p29 = scmp.ne.s32.totalorder %s18, %s21
    %p30 = scmp.eq.s32.totalorder %s13, 1
    %p31 = por %p29, %p30
    %p32 = scmp.ne.s32.totalorder %s21, %s22
    %p33 = scmp.eq.s32.totalorder %s13, 0
    %p34 = por %p32, %p33
    %p35 = scmp.ne.s32.totalorder %s21, %s22
    %p36 = scmp.eq.s32.totalorder %s14, 1
    %p37 = por %p35, %p36
    %p39 = scmp.ne.s32.totalorder %s22, %s38
    %p40 = scmp.eq.s32.totalorder %s14, 0
    %p41 = por %p39, %p40
    %s43 = sadd.s32 %s42, 1
    %p46 = scmp.eq.s32.totalorder %s8, 1
    %p47 = scmp.ne.s32.totalorder %s42, %s44
    %p48 = scmp.eq.s32.totalorder %s8, 0
    %p49 = por %p47, %p48
    %p50 = scmp.ne.s32.totalorder %s42, %s44
    %p51 = scmp.eq.s32.totalorder %s13, 1
    %p52 = por %p50, %p51
    %p53 = scmp.ne.s32.totalorder %s44, %s45
    %p54 = scmp.eq.s32.totalorder %s13, 0
    %p55 = por %p53, %p54
    %p56 = scmp.ne.s32.totalorder %s44, %s45
    %p57 = scmp.eq.s32.totalorder %s14, 1
    %p58 = por %p56, %p57
    %p60 = scmp.ne.s32.totalorder %s45, %s59
    %p61 = scmp.eq.s32.totalorder %s14, 0
    %p62 = por %p60, %p61
    %s63 = ssub.s32 %s8, %s15
    %p64 = scmp.eq.s32.totalorder %s63, 0
    %s66 = sadd.s32 %s65, 1
    %s67 = scalar_select %p64, %s65, %s66
    %p70 = pneg %p64
    %p71 = scmp.eq.s32.totalorder %s8, 1
    %p72 = por %p70, %p71
    %p73 = scmp.ne.s32.totalorder %s65, %s68
    %p74 = scmp.eq.s32.totalorder %s8, 0
    %p75 = por %p73, %p74
    %p76 = scmp.ne.s32.totalorder %s65, %s68
    %p77 = scmp.eq.s32.totalorder %s13, 1
    %p78 = por %p76, %p77
    %p79 = scmp.ne.s32.totalorder %s68, %s69
    %p80 = scmp.eq.s32.totalorder %s13, 0
    %p81 = por %p79, %p80
    %p82 = scmp.ne.s32.totalorder %s68, %s69
    %p83 = scmp.eq.s32.totalorder %s14, 1
    %p84 = por %p82, %p83
    %p86 = scmp.ne.s32.totalorder %s69, %s85
    %p87 = scmp.eq.s32.totalorder %s14, 0
    %p88 = por %p86, %p87
    %p89 = scmp.le.s32.totalorder 1, %s8
    %p90 = scmp.lt.s32.totalorder %s8, 3
    %p91 = pnand %p89, %p90
    %p92 = pneg %p91
    // Predicated region
    $region9: #{decoder_forward.4} parent=5 // pred_check
      _
    $region10: #{decoder_forward.4} parent=5 // pred_check_branch
      %94 = sbr.rel (%p91) target = $region12
    $region11: #{decoder_forward.4} parent=5 // pred_region
      %s95 = ssub.s32 %s8, 1
      // Predicated region
      $region13: #{decoder_forward.4} parent=11 // pred_check
        %p96 = pneg %p55
      $region14: #{decoder_forward.4} parent=11 // pred_check_branch
        %98 = sbr.rel (%p96) target = $region16
      $region15: #{decoder_forward.4} parent=11 // pred_region
        _
      $region16: #{decoder_forward.4} parent=11 // pred_fallthru
        _
    $region12: #{decoder_forward.4} parent=5 // pred_fallthru
      _
    %p99 = scmp.lt.s32.totalorder %s8, 2
    // Predicated region
    $region17: #{decoder_forward.4} parent=5 // pred_check
      %p100 = pneg %p99
    $region18: #{decoder_forward.4} parent=5 // pred_check_branch
      %102 = sbr.rel (%p100) target = $region20
    $region19: #{decoder_forward.4} parent=5 // pred_region
      // Predicated region
      $region21: #{decoder_forward.4} parent=19 // pred_check
        %p103 = pneg %p28
      $region22: #{decoder_forward.4} parent=19 // pred_check_branch
        %105 = sbr.rel (%p103) target = $region24
      $region23: #{decoder_forward.4} parent=19 // pred_region
        %p106 = scmp.lt.s32.totalorder %s8, 1
        %s107 = scalar_select %p106, %s8, 1
        %s108 = smul.addr %s107, 144
        %s109 = smul.addr %s108, 4
        %s110 = scalar_lea.vmem %s0, %s109
      $region24: #{decoder_forward.4} parent=19 // pred_fallthru
        _
    $region20: #{decoder_forward.4} parent=5 // pred_fallthru
      _
    %p111 = scmp.le.s32.totalorder 1, %s8
    %p112 = scmp.lt.s32.totalorder %s8, 3
    %p113 = pnand %p111, %p112
    %p114 = pneg %p113
    // Predicated region
    $region25: #{decoder_forward.4} parent=5 // pred_check
      _
    $region26: #{decoder_forward.4} parent=5 // pred_check_branch
      %116 = sbr.rel (%p113) target = $region28
    $region27: #{decoder_forward.4} parent=5 // pred_region
      %s117 = ssub.s32 %s8, 1
      %p118 = scmp.lt.s32.totalorder %s13, 1
      %s119 = scalar_select %p118, %s13, 1
      %s120 = smul.addr %s119, 144
      %s121 = smul.addr %s120, 4
      %s122 = scalar_lea.vmem %s0, %s121
      %p123 = pneg %p34
      %p124 = pneg %p31
      %p125 = pneg %p55
      %p126 = pneg %p52
      %p127 = pneg %p81
      %p128 = pneg %p78
      %p129 = scmp.lt.s32.totalorder %s13, 1
      %s130 = scalar_select %p129, %s13, 1
      %s131 = smul.addr %s130, 8
      %s132 = smul.addr %s131, 4
      %s133 = scalar_lea.vmem %s2, %s132
      %p134 = scmp.lt.s32.totalorder %s13, 1
      %s135 = scalar_select %p134, %s13, 1
      %s136 = smul.addr %s135, 144
      %s137 = smul.addr %s136, 4
      %s138 = scalar_lea.vmem %s0, %s137
      %p139 = scmp.lt.s32.totalorder %s13, 1
      %s140 = scalar_select %p139, %s13, 1
      %s141 = smul.addr %s140, 8
      %s142 = smul.addr %s141, 4
      %s143 = scalar_lea.vmem %s2, %s142
      %v145 = vld [vmem:[%s1] sm:$0xff]
      %v146 = vld [vmem:[%s138] sm:$0xff]
      %v147 = vld [vmem:[%s138 + $0x8] sm:$0xff]
      %v148 = vld [vmem:[%s138 + $0x10] sm:$0xff]
      %v149 = vld [vmem:[%s138 + $0x18] sm:$0xff]
      %v150 = vld [vmem:[%s138 + $0x20] sm:$0xff]
      %v151 = vld [vmem:[%s138 + $0x28] sm:$0xff]
      %v152 = vld [vmem:[%s138 + $0x30] sm:$0xff]
      %v153 = vld [vmem:[%s138 + $0x38] sm:$0xff]
      %v154 = vld [vmem:[%s138 + $0x40] sm:$0xff]
      %v155 = vld [vmem:[%s138 + $0x48] sm:$0xff]
      %v156 = vld [vmem:[%s138 + $0x50] sm:$0xff]
      %v157 = vld [vmem:[%s138 + $0x58] sm:$0xff]
      %v158 = vld [vmem:[%s138 + $0x60] sm:$0xff]
      %v159 = vld [vmem:[%s138 + $0x68] sm:$0xff]
      %v160 = vld [vmem:[%s138 + $0x70] sm:$0xff]
      %v161 = vld [vmem:[%s138 + $0x78] sm:$0xff]
      %v162 = vld [vmem:[%s138 + $0x80] sm:$0xff]
      %v163 = vld [vmem:[%s138 + $0x88] sm:$0xff]
      %v164 = vld [vmem:[%s138 + $0x90] sm:$0xff]
      %v165 = vld [vmem:[%s138 + $0x98] sm:$0xff]
      %v166 = vld [vmem:[%s138 + $0xa0] sm:$0xff]
      %v167 = vld [vmem:[%s138 + $0xa8] sm:$0xff]
      %v168 = vld [vmem:[%s138 + $0xb0] sm:$0xff]
      %v169 = vld [vmem:[%s138 + $0xb8] sm:$0xff]
      %v170 = vld [vmem:[%s138 + $0xc0] sm:$0xff]
      %v171 = vld [vmem:[%s138 + $0xc8] sm:$0xff]
      %v172 = vld [vmem:[%s138 + $0xd0] sm:$0xff]
      %v173 = vld [vmem:[%s138 + $0xd8] sm:$0xff]
      %v174 = vld [vmem:[%s138 + $0xe0] sm:$0xff]
      %v175 = vld [vmem:[%s138 + $0xe8] sm:$0xff]
      %v176 = vld [vmem:[%s138 + $0xf0] sm:$0xff]
      %v177 = vld [vmem:[%s138 + $0xf8] sm:$0xff]
      %v178 = vld [vmem:[%s138 + $0x100] sm:$0xff]
      %v179 = vld [vmem:[%s138 + $0x108] sm:$0xff]
      %v180 = vld [vmem:[%s138 + $0x110] sm:$0xff]
      %v181 = vld [vmem:[%s138 + $0x118] sm:$0xff]
      %v182 = vld [vmem:[%s138 + $0x120] sm:$0xff]
      %v183 = vld [vmem:[%s138 + $0x128] sm:$0xff]
      %v184 = vld [vmem:[%s138 + $0x130] sm:$0xff]
      %v185 = vld [vmem:[%s138 + $0x138] sm:$0xff]
      %v186 = vld [vmem:[%s138 + $0x140] sm:$0xff]
      %v187 = vld [vmem:[%s138 + $0x148] sm:$0xff]
      %v188 = vld [vmem:[%s138 + $0x150] sm:$0xff]
      %v189 = vld [vmem:[%s138 + $0x158] sm:$0xff]
      %v190 = vld [vmem:[%s138 + $0x160] sm:$0xff]
      %v191 = vld [vmem:[%s138 + $0x168] sm:$0xff]
      %v192 = vld [vmem:[%s138 + $0x170] sm:$0xff]
      %v193 = vld [vmem:[%s138 + $0x178] sm:$0xff]
      %v194 = vld [vmem:[%s138 + $0x180] sm:$0xff]
      %v195 = vld [vmem:[%s138 + $0x188] sm:$0xff]
      %v196 = vld [vmem:[%s138 + $0x190] sm:$0xff]
      %v197 = vld [vmem:[%s138 + $0x198] sm:$0xff]
      %v198 = vld [vmem:[%s138 + $0x1a0] sm:$0xff]
      %v199 = vld [vmem:[%s138 + $0x1a8] sm:$0xff]
      %v200 = vld [vmem:[%s138 + $0x1b0] sm:$0xff]
      %v201 = vld [vmem:[%s138 + $0x1b8] sm:$0xff]
      %v202 = vld [vmem:[%s138 + $0x1c0] sm:$0xff]
      %v203 = vld [vmem:[%s138 + $0x1c8] sm:$0xff]
      %v204 = vld [vmem:[%s138 + $0x1d0] sm:$0xff]
      %v205 = vld [vmem:[%s138 + $0x1d8] sm:$0xff]
      %v206 = vld [vmem:[%s138 + $0x1e0] sm:$0xff]
      %v207 = vld [vmem:[%s138 + $0x1e8] sm:$0xff]
      %v208 = vld [vmem:[%s138 + $0x1f0] sm:$0xff]
      %v209 = vld [vmem:[%s138 + $0x1f8] sm:$0xff]
      %v210 = vld [vmem:[%s138 + $0x200] sm:$0xff]
      %v211 = vld [vmem:[%s138 + $0x208] sm:$0xff]
      %v212 = vld [vmem:[%s138 + $0x210] sm:$0xff]
      %v213 = vld [vmem:[%s138 + $0x218] sm:$0xff]
      %v214 = vld [vmem:[%s138 + $0x220] sm:$0xff]
      %v215 = vld [vmem:[%s138 + $0x228] sm:$0xff]
      %v216 = vld [vmem:[%s138 + $0x230] sm:$0xff]
      %v217 = vld [vmem:[%s138 + $0x238] sm:$0xff]
      %v219 = vunpack.c.l.b16 %v145
      %v220 = vunpack.c.h.b16 %v145
      %v221 = vpack.c.b16 %v219, %v219
      %v222 = vpack.c.b16 %v220, %v220
      %v296 = vunpack.c.l.b16 %v146
      %v297 = vunpack.c.h.b16 %v146
      %v298 = vunpack.c.l.b16 %v147
      %v299 = vunpack.c.h.b16 %v147
      %v300 = vunpack.c.l.b16 %v148
      %v301 = vunpack.c.h.b16 %v148
      %v302 = vunpack.c.l.b16 %v149
      %v303 = vunpack.c.h.b16 %v149
      %v304 = vunpack.c.l.b16 %v150
      %v305 = vunpack.c.h.b16 %v150
      %v306 = vunpack.c.l.b16 %v151
      %v307 = vunpack.c.h.b16 %v151
      %v308 = vunpack.c.l.b16 %v152
      %v309 = vunpack.c.h.b16 %v152
      %v310 = vunpack.c.l.b16 %v153
      %v311 = vunpack.c.h.b16 %v153
      %v312 = vunpack.c.l.b16 %v154
      %v313 = vunpack.c.h.b16 %v154
      %v314 = vunpack.c.l.b16 %v155
      %v315 = vunpack.c.h.b16 %v155
      %v316 = vunpack.c.l.b16 %v156
      %v317 = vunpack.c.h.b16 %v156
      %v318 = vunpack.c.l.b16 %v157
      %v319 = vunpack.c.h.b16 %v157
      %v320 = vunpack.c.l.b16 %v158
      %v321 = vunpack.c.h.b16 %v158
      %v322 = vunpack.c.l.b16 %v159
      %v323 = vunpack.c.h.b16 %v159
      %v324 = vunpack.c.l.b16 %v160
      %v325 = vunpack.c.h.b16 %v160
      %v326 = vunpack.c.l.b16 %v161
      %v327 = vunpack.c.h.b16 %v161
      %v328 = vunpack.c.l.b16 %v162
      %v329 = vunpack.c.h.b16 %v162
      %v330 = vunpack.c.l.b16 %v163
      %v331 = vunpack.c.h.b16 %v163
      %v332 = vunpack.c.l.b16 %v164
      %v333 = vunpack.c.h.b16 %v164
      %v334 = vunpack.c.l.b16 %v165
      %v335 = vunpack.c.h.b16 %v165
      %v336 = vunpack.c.l.b16 %v166
      %v337 = vunpack.c.h.b16 %v166
      %v338 = vunpack.c.l.b16 %v167
      %v339 = vunpack.c.h.b16 %v167
      %v340 = vunpack.c.l.b16 %v168
      %v341 = vunpack.c.h.b16 %v168
      %v342 = vunpack.c.l.b16 %v169
      %v343 = vunpack.c.h.b16 %v169
      %v344 = vunpack.c.l.b16 %v170
      %v345 = vunpack.c.h.b16 %v170
      %v346 = vunpack.c.l.b16 %v171
      %v347 = vunpack.c.h.b16 %v171
      %v348 = vunpack.c.l.b16 %v172
      %v349 = vunpack.c.h.b16 %v172
      %v350 = vunpack.c.l.b16 %v173
      %v351 = vunpack.c.h.b16 %v173
      %v352 = vunpack.c.l.b16 %v174
      %v353 = vunpack.c.h.b16 %v174
      %v354 = vunpack.c.l.b16 %v175
      %v355 = vunpack.c.h.b16 %v175
      %v356 = vunpack.c.l.b16 %v176
      %v357 = vunpack.c.h.b16 %v176
      %v358 = vunpack.c.l.b16 %v177
      %v359 = vunpack.c.h.b16 %v177
      %v360 = vunpack.c.l.b16 %v178
      %v361 = vunpack.c.h.b16 %v178
      %v362 = vunpack.c.l.b16 %v179
      %v363 = vunpack.c.h.b16 %v179
      %v364 = vunpack.c.l.b16 %v180
      %v365 = vunpack.c.h.b16 %v180
      %v366 = vunpack.c.l.b16 %v181
      %v367 = vunpack.c.h.b16 %v181
      %v368 = vunpack.c.l.b16 %v182
      %v369 = vunpack.c.h.b16 %v182
      %v370 = vunpack.c.l.b16 %v183
      %v371 = vunpack.c.h.b16 %v183
      %v372 = vunpack.c.l.b16 %v184
      %v373 = vunpack.c.h.b16 %v184
      %v374 = vunpack.c.l.b16 %v185
      %v375 = vunpack.c.h.b16 %v185
      %v376 = vunpack.c.l.b16 %v186
      %v377 = vunpack.c.h.b16 %v186
      %v378 = vunpack.c.l.b16 %v187
      %v379 = vunpack.c.h.b16 %v187
      %v380 = vunpack.c.l.b16 %v188
      %v381 = vunpack.c.h.b16 %v188
      %v382 = vunpack.c.l.b16 %v189
      %v383 = vunpack.c.h.b16 %v189
      %v384 = vunpack.c.l.b16 %v190
      %v385 = vunpack.c.h.b16 %v190
      %v386 = vunpack.c.l.b16 %v191
      %v387 = vunpack.c.h.b16 %v191
      %v388 = vunpack.c.l.b16 %v192
      %v389 = vunpack.c.h.b16 %v192
      %v390 = vunpack.c.l.b16 %v193
      %v391 = vunpack.c.h.b16 %v193
      %v392 = vunpack.c.l.b16 %v194
      %v393 = vunpack.c.h.b16 %v194
      %v394 = vunpack.c.l.b16 %v195
      %v395 = vunpack.c.h.b16 %v195
      %v396 = vunpack.c.l.b16 %v196
      %v397 = vunpack.c.h.b16 %v196
      %v398 = vunpack.c.l.b16 %v197
      %v399 = vunpack.c.h.b16 %v197
      %v400 = vunpack.c.l.b16 %v198
      %v401 = vunpack.c.h.b16 %v198
      %v402 = vunpack.c.l.b16 %v199
      %v403 = vunpack.c.h.b16 %v199
      %v404 = vunpack.c.l.b16 %v200
      %v405 = vunpack.c.h.b16 %v200
      %v406 = vunpack.c.l.b16 %v201
      %v407 = vunpack.c.h.b16 %v201
      %v408 = vunpack.c.l.b16 %v202
      %v409 = vunpack.c.h.b16 %v202
      %v410 = vunpack.c.l.b16 %v203
      %v411 = vunpack.c.h.b16 %v203
      %v412 = vunpack.c.l.b16 %v204
      %v413 = vunpack.c.h.b16 %v204
      %v414 = vunpack.c.l.b16 %v205
      %v415 = vunpack.c.h.b16 %v205
      %v416 = vunpack.c.l.b16 %v206
      %v417 = vunpack.c.h.b16 %v206
      %v418 = vunpack.c.l.b16 %v207
      %v419 = vunpack.c.h.b16 %v207
      %v420 = vunpack.c.l.b16 %v208
      %v421 = vunpack.c.h.b16 %v208
      %v422 = vunpack.c.l.b16 %v209
      %v423 = vunpack.c.h.b16 %v209
      %v424 = vunpack.c.l.b16 %v210
      %v425 = vunpack.c.h.b16 %v210
      %v426 = vunpack.c.l.b16 %v211
      %v427 = vunpack.c.h.b16 %v211
      %v428 = vunpack.c.l.b16 %v212
      %v429 = vunpack.c.h.b16 %v212
      %v430 = vunpack.c.l.b16 %v213
      %v431 = vunpack.c.h.b16 %v213
      %v432 = vunpack.c.l.b16 %v214
      %v433 = vunpack.c.h.b16 %v214
      %v434 = vunpack.c.l.b16 %v215
      %v435 = vunpack.c.h.b16 %v215
      %v436 = vunpack.c.l.b16 %v216
      %v437 = vunpack.c.h.b16 %v216
      %v438 = vunpack.c.l.b16 %v217
      %v439 = vunpack.c.h.b16 %v217
      %v440 = vpack.c.b16 %v304, %v296
      %v441 = vpack.c.b16 %v305, %v297
      %v442 = vpack.c.b16 %v306, %v298
      %v443 = vpack.c.b16 %v307, %v299
      %v444 = vpack.c.b16 %v308, %v300
      %v445 = vpack.c.b16 %v309, %v301
      %v446 = vpack.c.b16 %v310, %v302
      %v447 = vpack.c.b16 %v311, %v303
      %v448 = vpack.c.b16 %v320, %v312
      %v449 = vpack.c.b16 %v321, %v313
      %v450 = vpack.c.b16 %v322, %v314
      %v451 = vpack.c.b16 %v323, %v315
      %v452 = vpack.c.b16 %v324, %v316
      %v453 = vpack.c.b16 %v325, %v317
      %v454 = vpack.c.b16 %v326, %v318
      %v455 = vpack.c.b16 %v327, %v319
      %v456 = vpack.c.b16 %v336, %v328
      %v457 = vpack.c.b16 %v337, %v329
      %v458 = vpack.c.b16 %v338, %v330
      %v459 = vpack.c.b16 %v339, %v331
      %v460 = vpack.c.b16 %v340, %v332
      %v461 = vpack.c.b16 %v341, %v333
      %v462 = vpack.c.b16 %v342, %v334
      %v463 = vpack.c.b16 %v343, %v335
      %v464 = vpack.c.b16 %v352, %v344
      %v465 = vpack.c.b16 %v353, %v345
      %v466 = vpack.c.b16 %v354, %v346
      %v467 = vpack.c.b16 %v355, %v347
      %v468 = vpack.c.b16 %v356, %v348
      %v469 = vpack.c.b16 %v357, %v349
      %v470 = vpack.c.b16 %v358, %v350
      %v471 = vpack.c.b16 %v359, %v351
      %v472 = vpack.c.b16 %v368, %v360
      %v473 = vpack.c.b16 %v369, %v361
      %v474 = vpack.c.b16 %v370, %v362
      %v475 = vpack.c.b16 %v371, %v363
      %v476 = vpack.c.b16 %v372, %v364
      %v477 = vpack.c.b16 %v373, %v365
      %v478 = vpack.c.b16 %v374, %v366
      %v479 = vpack.c.b16 %v375, %v367
      %v480 = vpack.c.b16 %v384, %v376
      %v481 = vpack.c.b16 %v385, %v377
      %v482 = vpack.c.b16 %v386, %v378
      %v483 = vpack.c.b16 %v387, %v379
      %v484 = vpack.c.b16 %v388, %v380
      %v485 = vpack.c.b16 %v389, %v381
      %v486 = vpack.c.b16 %v390, %v382
      %v487 = vpack.c.b16 %v391, %v383
      %v488 = vpack.c.b16 %v400, %v392
      %v489 = vpack.c.b16 %v401, %v393
      %v490 = vpack.c.b16 %v402, %v394
      %v491 = vpack.c.b16 %v403, %v395
      %v492 = vpack.c.b16 %v404, %v396
      %v493 = vpack.c.b16 %v405, %v397
      %v494 = vpack.c.b16 %v406, %v398
      %v495 = vpack.c.b16 %v407, %v399
      %v496 = vpack.c.b16 %v416, %v408
      %v497 = vpack.c.b16 %v417, %v409
      %v498 = vpack.c.b16 %v418, %v410
      %v499 = vpack.c.b16 %v419, %v411
      %v500 = vpack.c.b16 %v420, %v412
      %v501 = vpack.c.b16 %v421, %v413
      %v502 = vpack.c.b16 %v422, %v414
      %v503 = vpack.c.b16 %v423, %v415
      %v504 = vpack.c.b16 %v432, %v424
      %v505 = vpack.c.b16 %v433, %v425
      %v506 = vpack.c.b16 %v434, %v426
      %v507 = vpack.c.b16 %v435, %v427
      %v508 = vpack.c.b16 %v436, %v428
      %v509 = vpack.c.b16 %v437, %v429
      %v510 = vpack.c.b16 %v438, %v430
      %v511 = vpack.c.b16 %v439, %v431
      %vm584 = vcmask 130048
      %v586 = vsel %vm584, %v222, 0
      %588 = vmatprep.subr.bf16.mxu0 %v497
      %589 = vmatpush1.bf16.msra.mxu0 %v496
      %590 = vmatprep.subr.bf16.mxu0 %v489
      %591 = vmatpush1.bf16.msra.mxu0 %v488
      %592 = vmatprep.subr.bf16.mxu0 %v481
      %593 = vmatpush1.bf16.msra.mxu0 %v480
      %594 = vmatprep.subr.bf16.mxu0 %v473
      %595 = vmatpush1.bf16.msra.mxu0 %v472
      %596 = vmatprep.subr.bf16.mxu0 %v465
      %597 = vmatpush1.bf16.msra.mxu0 %v464
      %598 = vmatprep.subr.bf16.mxu0 %v457
      %599 = vmatpush1.bf16.msra.mxu0 %v456
      %600 = vmatprep.subr.bf16.mxu0 %v449
      %601 = vmatpush1.bf16.msra.mxu0 %v448
      %602 = vmatprep.subr.bf16.mxu0 %v441
      %603 = vmatpush1.bf16.msra.mxu0 %v440
      %604 = vmatprep.subr.bf16.mxu0 0
      %605 = vmatpush2.bf16.msra.mxu0 0
      %606 = vmatprep.subr.bf16.mxu0 0
      %607 = vmatpush2.bf16.msra.mxu0 0
      %608 = vmatprep.subr.bf16.mxu0 0
      %609 = vmatpush2.bf16.msra.mxu0 0
      %610 = vmatprep.subr.bf16.mxu0 0
      %611 = vmatpush2.bf16.msra.mxu0 0
      %612 = vmatprep.subr.bf16.mxu0 0
      %613 = vmatpush2.bf16.msra.mxu0 0
      %614 = vmatprep.subr.bf16.mxu0 0
      %615 = vmatpush2.bf16.msra.mxu0 0
      %616 = vmatprep.subr.bf16.mxu0 0
      %617 = vmatpush2.bf16.msra.mxu0 0
      %618 = vmatprep.subr.bf16.mxu0 %v505
      %619 = vmatpush2.bf16.msra.mxu0 %v504
      %620 = vmatprep.mubr.bf16.mxu0 %v586
      %621 = vmatmul.mubr.bf16.gmra.mxu0 %v221
      %v622 = vpop.f32.mrf.mxu0
      %v623 = vadd.f32 0.0, %v622
      %v624 = vpop.f32.mrf.mxu0
      %v625 = vadd.f32 0.0, %v624
      %v626 = vpop.f32.mrf.mxu0
      %v627 = vpop.f32.mrf.mxu0
      %628 = vdwg.mxu0
      %629 = vmatprep.subr.bf16.mxu0 %v499
      %630 = vmatpush1.bf16.msra.mxu0 %v498
      %631 = vmatprep.subr.bf16.mxu0 %v491
      %632 = vmatpush1.bf16.msra.mxu0 %v490
      %633 = vmatprep.subr.bf16.mxu0 %v483
      %634 = vmatpush1.bf16.msra.mxu0 %v482
      %635 = vmatprep.subr.bf16.mxu0 %v475
      %636 = vmatpush1.bf16.msra.mxu0 %v474
      %637 = vmatprep.subr.bf16.mxu0 %v467
      %638 = vmatpush1.bf16.msra.mxu0 %v466
      %639 = vmatprep.subr.bf16.mxu0 %v459
      %640 = vmatpush1.bf16.msra.mxu0 %v458
      %641 = vmatprep.subr.bf16.mxu0 %v451
      %642 = vmatpush1.bf16.msra.mxu0 %v450
      %643 = vmatprep.subr.bf16.mxu0 %v443
      %644 = vmatpush1.bf16.msra.mxu0 %v442
      %645 = vmatprep.subr.bf16.mxu0 0
      %646 = vmatpush2.bf16.msra.mxu0 0
      %647 = vmatprep.subr.bf16.mxu0 0
      %648 = vmatpush2.bf16.msra.mxu0 0
      %649 = vmatprep.subr.bf16.mxu0 0
      %650 = vmatpush2.bf16.msra.mxu0 0
      %651 = vmatprep.subr.bf16.mxu0 0
      %652 = vmatpush2.bf16.msra.mxu0 0
      %653 = vmatprep.subr.bf16.mxu0 0
      %654 = vmatpush2.bf16.msra.mxu0 0
      %655 = vmatprep.subr.bf16.mxu0 0
      %656 = vmatpush2.bf16.msra.mxu0 0
      %657 = vmatprep.subr.bf16.mxu0 0
      %658 = vmatpush2.bf16.msra.mxu0 0
      %659 = vmatprep.subr.bf16.mxu0 %v507
      %660 = vmatpush2.bf16.msra.mxu0 %v506
      %661 = vmatprep.mubr.bf16.mxu0 %v586
      %662 = vmatmul.mubr.bf16.gmra.mxu0 %v221
      %v663 = vpop.f32.mrf.mxu0
      %v664 = vadd.f32 0.0, %v663
      %v665 = vpop.f32.mrf.mxu0
      %v666 = vadd.f32 0.0, %v665
      %v667 = vpop.f32.mrf.mxu0
      %v668 = vpop.f32.mrf.mxu0
      %669 = vdwg.mxu0
      %670 = vmatprep.subr.bf16.mxu0 %v501
      %671 = vmatpush1.bf16.msra.mxu0 %v500
      %672 = vmatprep.subr.bf16.mxu0 %v493
      %673 = vmatpush1.bf16.msra.mxu0 %v492
      %674 = vmatprep.subr.bf16.mxu0 %v485
      %675 = vmatpush1.bf16.msra.mxu0 %v484
      %676 = vmatprep.subr.bf16.mxu0 %v477
      %677 = vmatpush1.bf16.msra.mxu0 %v476
      %678 = vmatprep.subr.bf16.mxu0 %v469
      %679 = vmatpush1.bf16.msra.mxu0 %v468
      %680 = vmatprep.subr.bf16.mxu0 %v461
      %681 = vmatpush1.bf16.msra.mxu0 %v460
      %682 = vmatprep.subr.bf16.mxu0 %v453
      %683 = vmatpush1.bf16.msra.mxu0 %v452
      %684 = vmatprep.subr.bf16.mxu0 %v445
      %685 = vmatpush1.bf16.msra.mxu0 %v444
      %686 = vmatprep.subr.bf16.mxu0 0
      %687 = vmatpush2.bf16.msra.mxu0 0
      %688 = vmatprep.subr.bf16.mxu0 0
      %689 = vmatpush2.bf16.msra.mxu0 0
      %690 = vmatprep.subr.bf16.mxu0 0
      %691 = vmatpush2.bf16.msra.mxu0 0
      %692 = vmatprep.subr.bf16.mxu0 0
      %693 = vmatpush2.bf16.msra.mxu0 0
      %694 = vmatprep.subr.bf16.mxu0 0
      %695 = vmatpush2.bf16.msra.mxu0 0
      %696 = vmatprep.subr.bf16.mxu0 0
      %697 = vmatpush2.bf16.msra.mxu0 0
      %698 = vmatprep.subr.bf16.mxu0 0
      %699 = vmatpush2.bf16.msra.mxu0 0
      %700 = vmatprep.subr.bf16.mxu0 %v509
      %701 = vmatpush2.bf16.msra.mxu0 %v508
      %702 = vmatprep.mubr.bf16.mxu0 %v586
      %703 = vmatmul.mubr.bf16.gmra.mxu0 %v221
      %v704 = vpop.f32.mrf.mxu0
      %v705 = vadd.f32 0.0, %v704
      %v706 = vpop.f32.mrf.mxu0
      %v707 = vadd.f32 0.0, %v706
      %v708 = vpop.f32.mrf.mxu0
      %v709 = vpop.f32.mrf.mxu0
      %710 = vdwg.mxu0
      %711 = vmatprep.subr.bf16.mxu0 %v503
      %712 = vmatpush1.bf16.msra.mxu0 %v502
      %713 = vmatprep.subr.bf16.mxu0 %v495
      %714 = vmatpush1.bf16.msra.mxu0 %v494
      %715 = vmatprep.subr.bf16.mxu0 %v487
      %716 = vmatpush1.bf16.msra.mxu0 %v486
      %717 = vmatprep.subr.bf16.mxu0 %v479
      %718 = vmatpush1.bf16.msra.mxu0 %v478
      %719 = vmatprep.subr.bf16.mxu0 %v471
      %720 = vmatpush1.bf16.msra.mxu0 %v470
      %721 = vmatprep.subr.bf16.mxu0 %v463
      %722 = vmatpush1.bf16.msra.mxu0 %v462
      %723 = vmatprep.subr.bf16.mxu0 %v455
      %724 = vmatpush1.bf16.msra.mxu0 %v454
      %725 = vmatprep.subr.bf16.mxu0 %v447
      %726 = vmatpush1.bf16.msra.mxu0 %v446
      %727 = vmatprep.subr.bf16.mxu0 0
      %728 = vmatpush2.bf16.msra.mxu0 0
      %729 = vmatprep.subr.bf16.mxu0 0
      %730 = vmatpush2.bf16.msra.mxu0 0
      %731 = vmatprep.subr.bf16.mxu0 0
      %732 = vmatpush2.bf16.msra.mxu0 0
      %733 = vmatprep.subr.bf16.mxu0 0
      %734 = vmatpush2.bf16.msra.mxu0 0
      %735 = vmatprep.subr.bf16.mxu0 0
      %736 = vmatpush2.bf16.msra.mxu0 0
      %737 = vmatprep.subr.bf16.mxu0 0
      %738 = vmatpush2.bf16.msra.mxu0 0
      %739 = vmatprep.subr.bf16.mxu0 0
      %740 = vmatpush2.bf16.msra.mxu0 0
      %741 = vmatprep.subr.bf16.mxu0 %v511
      %742 = vmatpush2.bf16.msra.mxu0 %v510
      %743 = vmatprep.mubr.bf16.mxu0 %v586
      %744 = vmatmul.mubr.bf16.gmra.mxu0 %v221
      %v745 = vpop.f32.mrf.mxu0
      %v746 = vadd.f32 0.0, %v745
      %v747 = vpop.f32.mrf.mxu0
      %v748 = vadd.f32 0.0, %v747
      %v749 = vpop.f32.mrf.mxu0
      %v750 = vpop.f32.mrf.mxu0
      %751 = vdwg.mxu0
      %v752 = vadd.f32 %v623, %v625
      %v753 = vadd.f32 %v752, %v664
      %v754 = vadd.f32 %v753, %v666
      %v755 = vadd.f32 %v754, %v705
      %v756 = vadd.f32 %v755, %v707
      %v757 = vadd.f32 %v756, %v746
      %v758 = vadd.f32 %v757, %v748
      %759 = vadd.xlane.f32.xlu0 %v758
      %v760 = vpop.xlane.xlu0 %759
      %v761 = vmul.f32 %v623, %v623
      %v762 = vmul.f32 %v625, %v625
      %v763 = vmul.f32 %v664, %v664
      %v764 = vmul.f32 %v666, %v666
      %v765 = vmul.f32 %v705, %v705
      %v766 = vmul.f32 %v707, %v707
      %v767 = vmul.f32 %v746, %v746
      %v768 = vmul.f32 %v748, %v748
      %v769 = vadd.f32 %v761, %v762
      %v770 = vadd.f32 %v769, %v763
      %v771 = vadd.f32 %v770, %v764
      %v772 = vadd.f32 %v771, %v765
      %v773 = vadd.f32 %v772, %v766
      %v774 = vadd.f32 %v773, %v767
      %v775 = vadd.f32 %v774, %v768
      %776 = vadd.xlane.f32.xlu0 %v775
      %v777 = vpop.xlane.xlu0 %776
      %v778 = vmul.f32 %v760, 0.0009765625
      %v779 = vmul.f32 %v777, 0.0009765625
      %v780 = vmul.f32 %v778, %v778
      %v781 = vsub.f32 %v779, %v780
      %v782 = vmax.f32 %v781, 0.0
      %v783 = vsub.f32 %v623, %v778
      %v784 = vsub.f32 %v625, %v778
      %v785 = vsub.f32 %v664, %v778
      %v786 = vsub.f32 %v666, %v778
      %v787 = vsub.f32 %v705, %v778
      %v788 = vsub.f32 %v707, %v778
      %v789 = vsub.f32 %v746, %v778
      %v790 = vsub.f32 %v748, %v778
      %v791 = vadd.f32 %v782, 1e-05
      %v792 = vrsqrt.pop %v791
      %v793 = vmul.f32 %v783, %v792
      %v794 = vmul.f32 %v784, %v792
      %v795 = vmul.f32 %v785, %v792
      %v796 = vmul.f32 %v786, %v792
      %v797 = vmul.f32 %v787, %v792
      %v798 = vmul.f32 %v788, %v792
      %v799 = vmul.f32 %v789, %v792
      %v800 = vmul.f32 %v790, %v792
      %v801 = vmax.f32 %v793, 0.0
      %v802 = vmax.f32 %v794, 0.0
      %v803 = vmax.f32 %v795, 0.0
      %v804 = vmax.f32 %v796, 0.0
      %v805 = vmax.f32 %v797, 0.0
      %v806 = vmax.f32 %v798, 0.0
      %v807 = vmax.f32 %v799, 0.0
      %v808 = vmax.f32 %v800, 0.0
      %v809 = vpack.c.bf16 %v801, %v801
      %v810 = vpack.c.bf16 %v802, %v802
      %v811 = vpack.c.bf16 %v803, %v803
      %v812 = vpack.c.bf16 %v804, %v804
      %v813 = vpack.c.bf16 %v805, %v805
      %v814 = vpack.c.bf16 %v806, %v806
      %v815 = vpack.c.bf16 %v807, %v807
      %v816 = vpack.c.bf16 %v808, %v808
      %v825 = vunpack.c.l.b16 %v809
      %v826 = vunpack.c.l.b16 %v810
      %v827 = vunpack.c.l.b16 %v811
      %v828 = vunpack.c.l.b16 %v812
      %v829 = vunpack.c.l.b16 %v813
      %v830 = vunpack.c.l.b16 %v814
      %v831 = vunpack.c.l.b16 %v815
      %v832 = vunpack.c.l.b16 %v816
      %v833 = vpack.c.b16 %v826, %v825
      %v834 = vpack.c.b16 %v828, %v827
      %v835 = vpack.c.b16 %v830, %v829
      %v836 = vpack.c.b16 %v832, %v831
      %841 = vst [vmem:[%s143] sm:$0xff] %v833
      %842 = vst [vmem:[%s143 + $0x8] sm:$0xff] %v834
      %843 = vst [vmem:[%s143 + $0x10] sm:$0xff] %v835
      %844 = vst [vmem:[%s143 + $0x18] sm:$0xff] %v836
      %p845 = scmp.lt.s32.totalorder %s13, 1
      %s846 = scalar_select %p845, %s13, 1
      %s847 = smul.addr %s846, 8
      %s848 = smul.addr %s847, 4
      %s849 = scalar_lea.vmem %s2, %s848
      // Predicated region
      $region29: #{decoder_forward.4} parent=27 // pred_check
        %p850 = pneg %p78
      $region30: #{decoder_forward.4} parent=27 // pred_check_branch
        %852 = sbr.rel (%p850) target = $region32
      $region31: #{decoder_forward.4} parent=27 // pred_region
        _
      $region32: #{decoder_forward.4} parent=27 // pred_fallthru
        _
    $region28: #{decoder_forward.4} parent=5 // pred_fallthru
      _
    %p853 = scmp.le.s32.totalorder 2, %s8
    // Predicated region
    $region33: #{decoder_forward.4} parent=5 // pred_check
      %p854 = pneg %p853
    $region34: #{decoder_forward.4} parent=5 // pred_check_branch
      %856 = sbr.rel (%p854) target = $region36
    $region35: #{decoder_forward.4} parent=5 // pred_region
      %s857 = ssub.s32 %s8, 2
      // Predicated region
      $region37: #{decoder_forward.4} parent=35 // pred_check
        %p858 = pneg %p84
      $region38: #{decoder_forward.4} parent=35 // pred_check_branch
        %860 = sbr.rel (%p858) target = $region40
      $region39: #{decoder_forward.4} parent=35 // pred_region
        %p861 = scmp.lt.s32.totalorder %s14, 1
        %s862 = scalar_select %p861, %s14, 1
        %s863 = smul.addr %s862, 8
        %s864 = smul.addr %s863, 4
        %s865 = scalar_lea.vmem %s2, %s864
      $region40: #{decoder_forward.4} parent=35 // pred_fallthru
        _
    $region36: #{decoder_forward.4} parent=5 // pred_fallthru
      _
  $region6: #{decoder_forward.4} parent=0 // loop_footer
    %s12 = sadd.s32 1, %s8
  $region7: #{decoder_forward.4} parent=0 // loop_footer_branch
    %7 = sbr.rel target = $region3
  $region8: #{decoder_forward.4} parent=0 // loop_exit
    _

// kernel: decoder_forward.5
$region0: #{decoder_forward.5}
  #allocation0 [shape = 'u32[]', space=smem, size = 0x4, offset = 0x4, fixed_abs, tag = 'smem constant byte address 0x4 - core index']
  #allocation1 [shape = 'u32[144,128]{1,0:T(1,128)}', space=vmem, size = 0x12000, scoped, tag = 'internal scratch']
  %s0 = inlined_call_operand.vmem [shape: bf16[2,72,1280], index: 0, kind: input, shape index: {}]
  %s1 = inlined_call_operand.vmem [shape: f32[1,1280], index: 1, kind: input, shape index: {}]
  %s2 = inlined_call_operand.vmem [shape: bf16[4,72], index: 2, kind: input, shape index: {}]
  %s3 = inlined_call_operand.vmem [shape: bf16[9,4,4], index: 3, kind: input, shape index: {}]
  %s4 = inlined_call_operand.vmem [shape: f32[4,1], index: 4, kind: input, shape index: {}]
  %s5 = inlined_call_operand.vmem [shape: f32[2,4,1152], index: 5, kind: output, shape index: {}]
  %s6 = sld [smem:[#allocation0]]
  $region53: #{decoder_forward.5} parent=0
    _
  %s8 = ssub.s32 1, %s6
  %s9 = scalar_select 0, %s8, %s6
  loop: start=0, step=1, limit=4
  $region2: #{decoder_forward.5} parent=0 // loop_pre_header
    _
  $region3: #{decoder_forward.5} parent=0 // loop_header
    %s11 = sphi 0, %s15
    %p12 = scmp.ge.s32.totalorder %s11, 4
    %s21 = sphi 0, %s23
    %s24 = sphi 0, %s21
    %s25 = sphi 0, %s24
    %s41 = sphi 0, %s25
    %s45 = sphi 0, %s45
    %s47 = sphi 0, %s45
    %s48 = sphi 0, %s47
    %s62 = sphi 0, %s48
    %s66 = sphi 0, %s66
    %s68 = sphi 0, %s66
    %s69 = sphi 0, %s68
    %s83 = sphi 0, %s69
    %s87 = sphi 0, %s87
    %s89 = sphi 0, %s87
    %s90 = sphi 0, %s89
    %s104 = sphi 0, %s90
    %s108 = sphi 0, %s108
    %s110 = sphi 0, %s108
    %s111 = sphi 0, %s110
    %s125 = sphi 0, %s111
    %s131 = sphi 0, %s133
    %s134 = sphi 0, %s131
    %s135 = sphi 0, %s134
    %s151 = sphi 0, %s135
  $region4: #{decoder_forward.5} parent=0 // loop_header_branch
    %14 = sbr.rel (%p12) target = $region8
  $region5: #{decoder_forward.5} parent=0 // loop_body
    %s16 = ssub.s32 %s11, 1
    %s17 = ssub.s32 %s11, 2
    %s18 = sadd.s32 %s11, 1
    %s19 = ssub.s32 %s11, %s18
    %p20 = scmp.eq.s32.totalorder %s19, 0
    %s22 = sadd.s32 %s21, 1
    %s23 = scalar_select %p20, %s21, %s22
    %p26 = pneg %p20
    %p27 = scmp.eq.s32.totalorder %s11, 1
    %p28 = por %p26, %p27
    %p29 = scmp.ne.s32.totalorder %s21, %s24
    %p30 = scmp.eq.s32.totalorder %s11, 0
    %p31 = por %p29, %p30
    %p32 = scmp.ne.s32.totalorder %s21, %s24
    %p33 = scmp.eq.s32.totalorder %s16, 1
    %p34 = por %p32, %p33
    %p35 = scmp.ne.s32.totalorder %s24, %s25
    %p36 = scmp.eq.s32.totalorder %s16, 0
    %p37 = por %p35, %p36
    %p38 = scmp.ne.s32.totalorder %s24, %s25
    %p39 = scmp.eq.s32.totalorder %s17, 1
    %p40 = por %p38, %p39
    %p42 = scmp.ne.s32.totalorder %s25, %s41
    %p43 = scmp.eq.s32.totalorder %s17, 0
    %p44 = por %p42, %p43
    %s46 = sadd.s32 %s45, 1
    %p49 = scmp.eq.s32.totalorder %s11, 1
    %p50 = scmp.ne.s32.totalorder %s45, %s47
    %p51 = scmp.eq.s32.totalorder %s11, 0
    %p52 = por %p50, %p51
    %p53 = scmp.ne.s32.totalorder %s45, %s47
    %p54 = scmp.eq.s32.totalorder %s16, 1
    %p55 = por %p53, %p54
    %p56 = scmp.ne.s32.totalorder %s47, %s48
    %p57 = scmp.eq.s32.totalorder %s16, 0
    %p58 = por %p56, %p57
    %p59 = scmp.ne.s32.totalorder %s47, %s48
    %p60 = scmp.eq.s32.totalorder %s17, 1
    %p61 = por %p59, %p60
    %p63 = scmp.ne.s32.totalorder %s48, %s62
    %p64 = scmp.eq.s32.totalorder %s17, 0
    %p65 = por %p63, %p64
    %s67 = sadd.s32 %s66, 1
    %p70 = scmp.eq.s32.totalorder %s11, 1
    %p71 = scmp.ne.s32.totalorder %s66, %s68
    %p72 = scmp.eq.s32.totalorder %s11, 0
    %p73 = por %p71, %p72
    %p74 = scmp.ne.s32.totalorder %s66, %s68
    %p75 = scmp.eq.s32.totalorder %s16, 1
    %p76 = por %p74, %p75
    %p77 = scmp.ne.s32.totalorder %s68, %s69
    %p78 = scmp.eq.s32.totalorder %s16, 0
    %p79 = por %p77, %p78
    %p80 = scmp.ne.s32.totalorder %s68, %s69
    %p81 = scmp.eq.s32.totalorder %s17, 1
    %p82 = por %p80, %p81
    %p84 = scmp.ne.s32.totalorder %s69, %s83
    %p85 = scmp.eq.s32.totalorder %s17, 0
    %p86 = por %p84, %p85
    %s88 = sadd.s32 %s87, 1
    %p91 = scmp.eq.s32.totalorder %s11, 1
    %p92 = scmp.ne.s32.totalorder %s87, %s89
    %p93 = scmp.eq.s32.totalorder %s11, 0
    %p94 = por %p92, %p93
    %p95 = scmp.ne.s32.totalorder %s87, %s89
    %p96 = scmp.eq.s32.totalorder %s16, 1
    %p97 = por %p95, %p96
    %p98 = scmp.ne.s32.totalorder %s89, %s90
    %p99 = scmp.eq.s32.totalorder %s16, 0
    %p100 = por %p98, %p99
    %p101 = scmp.ne.s32.totalorder %s89, %s90
    %p102 = scmp.eq.s32.totalorder %s17, 1
    %p103 = por %p101, %p102
    %p105 = scmp.ne.s32.totalorder %s90, %s104
    %p106 = scmp.eq.s32.totalorder %s17, 0
    %p107 = por %p105, %p106
    %s109 = sadd.s32 %s108, 1
    %p112 = scmp.eq.s32.totalorder %s11, 1
    %p113 = scmp.ne.s32.totalorder %s108, %s110
    %p114 = scmp.eq.s32.totalorder %s11, 0
    %p115 = por %p113, %p114
    %p116 = scmp.ne.s32.totalorder %s108, %s110
    %p117 = scmp.eq.s32.totalorder %s16, 1
    %p118 = por %p116, %p117
    %p119 = scmp.ne.s32.totalorder %s110, %s111
    %p120 = scmp.eq.s32.totalorder %s16, 0
    %p121 = por %p119, %p120
    %p122 = scmp.ne.s32.totalorder %s110, %s111
    %p123 = scmp.eq.s32.totalorder %s17, 1
    %p124 = por %p122, %p123
    %p126 = scmp.ne.s32.totalorder %s111, %s125
    %p127 = scmp.eq.s32.totalorder %s17, 0
    %p128 = por %p126, %p127
    %s129 = ssub.s32 %s11, %s18
    %p130 = scmp.eq.s32.totalorder %s129, 0
    %s132 = sadd.s32 %s131, 1
    %s133 = scalar_select %p130, %s131, %s132
    %p136 = pneg %p130
    %p137 = scmp.eq.s32.totalorder %s11, 1
    %p138 = por %p136, %p137
    %p139 = scmp.ne.s32.totalorder %s131, %s134
    %p140 = scmp.eq.s32.totalorder %s11, 0
    %p141 = por %p139, %p140
    %p142 = scmp.ne.s32.totalorder %s131, %s134
    %p143 = scmp.eq.s32.totalorder %s16, 1
    %p144 = por %p142, %p143
    %p145 = scmp.ne.s32.totalorder %s134, %s135
    %p146 = scmp.eq.s32.totalorder %s16, 0
    %p147 = por %p145, %p146
    %p148 = scmp.ne.s32.totalorder %s134, %s135
    %p149 = scmp.eq.s32.totalorder %s17, 1
    %p150 = por %p148, %p149
    %p152 = scmp.ne.s32.totalorder %s135, %s151
    %p153 = scmp.eq.s32.totalorder %s17, 0
    %p154 = por %p152, %p153
    %p155 = scmp.le.s32.totalorder 1, %s11
    %p156 = scmp.lt.s32.totalorder %s11, 3
    %p157 = pnand %p155, %p156
    %p158 = pneg %p157
    // Predicated region
    $region9: #{decoder_forward.5} parent=5 // pred_check
      _
    $region10: #{decoder_forward.5} parent=5 // pred_check_branch
      %160 = sbr.rel (%p157) target = $region12
    $region11: #{decoder_forward.5} parent=5 // pred_region
      %s161 = ssub.s32 %s11, 1
      // Predicated region
      $region13: #{decoder_forward.5} parent=11 // pred_check
        %p162 = pneg %p58
      $region14: #{decoder_forward.5} parent=11 // pred_check_branch
        %164 = sbr.rel (%p162) target = $region16
      $region15: #{decoder_forward.5} parent=11 // pred_region
        _
      $region16: #{decoder_forward.5} parent=11 // pred_fallthru
        _
      // Predicated region
      $region17: #{decoder_forward.5} parent=11 // pred_check
        %p165 = pneg %p79
      $region18: #{decoder_forward.5} parent=11 // pred_check_branch
        %167 = sbr.rel (%p165) target = $region20
      $region19: #{decoder_forward.5} parent=11 // pred_region
        _
      $region20: #{decoder_forward.5} parent=11 // pred_fallthru
        _
      // Predicated region
      $region21: #{decoder_forward.5} parent=11 // pred_check
        %p168 = pneg %p100
      $region22: #{decoder_forward.5} parent=11 // pred_check_branch
        %170 = sbr.rel (%p168) target = $region24
      $region23: #{decoder_forward.5} parent=11 // pred_region
        _
      $region24: #{decoder_forward.5} parent=11 // pred_fallthru
        _
      // Predicated region
      $region25: #{decoder_forward.5} parent=11 // pred_check
        %p171 = pneg %p121
      $region26: #{decoder_forward.5} parent=11 // pred_check_branch
        %173 = sbr.rel (%p171) target = $region28
      $region27: #{decoder_forward.5} parent=11 // pred_region
        _
      $region28: #{decoder_forward.5} parent=11 // pred_fallthru
        _
    $region12: #{decoder_forward.5} parent=5 // pred_fallthru
      _
    %p174 = scmp.lt.s32.totalorder %s11, 2
    // Predicated region
    $region29: #{decoder_forward.5} parent=5 // pred_check
      %p175 = pneg %p174
    $region30: #{decoder_forward.5} parent=5 // pred_check_branch
      %177 = sbr.rel (%p175) target = $region32
    $region31: #{decoder_forward.5} parent=5 // pred_region
      // Predicated region
      $region33: #{decoder_forward.5} parent=31 // pred_check
        %p178 = pneg %p31
      $region34: #{decoder_forward.5} parent=31 // pred_check_branch
        %180 = sbr.rel (%p178) target = $region36
      $region35: #{decoder_forward.5} parent=31 // pred_region
        %p181 = scmp.lt.s32.totalorder %s11, 1
        %s182 = scalar_select %p181, %s11, 1
        %s183 = smul.addr %s182, 90
        %s184 = smul.addr %s183, 4
        %s185 = scalar_lea.vmem %s0, %s184
      $region36: #{decoder_forward.5} parent=31 // pred_fallthru
        _
    $region32: #{decoder_forward.5} parent=5 // pred_fallthru
      _
    %p186 = scmp.le.s32.totalorder 1, %s11
    %p187 = scmp.lt.s32.totalorder %s11, 3
    %p188 = pnand %p186, %p187
    %p189 = pneg %p188
    // Predicated region
    $region37: #{decoder_forward.5} parent=5 // pred_check
      _
    $region38: #{decoder_forward.5} parent=5 // pred_check_branch
      %191 = sbr.rel (%p188) target = $region40
    $region39: #{decoder_forward.5} parent=5 // pred_region
      %s192 = ssub.s32 %s11, 1
      %p193 = scmp.lt.s32.totalorder %s16, 1
      %s194 = scalar_select %p193, %s16, 1
      %s195 = smul.addr %s194, 90
      %s196 = smul.addr %s195, 4
      %s197 = scalar_lea.vmem %s0, %s196
      %p198 = pneg %p37
      %p199 = pneg %p34
      %p200 = pneg %p58
      %p201 = pneg %p55
      %p202 = pneg %p79
      %p203 = pneg %p76
      %p204 = pneg %p100
      %p205 = pneg %p97
      %p206 = pneg %p121
      %p207 = pneg %p118
      %p208 = pneg %p147
      %p209 = pneg %p144
      %p210 = scmp.lt.s32.totalorder %s16, 1
      %s211 = scalar_select %p210, %s16, 1
      %s212 = smul.addr %s211, 9
      %s213 = smul.addr %s212, 4
      %s214 = scalar_lea.vmem %s5, %s213
      %p215 = scmp.lt.s32.totalorder %s16, 1
      %s216 = scalar_select %p215, %s16, 1
      %s217 = smul.addr %s216, 90
      %s218 = smul.addr %s217, 4
      %s219 = scalar_lea.vmem %s0, %s218
      %p220 = scmp.lt.s32.totalorder %s16, 1
      %s221 = scalar_select %p220, %s16, 1
      %s222 = smul.addr %s221, 9
      %s223 = smul.addr %s222, 4
      %s224 = scalar_lea.vmem %s5, %s223
      %v226 = vld [vmem:[%s2] sm:$0x3]
      %v227 = vld [vmem:[%s219] sm:$0xff]
      %v228 = vld [vmem:[%s219 + $0x8] sm:$0xff]
      %v229 = vld [vmem:[%s219 + $0x10] sm:$0xff]
      %v230 = vld [vmem:[%s219 + $0x18] sm:$0xff]
      %v231 = vld [vmem:[%s219 + $0x20] sm:$0xff]
      %v232 = vld [vmem:[%s219 + $0x28] sm:$0xff]
      %v233 = vld [vmem:[%s219 + $0x30] sm:$0xff]
      %v234 = vld [vmem:[%s219 + $0x38] sm:$0xff]
      %v235 = vld [vmem:[%s219 + $0x40] sm:$0xff]
      %v236 = vld [vmem:[%s219 + $0x48] sm:$0xff]
      %v237 = vld [vmem:[%s219 + $0x50] sm:$0xff]
      %v238 = vld [vmem:[%s219 + $0x58] sm:$0xff]
      %v239 = vld [vmem:[%s219 + $0x60] sm:$0xff]
      %v240 = vld [vmem:[%s219 + $0x68] sm:$0xff]
      %v241 = vld [vmem:[%s219 + $0x70] sm:$0xff]
      %v242 = vld [vmem:[%s219 + $0x78] sm:$0xff]
      %v243 = vld [vmem:[%s219 + $0x80] sm:$0xff]
      %v244 = vld [vmem:[%s219 + $0x88] sm:$0xff]
      %v245 = vld [vmem:[%s219 + $0x90] sm:$0xff]
      %v246 = vld [vmem:[%s219 + $0x98] sm:$0xff]
      %v247 = vld [vmem:[%s219 + $0xa0] sm:$0xff]
      %v248 = vld [vmem:[%s219 + $0xa8] sm:$0xff]
      %v249 = vld [vmem:[%s219 + $0xb0] sm:$0xff]
      %v250 = vld [vmem:[%s219 + $0xb8] sm:$0xff]
      %v251 = vld [vmem:[%s219 + $0xc0] sm:$0xff]
      %v252 = vld [vmem:[%s219 + $0xc8] sm:$0xff]
      %v253 = vld [vmem:[%s219 + $0xd0] sm:$0xff]
      %v254 = vld [vmem:[%s219 + $0xd8] sm:$0xff]
      %v255 = vld [vmem:[%s219 + $0xe0] sm:$0xff]
      %v256 = vld [vmem:[%s219 + $0xe8] sm:$0xff]
      %v257 = vld [vmem:[%s219 + $0xf0] sm:$0xff]
      %v258 = vld [vmem:[%s219 + $0xf8] sm:$0xff]
      %v259 = vld [vmem:[%s219 + $0x100] sm:$0xff]
      %v260 = vld [vmem:[%s219 + $0x108] sm:$0xff]
      %v261 = vld [vmem:[%s219 + $0x110] sm:$0xff]
      %v262 = vld [vmem:[%s219 + $0x118] sm:$0xff]
      %v263 = vld [vmem:[%s219 + $0x120] sm:$0xff]
      %v264 = vld [vmem:[%s219 + $0x128] sm:$0xff]
      %v265 = vld [vmem:[%s219 + $0x130] sm:$0xff]
      %v266 = vld [vmem:[%s219 + $0x138] sm:$0xff]
      %v267 = vld [vmem:[%s219 + $0x140] sm:$0xff]
      %v268 = vld [vmem:[%s219 + $0x148] sm:$0xff]
      %v269 = vld [vmem:[%s219 + $0x150] sm:$0xff]
      %v270 = vld [vmem:[%s219 + $0x158] sm:$0xff]
      %v271 = vld [vmem:[%s219 + $0x160] sm:$0xff]
      %v317 = vunpack.c.l.b16 %v227
      %v318 = vunpack.c.h.b16 %v227
      %v319 = vunpack.c.l.b16 %v228
      %v320 = vunpack.c.h.b16 %v228
      %v321 = vunpack.c.l.b16 %v229
      %v322 = vunpack.c.h.b16 %v229
      %v323 = vunpack.c.l.b16 %v230
      %v324 = vunpack.c.h.b16 %v230
      %v325 = vunpack.c.l.b16 %v231
      %v326 = vunpack.c.h.b16 %v231
      %v327 = vunpack.c.l.b16 %v232
      %v328 = vunpack.c.h.b16 %v232
      %v329 = vunpack.c.l.b16 %v233
      %v330 = vunpack.c.h.b16 %v233
      %v331 = vunpack.c.l.b16 %v234
      %v332 = vunpack.c.h.b16 %v234
      %v333 = vunpack.c.l.b16 %v235
      %v334 = vunpack.c.h.b16 %v235
      %v335 = vunpack.c.l.b16 %v236
      %v336 = vunpack.c.h.b16 %v236
      %v337 = vunpack.c.l.b16 %v237
      %v338 = vunpack.c.h.b16 %v237
      %v339 = vunpack.c.l.b16 %v238
      %v340 = vunpack.c.h.b16 %v238
      %v341 = vunpack.c.l.b16 %v239
      %v342 = vunpack.c.h.b16 %v239
      %v343 = vunpack.c.l.b16 %v240
      %v344 = vunpack.c.h.b16 %v240
      %v345 = vunpack.c.l.b16 %v241
      %v346 = vunpack.c.h.b16 %v241
      %v347 = vunpack.c.l.b16 %v242
      %v348 = vunpack.c.h.b16 %v242
      %v349 = vunpack.c.l.b16 %v243
      %v350 = vunpack.c.h.b16 %v243
      %v351 = vunpack.c.l.b16 %v244
      %v352 = vunpack.c.h.b16 %v244
      %v353 = vunpack.c.l.b16 %v245
      %v354 = vunpack.c.h.b16 %v245
      %v355 = vunpack.c.l.b16 %v246
      %v356 = vunpack.c.h.b16 %v246
      %v357 = vunpack.c.l.b16 %v247
      %v358 = vunpack.c.h.b16 %v247
      %v359 = vunpack.c.l.b16 %v248
      %v360 = vunpack.c.h.b16 %v248
      %v361 = vunpack.c.l.b16 %v249
      %v362 = vunpack.c.h.b16 %v249
      %v363 = vunpack.c.l.b16 %v250
      %v364 = vunpack.c.h.b16 %v250
      %v365 = vunpack.c.l.b16 %v251
      %v366 = vunpack.c.h.b16 %v251
      %v367 = vunpack.c.l.b16 %v252
      %v368 = vunpack.c.h.b16 %v252
      %v369 = vunpack.c.l.b16 %v253
      %v370 = vunpack.c.h.b16 %v253
      %v371 = vunpack.c.l.b16 %v254
      %v372 = vunpack.c.h.b16 %v254
      %v373 = vunpack.c.l.b16 %v255
      %v374 = vunpack.c.h.b16 %v255
      %v375 = vunpack.c.l.b16 %v256
      %v376 = vunpack.c.h.b16 %v256
      %v377 = vunpack.c.l.b16 %v257
      %v378 = vunpack.c.h.b16 %v257
      %v379 = vunpack.c.l.b16 %v258
      %v380 = vunpack.c.h.b16 %v258
      %v381 = vunpack.c.l.b16 %v259
      %v382 = vunpack.c.h.b16 %v259
      %v383 = vunpack.c.l.b16 %v260
      %v384 = vunpack.c.h.b16 %v260
      %v385 = vunpack.c.l.b16 %v261
      %v386 = vunpack.c.h.b16 %v261
      %v387 = vunpack.c.l.b16 %v262
      %v388 = vunpack.c.h.b16 %v262
      %v389 = vunpack.c.l.b16 %v263
      %v390 = vunpack.c.h.b16 %v263
      %v391 = vunpack.c.l.b16 %v264
      %v392 = vunpack.c.h.b16 %v264
      %v393 = vunpack.c.l.b16 %v265
      %v394 = vunpack.c.h.b16 %v265
      %v395 = vunpack.c.l.b16 %v266
      %v396 = vunpack.c.h.b16 %v266
      %v397 = vunpack.c.l.b16 %v267
      %v398 = vunpack.c.h.b16 %v267
      %v399 = vunpack.c.l.b16 %v268
      %v400 = vunpack.c.h.b16 %v268
      %v401 = vunpack.c.l.b16 %v269
      %v402 = vunpack.c.h.b16 %v269
      %v403 = vunpack.c.l.b16 %v270
      %v404 = vunpack.c.h.b16 %v270
      %v405 = vunpack.c.l.b16 %v271
      %v406 = vunpack.c.h.b16 %v271
      %v407 = vpack.c.b16 %v327, %v317
      %v408 = vpack.c.b16 %v328, %v318
      %v409 = vpack.c.b16 %v329, %v319
      %v410 = vpack.c.b16 %v330, %v320
      %v411 = vpack.c.b16 %v331, %v321
      %v412 = vpack.c.b16 %v332, %v322
      %v413 = vpack.c.b16 %v333, %v323
      %v414 = vpack.c.b16 %v334, %v324
      %v415 = vpack.c.b16 %v335, %v325
      %v416 = vpack.c.b16 %v336, %v326
      %v417 = vpack.c.b16 %v347, %v337
      %v418 = vpack.c.b16 %v348, %v338
      %v419 = vpack.c.b16 %v349, %v339
      %v420 = vpack.c.b16 %v350, %v340
      %v421 = vpack.c.b16 %v351, %v341
      %v422 = vpack.c.b16 %v352, %v342
      %v423 = vpack.c.b16 %v353, %v343
      %v424 = vpack.c.b16 %v354, %v344
      %v425 = vpack.c.b16 %v355, %v345
      %v426 = vpack.c.b16 %v356, %v346
      %v427 = vpack.c.b16 %v367, %v357
      %v428 = vpack.c.b16 %v368, %v358
      %v429 = vpack.c.b16 %v369, %v359
      %v430 = vpack.c.b16 %v370, %v360
      %v431 = vpack.c.b16 %v371, %v361
      %v432 = vpack.c.b16 %v372, %v362
      %v433 = vpack.c.b16 %v373, %v363
      %v434 = vpack.c.b16 %v374, %v364
      %v435 = vpack.c.b16 %v375, %v365
      %v436 = vpack.c.b16 %v376, %v366
      %v437 = vpack.c.b16 %v387, %v377
      %v438 = vpack.c.b16 %v388, %v378
      %v439 = vpack.c.b16 %v389, %v379
      %v440 = vpack.c.b16 %v390, %v380
      %v441 = vpack.c.b16 %v391, %v381
      %v442 = vpack.c.b16 %v392, %v382
      %v443 = vpack.c.b16 %v393, %v383
      %v444 = vpack.c.b16 %v394, %v384
      %v445 = vpack.c.b16 %v395, %v385
      %v446 = vpack.c.b16 %v396, %v386
      %v447 = vpack.c.b16 %v397, %v397
      %v448 = vpack.c.b16 %v398, %v398
      %v449 = vpack.c.b16 %v399, %v399
      %v450 = vpack.c.b16 %v400, %v400
      %v451 = vpack.c.b16 %v401, %v401
      %v452 = vpack.c.b16 %v402, %v402
      %v453 = vpack.c.b16 %v403, %v403
      %v454 = vpack.c.b16 %v404, %v404
      %v455 = vpack.c.b16 %v405, %v405
      %v456 = vpack.c.b16 %v406, %v406
      %vm497 = vcmask 588800
      %v499 = vsel %vm497, %v226, 0
      %vm501 = vcmask 1043456
      %v503 = vsel %vm501, %v447, 0
      %v506 = vsel %vm501, %v448, 0
      %v509 = vsel %vm501, %v449, 0
      %v512 = vsel %vm501, %v450, 0
      %v515 = vsel %vm501, %v451, 0
      %v518 = vsel %vm501, %v452, 0
      %v521 = vsel %vm501, %v453, 0
      %v524 = vsel %vm501, %v454, 0
      %v527 = vsel %vm501, %v455, 0
      %v530 = vsel %vm501, %v456, 0
      %532 = vmatprep.subr.bf16.mxu0 0
      %533 = vmatpush1.bf16.msra.mxu0 0
      %534 = vmatprep.subr.bf16.mxu0 0
      %535 = vmatpush1.bf16.msra.mxu0 0
      %536 = vmatprep.subr.bf16.mxu0 0
      %537 = vmatpush1.bf16.msra.mxu0 0
      %538 = vmatprep.subr.bf16.mxu0 %v506
      %539 = vmatpush1.bf16.msra.mxu0 %v503
      %540 = vmatprep.subr.bf16.mxu0 %v438
      %541 = vmatpush1.bf16.msra.mxu0 %v437
      %542 = vmatprep.subr.bf16.mxu0 %v428
      %543 = vmatpush1.bf16.msra.mxu0 %v427
      %544 = vmatprep.subr.bf16.mxu0 %v418
      %545 = vmatpush1.bf16.msra.mxu0 %v417
      %546 = vmatprep.subr.bf16.mxu0 %v408
      %547 = vmatpush1.bf16.msra.mxu0 %v407
      %548 = vmatprep.subr.bf16.mxu0 0
      %549 = vmatpush2.bf16.msra.mxu0 0
      %550 = vmatprep.subr.bf16.mxu0 0
      %551 = vmatpush2.bf16.msra.mxu0 0
      %552 = vmatprep.subr.bf16.mxu0 0
      %553 = vmatpush2.bf16.msra.mxu0 0
      %554 = vmatprep.subr.bf16.mxu0 0
      %555 = vmatpush2.bf16.msra.mxu0 0
      %556 = vmatprep.subr.bf16.mxu0 0
      %557 = vmatpush2.bf16.msra.mxu0 0
      %558 = vmatprep.subr.bf16.mxu0 0
      %559 = vmatpush2.bf16.msra.mxu0 0
      %560 = vmatprep.subr.bf16.mxu0 0
      %561 = vmatpush2.bf16.msra.mxu0 0
      %562 = vmatprep.subr.bf16.mxu0 0
      %563 = vmatpush2.bf16.msra.mxu0 0
      %564 = vmatprep.mubr.bf16.mxu0 0
      %565 = vmatmul.mubr.bf16.gmra.mxu0 %v499
      %v566 = vpop.f32.mrf.mxu0
      %v567 = vadd.f32 0.0, %v566
      %v568 = vpop.f32.mrf.mxu0
      %v569 = vadd.f32 0.0, %v568
      %v570 = vpop.f32.mrf.mxu0
      %v571 = vpop.f32.mrf.mxu0
      %572 = vdwg.mxu0
      %573 = vmatprep.subr.bf16.mxu0 0
      %574 = vmatpush1.bf16.msra.mxu0 0
      %575 = vmatprep.subr.bf16.mxu0 0
      %576 = vmatpush1.bf16.msra.mxu0 0
      %577 = vmatprep.subr.bf16.mxu0 0
      %578 = vmatpush1.bf16.msra.mxu0 0
      %579 = vmatprep.subr.bf16.mxu0 %v512
      %580 = vmatpush1.bf16.msra.mxu0 %v509
      %581 = vmatprep.subr.bf16.mxu0 %v440
      %582 = vmatpush1.bf16.msra.mxu0 %v439
      %583 = vmatprep.subr.bf16.mxu0 %v430
      %584 = vmatpush1.bf16.msra.mxu0 %v429
      %585 = vmatprep.subr.bf16.mxu0 %v420
      %586 = vmatpush1.bf16.msra.mxu0 %v419
      %587 = vmatprep.subr.bf16.mxu0 %v410
      %588 = vmatpush1.bf16.msra.mxu0 %v409
      %589 = vmatprep.subr.bf16.mxu0 0
      %590 = vmatpush2.bf16.msra.mxu0 0
      %591 = vmatprep.subr.bf16.mxu0 0
      %592 = vmatpush2.bf16.msra.mxu0 0
      %593 = vmatprep.subr.bf16.mxu0 0
      %594 = vmatpush2.bf16.msra.mxu0 0
      %595 = vmatprep.subr.bf16.mxu0 0
      %596 = vmatpush2.bf16.msra.mxu0 0
      %597 = vmatprep.subr.bf16.mxu0 0
      %598 = vmatpush2.bf16.msra.mxu0 0
      %599 = vmatprep.subr.bf16.mxu0 0
      %600 = vmatpush2.bf16.msra.mxu0 0
      %601 = vmatprep.subr.bf16.mxu0 0
      %602 = vmatpush2.bf16.msra.mxu0 0
      %603 = vmatprep.subr.bf16.mxu0 0
      %604 = vmatpush2.bf16.msra.mxu0 0
      %605 = vmatprep.mubr.bf16.mxu0 0
      %606 = vmatmul.mubr.bf16.gmra.mxu0 %v499
      %v607 = vpop.f32.mrf.mxu0
      %v608 = vadd.f32 0.0, %v607
      %v609 = vpop.f32.mrf.mxu0
      %v610 = vadd.f32 0.0, %v609
      %v611 = vpop.f32.mrf.mxu0
      %v612 = vpop.f32.mrf.mxu0
      %613 = vdwg.mxu0
      %614 = vmatprep.subr.bf16.mxu0 0
      %615 = vmatpush1.bf16.msra.mxu0 0
      %616 = vmatprep.subr.bf16.mxu0 0
      %617 = vmatpush1.bf16.msra.mxu0 0
      %618 = vmatprep.subr.bf16.mxu0 0
      %619 = vmatpush1.bf16.msra.mxu0 0
      %620 = vmatprep.subr.bf16.mxu0 %v518
      %621 = vmatpush1.bf16.msra.mxu0 %v515
      %622 = vmatprep.subr.bf16.mxu0 %v442
      %623 = vmatpush1.bf16.msra.mxu0 %v441
      %624 = vmatprep.subr.bf16.mxu0 %v432
      %625 = vmatpush1.bf16.msra.mxu0 %v431
      %626 = vmatprep.subr.bf16.mxu0 %v422
      %627 = vmatpush1.bf16.msra.mxu0 %v421
      %628 = vmatprep.subr.bf16.mxu0 %v412
      %629 = vmatpush1.bf16.msra.mxu0 %v411
      %630 = vmatprep.subr.bf16.mxu0 0
      %631 = vmatpush2.bf16.msra.mxu0 0
      %632 = vmatprep.subr.bf16.mxu0 0
      %633 = vmatpush2.bf16.msra.mxu0 0
      %634 = vmatprep.subr.bf16.mxu0 0
      %635 = vmatpush2.bf16.msra.mxu0 0
      %636 = vmatprep.subr.bf16.mxu0 0
      %637 = vmatpush2.bf16.msra.mxu0 0
      %638 = vmatprep.subr.bf16.mxu0 0
      %639 = vmatpush2.bf16.msra.mxu0 0
      %640 = vmatprep.subr.bf16.mxu0 0
      %641 = vmatpush2.bf16.msra.mxu0 0
      %642 = vmatprep.subr.bf16.mxu0 0
      %643 = vmatpush2.bf16.msra.mxu0 0
      %644 = vmatprep.subr.bf16.mxu0 0
      %645 = vmatpush2.bf16.msra.mxu0 0
      %646 = vmatprep.mubr.bf16.mxu0 0
      %647 = vmatmul.mubr.bf16.gmra.mxu0 %v499
      %v648 = vpop.f32.mrf.mxu0
      %v649 = vadd.f32 0.0, %v648
      %v650 = vpop.f32.mrf.mxu0
      %v651 = vadd.f32 0.0, %v650
      %v652 = vpop.f32.mrf.mxu0
      %v653 = vpop.f32.mrf.mxu0
      %654 = vdwg.mxu0
      %655 = vmatprep.subr.bf16.mxu0 0
      %656 = vmatpush1.bf16.msra.mxu0 0
      %657 = vmatprep.subr.bf16.mxu0 0
      %658 = vmatpush1.bf16.msra.mxu0 0
      %659 = vmatprep.subr.bf16.mxu0 0
      %660 = vmatpush1.bf16.msra.mxu0 0
      %661 = vmatprep.subr.bf16.mxu0 %v524
      %662 = vmatpush1.bf16.msra.mxu0 %v521
      %663 = vmatprep.subr.bf16.mxu0 %v444
      %664 = vmatpush1.bf16.msra.mxu0 %v443
      %665 = vmatprep.subr.bf16.mxu0 %v434
      %666 = vmatpush1.bf16.msra.mxu0 %v433
      %667 = vmatprep.subr.bf16.mxu0 %v424
      %668 = vmatpush1.bf16.msra.mxu0 %v423
      %669 = vmatprep.subr.bf16.mxu0 %v414
      %670 = vmatpush1.bf16.msra.mxu0 %v413
      %671 = vmatprep.subr.bf16.mxu0 0
      %672 = vmatpush2.bf16.msra.mxu0 0
      %673 = vmatprep.subr.bf16.mxu0 0
      %674 = vmatpush2.bf16.msra.mxu0 0
      %675 = vmatprep.subr.bf16.mxu0 0
      %676 = vmatpush2.bf16.msra.mxu0 0
      %677 = vmatprep.subr.bf16.mxu0 0
      %678 = vmatpush2.bf16.msra.mxu0 0
      %679 = vmatprep.subr.bf16.mxu0 0
      %680 = vmatpush2.bf16.msra.mxu0 0
      %681 = vmatprep.subr.bf16.mxu0 0
      %682 = vmatpush2.bf16.msra.mxu0 0
      %683 = vmatprep.subr.bf16.mxu0 0
      %684 = vmatpush2.bf16.msra.mxu0 0
      %685 = vmatprep.subr.bf16.mxu0 0
      %686 = vmatpush2.bf16.msra.mxu0 0
      %687 = vmatprep.mubr.bf16.mxu0 0
      %688 = vmatmul.mubr.bf16.gmra.mxu0 %v499
      %v689 = vpop.f32.mrf.mxu0
      %v690 = vadd.f32 0.0, %v689
      %v691 = vpop.f32.mrf.mxu0
      %v692 = vadd.f32 0.0, %v691
      %v693 = vpop.f32.mrf.mxu0
      %v694 = vpop.f32.mrf.mxu0
      %695 = vdwg.mxu0
      %696 = vmatprep.subr.bf16.mxu0 0
      %697 = vmatpush1.bf16.msra.mxu0 0
      %698 = vmatprep.subr.bf16.mxu0 0
      %699 = vmatpush1.bf16.msra.mxu0 0
      %700 = vmatprep.subr.bf16.mxu0 0
      %701 = vmatpush1.bf16.msra.mxu0 0
      %702 = vmatprep.subr.bf16.mxu0 %v530
      %703 = vmatpush1.bf16.msra.mxu0 %v527
      %704 = vmatprep.subr.bf16.mxu0 %v446
      %705 = vmatpush1.bf16.msra.mxu0 %v445
      %706 = vmatprep.subr.bf16.mxu0 %v436
      %707 = vmatpush1.bf16.msra.mxu0 %v435
      %708 = vmatprep.subr.bf16.mxu0 %v426
      %709 = vmatpush1.bf16.msra.mxu0 %v425
      %710 = vmatprep.subr.bf16.mxu0 %v416
      %711 = vmatpush1.bf16.msra.mxu0 %v415
      %712 = vmatprep.subr.bf16.mxu0 0
      %713 = vmatpush2.bf16.msra.mxu0 0
      %714 = vmatprep.subr.bf16.mxu0 0
      %715 = vmatpush2.bf16.msra.mxu0 0
      %716 = vmatprep.subr.bf16.mxu0 0
      %717 = vmatpush2.bf16.msra.mxu0 0
      %718 = vmatprep.subr.bf16.mxu0 0
      %719 = vmatpush2.bf16.msra.mxu0 0
      %720 = vmatprep.subr.bf16.mxu0 0
      %721 = vmatpush2.bf16.msra.mxu0 0
      %722 = vmatprep.subr.bf16.mxu0 0
      %723 = vmatpush2.bf16.msra.mxu0 0
      %724 = vmatprep.subr.bf16.mxu0 0
      %725 = vmatpush2.bf16.msra.mxu0 0
      %726 = vmatprep.subr.bf16.mxu0 0
      %727 = vmatpush2.bf16.msra.mxu0 0
      %728 = vmatprep.mubr.bf16.mxu0 0
      %729 = vmatmul.mubr.bf16.gmra.mxu0 %v499
      %v730 = vpop.f32.mrf.mxu0
      %v731 = vadd.f32 0.0, %v730
      %v732 = vpop.f32.mrf.mxu0
      %v733 = vadd.f32 0.0, %v732
      %v734 = vpop.f32.mrf.mxu0
      %v735 = vpop.f32.mrf.mxu0
      %736 = vdwg.mxu0
      %v737 = vld [vmem:[%s1] sm:$0xff]
      %v738 = vld [vmem:[%s1 + $0x8] sm:$0x3]
      %v741 = vlaneseq
      %v742 = vshrl.u32 %v741, 7
      %v743 = vsub.s32 0, %v742
      %v744 = vrot.slane %v737, %v743
      %v745 = vlaneseq
      %v746 = vshrl.u32 %v745, 7
      %v747 = vsub.s32 1, %v746
      %v748 = vrot.slane %v737, %v747
      %v749 = vlaneseq
      %v750 = vshrl.u32 %v749, 7
      %v751 = vsub.s32 2, %v750
      %v752 = vrot.slane %v737, %v751
      %v753 = vlaneseq
      %v754 = vshrl.u32 %v753, 7
      %v755 = vsub.s32 3, %v754
      %v756 = vrot.slane %v737, %v755
      %v757 = vlaneseq
      %v758 = vshrl.u32 %v757, 7
      %v759 = vsub.s32 4, %v758
      %v760 = vrot.slane %v737, %v759
      %v761 = vlaneseq
      %v762 = vshrl.u32 %v761, 7
      %v763 = vsub.s32 5, %v762
      %v764 = vrot.slane %v737, %v763
      %v765 = vlaneseq
      %v766 = vshrl.u32 %v765, 7
      %v767 = vsub.s32 6, %v766
      %v768 = vrot.slane %v737, %v767
      %v769 = vlaneseq
      %v770 = vshrl.u32 %v769, 7
      %v771 = vsub.s32 7, %v770
      %v772 = vrot.slane %v737, %v771
      %v773 = vlaneseq
      %v774 = vshrl.u32 %v773, 7
      %v775 = vsub.s32 0, %v774
      %v776 = vrot.slane %v738, %v775
      %v777 = vlaneseq
      %v778 = vshrl.u32 %v777, 7
      %v779 = vsub.s32 1, %v778
      %v780 = vrot.slane %v738, %v779
      %v791 = vmul.f32 %v567, %v744
      %v792 = vmul.f32 %v569, %v748
      %v793 = vmul.f32 %v608, %v752
      %v794 = vmul.f32 %v610, %v756
      %v795 = vmul.f32 %v649, %v760
      %v796 = vmul.f32 %v651, %v764
      %v797 = vmul.f32 %v690, %v768
      %v798 = vmul.f32 %v692, %v772
      %v799 = vmul.f32 %v731, %v776
      %v800 = vmul.f32 %v733, %v780
      %v801 = vsel %vm501, %v791, 0.0
      %v802 = vsel %vm501, %v792, 0.0
      %v803 = vadd.f32 %v801, %v802
      %v804 = vsel %vm501, %v793, 0.0
      %v805 = vadd.f32 %v803, %v804
      %v806 = vsel %vm501, %v794, 0.0
      %v807 = vadd.f32 %v805, %v806
      %v808 = vsel %vm501, %v795, 0.0
      %v809 = vadd.f32 %v807, %v808
      %v810 = vsel %vm501, %v796, 0.0
      %v811 = vadd.f32 %v809, %v810
      %v812 = vsel %vm501, %v797, 0.0
      %v813 = vadd.f32 %v811, %v812
      %v814 = vsel %vm501, %v798, 0.0
      %v815 = vadd.f32 %v813, %v814
      %v816 = vsel %vm501, %v799, 0.0
      %v817 = vadd.f32 %v815, %v816
      %v818 = vsel %vm501, %v800, 0.0
      %v819 = vadd.f32 %v817, %v818
      %820 = vadd.xlane.f32.xlu0 %v819
      %v821 = vpop.xlane.xlu0 %820
      %v822 = vmul.f32 %v567, %v567
      %v823 = vmul.f32 %v569, %v569
      %v824 = vmul.f32 %v608, %v608
      %v825 = vmul.f32 %v610, %v610
      %v826 = vmul.f32 %v649, %v649
      %v827 = vmul.f32 %v651, %v651
      %v828 = vmul.f32 %v690, %v690
      %v829 = vmul.f32 %v692, %v692
      %v830 = vmul.f32 %v731, %v731
      %v831 = vmul.f32 %v733, %v733
      %v832 = vmul.f32 %v822, %v744
      %v833 = vmul.f32 %v823, %v748
      %v834 = vmul.f32 %v824, %v752
      %v835 = vmul.f32 %v825, %v756
      %v836 = vmul.f32 %v826, %v760
      %v837 = vmul.f32 %v827, %v764
      %v838 = vmul.f32 %v828, %v768
      %v839 = vmul.f32 %v829, %v772
      %v840 = vmul.f32 %v830, %v776
      %v841 = vmul.f32 %v831, %v780
      %v842 = vsel %vm501, %v832, 0.0
      %v843 = vsel %vm501, %v833, 0.0
      %v844 = vadd.f32 %v842, %v843
      %v845 = vsel %vm501, %v834, 0.0
      %v846 = vadd.f32 %v844, %v845
      %v847 = vsel %vm501, %v835, 0.0
      %v848 = vadd.f32 %v846, %v847
      %v849 = vsel %vm501, %v836, 0.0
      %v850 = vadd.f32 %v848, %v849
      %v851 = vsel %vm501, %v837, 0.0
      %v852 = vadd.f32 %v850, %v851
      %v853 = vsel %vm501, %v838, 0.0
      %v854 = vadd.f32 %v852, %v853
      %v855 = vsel %vm501, %v839, 0.0
      %v856 = vadd.f32 %v854, %v855
      %v857 = vsel %vm501, %v840, 0.0
      %v858 = vadd.f32 %v856, %v857
      %v859 = vsel %vm501, %v841, 0.0
      %v860 = vadd.f32 %v858, %v859
      %861 = vadd.xlane.f32.xlu0 %v860
      %v862 = vpop.xlane.xlu0 %861
      %v863 = vmul.f32 %v821, 0.0009765625
      %v864 = vmul.f32 %v862, 0.0009765625
      %v865 = vmul.f32 %v863, %v863
      %v866 = vsub.f32 %v864, %v865
      %v867 = vmax.f32 %v866, 0.0
      %v868 = vsub.f32 %v567, %v863
      %v869 = vsub.f32 %v569, %v863
      %v870 = vsub.f32 %v608, %v863
      %v871 = vsub.f32 %v610, %v863
      %v872 = vsub.f32 %v649, %v863
      %v873 = vsub.f32 %v651, %v863
      %v874 = vsub.f32 %v690, %v863
      %v875 = vsub.f32 %v692, %v863
      %v876 = vsub.f32 %v731, %v863
      %v877 = vsub.f32 %v733, %v863
      %v878 = vadd.f32 %v867, 1e-05
      %v879 = vrsqrt.pop %v878
      %v880 = vmul.f32 %v868, %v879
      %v881 = vmul.f32 %v869, %v879
      %v882 = vmul.f32 %v870, %v879
      %v883 = vmul.f32 %v871, %v879
      %v884 = vmul.f32 %v872, %v879
      %v885 = vmul.f32 %v873, %v879
      %v886 = vmul.f32 %v874, %v879
      %v887 = vmul.f32 %v875, %v879
      %v888 = vmul.f32 %v876, %v879
      %v889 = vmul.f32 %v877, %v879
      %v890 = vmax.f32 %v880, 0.0
      %v891 = vmax.f32 %v881, 0.0
      %v892 = vmax.f32 %v882, 0.0
      %v893 = vmax.f32 %v883, 0.0
      %v894 = vmax.f32 %v884, 0.0
      %v895 = vmax.f32 %v885, 0.0
      %v896 = vmax.f32 %v886, 0.0
      %v897 = vmax.f32 %v887, 0.0
      %v898 = vmax.f32 %v888, 0.0
      %v899 = vmax.f32 %v889, 0.0
      %v900 = vpack.c.bf16 %v890, %v890
      %v901 = vpack.c.bf16 %v891, %v891
      %v902 = vpack.c.bf16 %v892, %v892
      %v903 = vpack.c.bf16 %v893, %v893
      %v904 = vpack.c.bf16 %v894, %v894
      %v905 = vpack.c.bf16 %v895, %v895
      %v906 = vpack.c.bf16 %v896, %v896
      %v907 = vpack.c.bf16 %v897, %v897
      %v908 = vpack.c.bf16 %v898, %v898
      %v909 = vpack.c.bf16 %v899, %v899
      %v910 = vld [vmem:[%s3] sm:$0x3]
      %s911 = scalar_lea.vmem %s3, 2
      %v912 = vld [vmem:[%s911] sm:$0x3]
      %923 = vrot.lane.b32.xlu0 %v900, 127
      %v924 = vpop.permute.xlu0 %923
      %925 = vrot.lane.b32.xlu0 %v901, 127
      %v926 = vpop.permute.xlu0 %925
      %927 = vrot.lane.b32.xlu0 %v902, 127
      %v928 = vpop.permute.xlu0 %927
      %929 = vrot.lane.b32.xlu0 %v903, 127
      %v930 = vpop.permute.xlu0 %929
      %931 = vrot.lane.b32.xlu0 %v904, 127
      %v932 = vpop.permute.xlu0 %931
      %933 = vrot.lane.b32.xlu0 %v905, 127
      %v934 = vpop.permute.xlu0 %933
      %935 = vrot.lane.b32.xlu0 %v906, 127
      %v936 = vpop.permute.xlu0 %935
      %937 = vrot.lane.b32.xlu0 %v907, 127
      %v938 = vpop.permute.xlu0 %937
      %939 = vrot.lane.b32.xlu0 %v908, 127
      %v940 = vpop.permute.xlu0 %939
      %941 = vrot.lane.b32.xlu0 %v909, 127
      %v942 = vpop.permute.xlu0 %941
      %vm943 = vcmask 1039360
      %v944 = vsel %vm943, %v924, %v926
      %v945 = vsel %vm943, %v926, %v928
      %v946 = vsel %vm943, %v928, %v930
      %v947 = vsel %vm943, %v930, %v932
      %v948 = vsel %vm943, %v932, %v934
      %v949 = vsel %vm943, %v934, %v936
      %v950 = vsel %vm943, %v936, %v938
      %v951 = vsel %vm943, %v938, %v940
      %v952 = vsel %vm943, %v940, %v942
      %vm953 = vcmask 31744
      %v955 = vsel %vm953, %v912, 0
      %vm957 = vcmask 1041408
      %v959 = vsel %vm957, %v944, 0
      %v962 = vsel %vm957, %v945, 0
      %v965 = vsel %vm957, %v946, 0
      %v968 = vsel %vm957, %v947, 0
      %v971 = vsel %vm957, %v948, 0
      %v974 = vsel %vm957, %v949, 0
      %v977 = vsel %vm957, %v950, 0
      %v980 = vsel %vm957, %v951, 0
      %v983 = vsel %vm957, %v952, 0
      %985 = vmatprep.subr.bf16.mxu0 0
      %986 = vmatpush1.bf16.msra.mxu0 0
      %987 = vmatprep.subr.bf16.mxu0 0
      %988 = vmatpush1.bf16.msra.mxu0 0
      %989 = vmatprep.subr.bf16.mxu0 0
      %990 = vmatpush1.bf16.msra.mxu0 0
      %991 = vmatprep.subr.bf16.mxu0 0
      %992 = vmatpush1.bf16.msra.mxu0 0
      %993 = vmatprep.subr.bf16.mxu0 0
      %994 = vmatpush1.bf16.msra.mxu0 0
      %995 = vmatprep.subr.bf16.mxu0 0
      %996 = vmatpush1.bf16.msra.mxu0 0
      %997 = vmatprep.subr.bf16.mxu0 0
      %998 = vmatpush1.bf16.msra.mxu0 0
      %999 = vmatprep.subr.bf16.mxu0 %v962
      %1000 = vmatpush1.bf16.msra.mxu0 %v959
      %1001 = vmatprep.subr.bf16.mxu0 0
      %1002 = vmatpush2.bf16.msra.mxu0 0
      %1003 = vmatprep.subr.bf16.mxu0 0
      %1004 = vmatpush2.bf16.msra.mxu0 0
      %1005 = vmatprep.subr.bf16.mxu0 0
      %1006 = vmatpush2.bf16.msra.mxu0 0
      %1007 = vmatprep.subr.bf16.mxu0 0
      %1008 = vmatpush2.bf16.msra.mxu0 0
      %1009 = vmatprep.subr.bf16.mxu0 0
      %1010 = vmatpush2.bf16.msra.mxu0 0
      %1011 = vmatprep.subr.bf16.mxu0 0
      %1012 = vmatpush2.bf16.msra.mxu0 0
      %1013 = vmatprep.subr.bf16.mxu0 0
      %1014 = vmatpush2.bf16.msra.mxu0 0
      %1015 = vmatprep.subr.bf16.mxu0 0
      %1016 = vmatpush2.bf16.msra.mxu0 0
      %1017 = vmatprep.mubr.bf16.mxu0 0
      %1018 = vmatmul.mubr.bf16.gmra.mxu0 %v955
      %v1019 = vpop.f32.mrf.mxu0
      %v1020 = vadd.f32 0.0, %v1019
      %v1021 = vpop.f32.mrf.mxu0
      %v1022 = vadd.f32 0.0, %v1021
      %v1023 = vpop.f32.mrf.mxu0
      %v1024 = vpop.f32.mrf.mxu0
      %1025 = vdwg.mxu0
      %1026 = vmatprep.subr.bf16.mxu0 0
      %1027 = vmatpush1.bf16.msra.mxu0 0
      %1028 = vmatprep.subr.bf16.mxu0 0
      %1029 = vmatpush1.bf16.msra.mxu0 0
      %1030 = vmatprep.subr.bf16.mxu0 0
      %1031 = vmatpush1.bf16.msra.mxu0 0
      %1032 = vmatprep.subr.bf16.mxu0 0
      %1033 = vmatpush1.bf16.msra.mxu0 0
      %1034 = vmatprep.subr.bf16.mxu0 0
      %1035 = vmatpush1.bf16.msra.mxu0 0
      %1036 = vmatprep.subr.bf16.mxu0 0
      %1037 = vmatpush1.bf16.msra.mxu0 0
      %1038 = vmatprep.subr.bf16.mxu0 0
      %1039 = vmatpush1.bf16.msra.mxu0 0
      %1040 = vmatprep.subr.bf16.mxu0 %v968
      %1041 = vmatpush1.bf16.msra.mxu0 %v965
      %1042 = vmatprep.subr.bf16.mxu0 0
      %1043 = vmatpush2.bf16.msra.mxu0 0
      %1044 = vmatprep.subr.bf16.mxu0 0
      %1045 = vmatpush2.bf16.msra.mxu0 0
      %1046 = vmatprep.subr.bf16.mxu0 0
      %1047 = vmatpush2.bf16.msra.mxu0 0
      %1048 = vmatprep.subr.bf16.mxu0 0
      %1049 = vmatpush2.bf16.msra.mxu0 0
      %1050 = vmatprep.subr.bf16.mxu0 0
      %1051 = vmatpush2.bf16.msra.mxu0 0
      %1052 = vmatprep.subr.bf16.mxu0 0
      %1053 = vmatpush2.bf16.msra.mxu0 0
      %1054 = vmatprep.subr.bf16.mxu0 0
      %1055 = vmatpush2.bf16.msra.mxu0 0
      %1056 = vmatprep.subr.bf16.mxu0 0
      %1057 = vmatpush2.bf16.msra.mxu0 0
      %1058 = vmatprep.mubr.bf16.mxu0 0
      %1059 = vmatmul.mubr.bf16.gmra.mxu0 %v955
      %v1060 = vpop.f32.mrf.mxu0
      %v1061 = vadd.f32 0.0, %v1060
      %v1062 = vpop.f32.mrf.mxu0
      %v1063 = vadd.f32 0.0, %v1062
      %v1064 = vpop.f32.mrf.mxu0
      %v1065 = vpop.f32.mrf.mxu0
      %1066 = vdwg.mxu0
      %1067 = vmatprep.subr.bf16.mxu0 0
      %1068 = vmatpush1.bf16.msra.mxu0 0
      %1069 = vmatprep.subr.bf16.mxu0 0
      %1070 = vmatpush1.bf16.msra.mxu0 0
      %1071 = vmatprep.subr.bf16.mxu0 0
      %1072 = vmatpush1.bf16.msra.mxu0 0
      %1073 = vmatprep.subr.bf16.mxu0 0
      %1074 = vmatpush1.bf16.msra.mxu0 0
      %1075 = vmatprep.subr.bf16.mxu0 0
      %1076 = vmatpush1.bf16.msra.mxu0 0
      %1077 = vmatprep.subr.bf16.mxu0 0
      %1078 = vmatpush1.bf16.msra.mxu0 0
      %1079 = vmatprep.subr.bf16.mxu0 0
      %1080 = vmatpush1.bf16.msra.mxu0 0
      %1081 = vmatprep.subr.bf16.mxu0 %v974
      %1082 = vmatpush1.bf16.msra.mxu0 %v971
      %1083 = vmatprep.subr.bf16.mxu0 0
      %1084 = vmatpush2.bf16.msra.mxu0 0
      %1085 = vmatprep.subr.bf16.mxu0 0
      %1086 = vmatpush2.bf16.msra.mxu0 0
      %1087 = vmatprep.subr.bf16.mxu0 0
      %1088 = vmatpush2.bf16.msra.mxu0 0
      %1089 = vmatprep.subr.bf16.mxu0 0
      %1090 = vmatpush2.bf16.msra.mxu0 0
      %1091 = vmatprep.subr.bf16.mxu0 0
      %1092 = vmatpush2.bf16.msra.mxu0 0
      %1093 = vmatprep.subr.bf16.mxu0 0
      %1094 = vmatpush2.bf16.msra.mxu0 0
      %1095 = vmatprep.subr.bf16.mxu0 0
      %1096 = vmatpush2.bf16.msra.mxu0 0
      %1097 = vmatprep.subr.bf16.mxu0 0
      %1098 = vmatpush2.bf16.msra.mxu0 0
      %1099 = vmatprep.mubr.bf16.mxu0 0
      %1100 = vmatmul.mubr.bf16.gmra.mxu0 %v955
      %v1101 = vpop.f32.mrf.mxu0
      %v1102 = vadd.f32 0.0, %v1101
      %v1103 = vpop.f32.mrf.mxu0
      %v1104 = vadd.f32 0.0, %v1103
      %v1105 = vpop.f32.mrf.mxu0
      %v1106 = vpop.f32.mrf.mxu0
      %1107 = vdwg.mxu0
      %1108 = vmatprep.subr.bf16.mxu0 0
      %1109 = vmatpush1.bf16.msra.mxu0 0
      %1110 = vmatprep.subr.bf16.mxu0 0
      %1111 = vmatpush1.bf16.msra.mxu0 0
      %1112 = vmatprep.subr.bf16.mxu0 0
      %1113 = vmatpush1.bf16.msra.mxu0 0
      %1114 = vmatprep.subr.bf16.mxu0 0
      %1115 = vmatpush1.bf16.msra.mxu0 0
      %1116 = vmatprep.subr.bf16.mxu0 0
      %1117 = vmatpush1.bf16.msra.mxu0 0
      %1118 = vmatprep.subr.bf16.mxu0 0
      %1119 = vmatpush1.bf16.msra.mxu0 0
      %1120 = vmatprep.subr.bf16.mxu0 0
      %1121 = vmatpush1.bf16.msra.mxu0 0
      %1122 = vmatprep.subr.bf16.mxu0 %v980
      %1123 = vmatpush1.bf16.msra.mxu0 %v977
      %1124 = vmatprep.subr.bf16.mxu0 0
      %1125 = vmatpush2.bf16.msra.mxu0 0
      %1126 = vmatprep.subr.bf16.mxu0 0
      %1127 = vmatpush2.bf16.msra.mxu0 0
      %1128 = vmatprep.subr.bf16.mxu0 0
      %1129 = vmatpush2.bf16.msra.mxu0 0
      %1130 = vmatprep.subr.bf16.mxu0 0
      %1131 = vmatpush2.bf16.msra.mxu0 0
      %1132 = vmatprep.subr.bf16.mxu0 0
      %1133 = vmatpush2.bf16.msra.mxu0 0
      %1134 = vmatprep.subr.bf16.mxu0 0
      %1135 = vmatpush2.bf16.msra.mxu0 0
      %1136 = vmatprep.subr.bf16.mxu0 0
      %1137 = vmatpush2.bf16.msra.mxu0 0
      %1138 = vmatprep.subr.bf16.mxu0 0
      %1139 = vmatpush2.bf16.msra.mxu0 0
      %1140 = vmatprep.mubr.bf16.mxu0 0
      %1141 = vmatmul.mubr.bf16.gmra.mxu0 %v955
      %v1142 = vpop.f32.mrf.mxu0
      %v1143 = vadd.f32 0.0, %v1142
      %v1144 = vpop.f32.mrf.mxu0
      %v1145 = vadd.f32 0.0, %v1144
      %v1146 = vpop.f32.mrf.mxu0
      %v1147 = vpop.f32.mrf.mxu0
      %1148 = vdwg.mxu0
      %1149 = vmatprep.subr.bf16.mxu0 0
      %1150 = vmatpush1.bf16.msra.mxu0 0
      %1151 = vmatprep.subr.bf16.mxu0 0
      %1152 = vmatpush1.bf16.msra.mxu0 0
      %1153 = vmatprep.subr.bf16.mxu0 0
      %1154 = vmatpush1.bf16.msra.mxu0 0
      %1155 = vmatprep.subr.bf16.mxu0 0
      %1156 = vmatpush1.bf16.msra.mxu0 0
      %1157 = vmatprep.subr.bf16.mxu0 0
      %1158 = vmatpush1.bf16.msra.mxu0 0
      %1159 = vmatprep.subr.bf16.mxu0 0
      %1160 = vmatpush1.bf16.msra.mxu0 0
      %1161 = vmatprep.subr.bf16.mxu0 0
      %1162 = vmatpush1.bf16.msra.mxu0 0
      %1163 = vmatprep.subr.bf16.mxu0 0
      %1164 = vmatpush1.bf16.msra.mxu0 %v983
      %1165 = vmatprep.subr.bf16.mxu0 0
      %1166 = vmatpush2.bf16.msra.mxu0 0
      %1167 = vmatprep.subr.bf16.mxu0 0
      %1168 = vmatpush2.bf16.msra.mxu0 0
      %1169 = vmatprep.subr.bf16.mxu0 0
      %1170 = vmatpush2.bf16.msra.mxu0 0
      %1171 = vmatprep.subr.bf16.mxu0 0
      %1172 = vmatpush2.bf16.msra.mxu0 0
      %1173 = vmatprep.subr.bf16.mxu0 0
      %1174 = vmatpush2.bf16.msra.mxu0 0
      %1175 = vmatprep.subr.bf16.mxu0 0
      %1176 = vmatpush2.bf16.msra.mxu0 0
      %1177 = vmatprep.subr.bf16.mxu0 0
      %1178 = vmatpush2.bf16.msra.mxu0 0
      %1179 = vmatprep.subr.bf16.mxu0 0
      %1180 = vmatpush2.bf16.msra.mxu0 0
      %1181 = vmatprep.mubr.bf16.mxu0 0
      %1182 = vmatmul.mubr.bf16.gmra.mxu0 %v955
      %v1183 = vpop.f32.mrf.mxu0
      %v1184 = vadd.f32 0.0, %v1183
      %v1185 = vpop.f32.mrf.mxu0
      %v1186 = vpop.f32.mrf.mxu0
      %v1187 = vpop.f32.mrf.mxu0
      %1188 = vdwg.mxu0
      %v1190 = vsel %vm953, %v910, 0
      %v1193 = vsel %vm957, %v900, 0
      %v1196 = vsel %vm957, %v901, 0
      %v1199 = vsel %vm957, %v902, 0
      %v1202 = vsel %vm957, %v903, 0
      %v1205 = vsel %vm957, %v904, 0
      %v1208 = vsel %vm957, %v905, 0
      %v1211 = vsel %vm957, %v906, 0
      %v1214 = vsel %vm957, %v907, 0
      %v1217 = vsel %vm957, %v908, 0
      %1219 = vmatprep.subr.bf16.mxu0 0
      %1220 = vmatpush1.bf16.msra.mxu0 0
      %1221 = vmatprep.subr.bf16.mxu0 0
      %1222 = vmatpush1.bf16.msra.mxu0 0
      %1223 = vmatprep.subr.bf16.mxu0 0
      %1224 = vmatpush1.bf16.msra.mxu0 0
      %1225 = vmatprep.subr.bf16.mxu0 0
      %1226 = vmatpush1.bf16.msra.mxu0 0
      %1227 = vmatprep.subr.bf16.mxu0 0
      %1228 = vmatpush1.bf16.msra.mxu0 0
      %1229 = vmatprep.subr.bf16.mxu0 0
      %1230 = vmatpush1.bf16.msra.mxu0 0
      %1231 = vmatprep.subr.bf16.mxu0 0
      %1232 = vmatpush1.bf16.msra.mxu0 0
      %1233 = vmatprep.subr.bf16.mxu0 %v1196
      %1234 = vmatpush1.bf16.msra.mxu0 %v1193
      %1235 = vmatprep.subr.bf16.mxu0 0
      %1236 = vmatpush2.bf16.msra.mxu0 0
      %1237 = vmatprep.subr.bf16.mxu0 0
      %1238 = vmatpush2.bf16.msra.mxu0 0
      %1239 = vmatprep.subr.bf16.mxu0 0
      %1240 = vmatpush2.bf16.msra.mxu0 0
      %1241 = vmatprep.subr.bf16.mxu0 0
      %1242 = vmatpush2.bf16.msra.mxu0 0
      %1243 = vmatprep.subr.bf16.mxu0 0
      %1244 = vmatpush2.bf16.msra.mxu0 0
      %1245 = vmatprep.subr.bf16.mxu0 0
      %1246 = vmatpush2.bf16.msra.mxu0 0
      %1247 = vmatprep.subr.bf16.mxu0 0
      %1248 = vmatpush2.bf16.msra.mxu0 0
      %1249 = vmatprep.subr.bf16.mxu0 0
      %1250 = vmatpush2.bf16.msra.mxu0 0
      %1251 = vmatprep.mubr.bf16.mxu0 0
      %1252 = vmatmul.mubr.bf16.gmra.mxu0 %v1190
      %v1253 = vpop.f32.mrf.mxu0
      %v1254 = vadd.f32 %v1020, %v1253
      %v1255 = vpop.f32.mrf.mxu0
      %v1256 = vadd.f32 %v1022, %v1255
      %v1257 = vpop.f32.mrf.mxu0
      %v1258 = vpop.f32.mrf.mxu0
      %1259 = vdwg.mxu0
      %1260 = vmatprep.subr.bf16.mxu0 0
      %1261 = vmatpush1.bf16.msra.mxu0 0
      %1262 = vmatprep.subr.bf16.mxu0 0
      %1263 = vmatpush1.bf16.msra.mxu0 0
      %1264 = vmatprep.subr.bf16.mxu0 0
      %1265 = vmatpush1.bf16.msra.mxu0 0
      %1266 = vmatprep.subr.bf16.mxu0 0
      %1267 = vmatpush1.bf16.msra.mxu0 0
      %1268 = vmatprep.subr.bf16.mxu0 0
      %1269 = vmatpush1.bf16.msra.mxu0 0
      %1270 = vmatprep.subr.bf16.mxu0 0
      %1271 = vmatpush1.bf16.msra.mxu0 0
      %1272 = vmatprep.subr.bf16.mxu0 0
      %1273 = vmatpush1.bf16.msra.mxu0 0
      %1274 = vmatprep.subr.bf16.mxu0 %v1202
      %1275 = vmatpush1.bf16.msra.mxu0 %v1199
      %1276 = vmatprep.subr.bf16.mxu0 0
      %1277 = vmatpush2.bf16.msra.mxu0 0
      %1278 = vmatprep.subr.bf16.mxu0 0
      %1279 = vmatpush2.bf16.msra.mxu0 0
      %1280 = vmatprep.subr.bf16.mxu0 0
      %1281 = vmatpush2.bf16.msra.mxu0 0
      %1282 = vmatprep.subr.bf16.mxu0 0
      %1283 = vmatpush2.bf16.msra.mxu0 0
      %1284 = vmatprep.subr.bf16.mxu0 0
      %1285 = vmatpush2.bf16.msra.mxu0 0
      %1286 = vmatprep.subr.bf16.mxu0 0
      %1287 = vmatpush2.bf16.msra.mxu0 0
      %1288 = vmatprep.subr.bf16.mxu0 0
      %1289 = vmatpush2.bf16.msra.mxu0 0
      %1290 = vmatprep.subr.bf16.mxu0 0
      %1291 = vmatpush2.bf16.msra.mxu0 0
      %1292 = vmatprep.mubr.bf16.mxu0 0
      %1293 = vmatmul.mubr.bf16.gmra.mxu0 %v1190
      %v1294 = vpop.f32.mrf.mxu0
      %v1295 = vadd.f32 %v1061, %v1294
      %v1296 = vpop.f32.mrf.mxu0
      %v1297 = vadd.f32 %v1063, %v1296
      %v1298 = vpop.f32.mrf.mxu0
      %v1299 = vpop.f32.mrf.mxu0
      %1300 = vdwg.mxu0
      %1301 = vmatprep.subr.bf16.mxu0 0
      %1302 = vmatpush1.bf16.msra.mxu0 0
      %1303 = vmatprep.subr.bf16.mxu0 0
      %1304 = vmatpush1.bf16.msra.mxu0 0
      %1305 = vmatprep.subr.bf16.mxu0 0
      %1306 = vmatpush1.bf16.msra.mxu0 0
      %1307 = vmatprep.subr.bf16.mxu0 0
      %1308 = vmatpush1.bf16.msra.mxu0 0
      %1309 = vmatprep.subr.bf16.mxu0 0
      %1310 = vmatpush1.bf16.msra.mxu0 0
      %1311 = vmatprep.subr.bf16.mxu0 0
      %1312 = vmatpush1.bf16.msra.mxu0 0
      %1313 = vmatprep.subr.bf16.mxu0 0
      %1314 = vmatpush1.bf16.msra.mxu0 0
      %1315 = vmatprep.subr.bf16.mxu0 %v1208
      %1316 = vmatpush1.bf16.msra.mxu0 %v1205
      %1317 = vmatprep.subr.bf16.mxu0 0
      %1318 = vmatpush2.bf16.msra.mxu0 0
      %1319 = vmatprep.subr.bf16.mxu0 0
      %1320 = vmatpush2.bf16.msra.mxu0 0
      %1321 = vmatprep.subr.bf16.mxu0 0
      %1322 = vmatpush2.bf16.msra.mxu0 0
      %1323 = vmatprep.subr.bf16.mxu0 0
      %1324 = vmatpush2.bf16.msra.mxu0 0
      %1325 = vmatprep.subr.bf16.mxu0 0
      %1326 = vmatpush2.bf16.msra.mxu0 0
      %1327 = vmatprep.subr.bf16.mxu0 0
      %1328 = vmatpush2.bf16.msra.mxu0 0
      %1329 = vmatprep.subr.bf16.mxu0 0
      %1330 = vmatpush2.bf16.msra.mxu0 0
      %1331 = vmatprep.subr.bf16.mxu0 0
      %1332 = vmatpush2.bf16.msra.mxu0 0
      %1333 = vmatprep.mubr.bf16.mxu0 0
      %1334 = vmatmul.mubr.bf16.gmra.mxu0 %v1190
      %v1335 = vpop.f32.mrf.mxu0
      %v1336 = vadd.f32 %v1102, %v1335
      %v1337 = vpop.f32.mrf.mxu0
      %v1338 = vadd.f32 %v1104, %v1337
      %v1339 = vpop.f32.mrf.mxu0
      %v1340 = vpop.f32.mrf.mxu0
      %1341 = vdwg.mxu0
      %1342 = vmatprep.subr.bf16.mxu0 0
      %1343 = vmatpush1.bf16.msra.mxu0 0
      %1344 = vmatprep.subr.bf16.mxu0 0
      %1345 = vmatpush1.bf16.msra.mxu0 0
      %1346 = vmatprep.subr.bf16.mxu0 0
      %1347 = vmatpush1.bf16.msra.mxu0 0
      %1348 = vmatprep.subr.bf16.mxu0 0
      %1349 = vmatpush1.bf16.msra.mxu0 0
      %1350 = vmatprep.subr.bf16.mxu0 0
      %1351 = vmatpush1.bf16.msra.mxu0 0
      %1352 = vmatprep.subr.bf16.mxu0 0
      %1353 = vmatpush1.bf16.msra.mxu0 0
      %1354 = vmatprep.subr.bf16.mxu0 0
      %1355 = vmatpush1.bf16.msra.mxu0 0
      %1356 = vmatprep.subr.bf16.mxu0 %v1214
      %1357 = vmatpush1.bf16.msra.mxu0 %v1211
      %1358 = vmatprep.subr.bf16.mxu0 0
      %1359 = vmatpush2.bf16.msra.mxu0 0
      %1360 = vmatprep.subr.bf16.mxu0 0
      %1361 = vmatpush2.bf16.msra.mxu0 0
      %1362 = vmatprep.subr.bf16.mxu0 0
      %1363 = vmatpush2.bf16.msra.mxu0 0
      %1364 = vmatprep.subr.bf16.mxu0 0
      %1365 = vmatpush2.bf16.msra.mxu0 0
      %1366 = vmatprep.subr.bf16.mxu0 0
      %1367 = vmatpush2.bf16.msra.mxu0 0
      %1368 = vmatprep.subr.bf16.mxu0 0
      %1369 = vmatpush2.bf16.msra.mxu0 0
      %1370 = vmatprep.subr.bf16.mxu0 0
      %1371 = vmatpush2.bf16.msra.mxu0 0
      %1372 = vmatprep.subr.bf16.mxu0 0
      %1373 = vmatpush2.bf16.msra.mxu0 0
      %1374 = vmatprep.mubr.bf16.mxu0 0
      %1375 = vmatmul.mubr.bf16.gmra.mxu0 %v1190
      %v1376 = vpop.f32.mrf.mxu0
      %v1377 = vadd.f32 %v1143, %v1376
      %v1378 = vpop.f32.mrf.mxu0
      %v1379 = vadd.f32 %v1145, %v1378
      %v1380 = vpop.f32.mrf.mxu0
      %v1381 = vpop.f32.mrf.mxu0
      %1382 = vdwg.mxu0
      %1383 = vmatprep.subr.bf16.mxu0 0
      %1384 = vmatpush1.bf16.msra.mxu0 0
      %1385 = vmatprep.subr.bf16.mxu0 0
      %1386 = vmatpush1.bf16.msra.mxu0 0
      %1387 = vmatprep.subr.bf16.mxu0 0
      %1388 = vmatpush1.bf16.msra.mxu0 0
      %1389 = vmatprep.subr.bf16.mxu0 0
      %1390 = vmatpush1.bf16.msra.mxu0 0
      %1391 = vmatprep.subr.bf16.mxu0 0
      %1392 = vmatpush1.bf16.msra.mxu0 0
      %1393 = vmatprep.subr.bf16.mxu0 0
      %1394 = vmatpush1.bf16.msra.mxu0 0
      %1395 = vmatprep.subr.bf16.mxu0 0
      %1396 = vmatpush1.bf16.msra.mxu0 0
      %1397 = vmatprep.subr.bf16.mxu0 0
      %1398 = vmatpush1.bf16.msra.mxu0 %v1217
      %1399 = vmatprep.subr.bf16.mxu0 0
      %1400 = vmatpush2.bf16.msra.mxu0 0
      %1401 = vmatprep.subr.bf16.mxu0 0
      %1402 = vmatpush2.bf16.msra.mxu0 0
      %1403 = vmatprep.subr.bf16.mxu0 0
      %1404 = vmatpush2.bf16.msra.mxu0 0
      %1405 = vmatprep.subr.bf16.mxu0 0
      %1406 = vmatpush2.bf16.msra.mxu0 0
      %1407 = vmatprep.subr.bf16.mxu0 0
      %1408 = vmatpush2.bf16.msra.mxu0 0
      %1409 = vmatprep.subr.bf16.mxu0 0
      %1410 = vmatpush2.bf16.msra.mxu0 0
      %1411 = vmatprep.subr.bf16.mxu0 0
      %1412 = vmatpush2.bf16.msra.mxu0 0
      %1413 = vmatprep.subr.bf16.mxu0 0
      %1414 = vmatpush2.bf16.msra.mxu0 0
      %1415 = vmatprep.mubr.bf16.mxu0 0
      %1416 = vmatmul.mubr.bf16.gmra.mxu0 %v1190
      %v1417 = vpop.f32.mrf.mxu0
      %v1418 = vadd.f32 %v1184, %v1417
      %v1419 = vpop.f32.mrf.mxu0
      %v1420 = vpop.f32.mrf.mxu0
      %v1421 = vpop.f32.mrf.mxu0
      %1422 = vdwg.mxu0
      %s1423 = scalar_lea.vmem %s3, 4
      %v1424 = vld [vmem:[%s1423] sm:$0x3]
      %1425 = vrot.lane.b32.xlu0 %v900, 126
      %v1426 = vpop.permute.xlu0 %1425
      %1427 = vrot.lane.b32.xlu0 %v901, 126
      %v1428 = vpop.permute.xlu0 %1427
      %1429 = vrot.lane.b32.xlu0 %v902, 126
      %v1430 = vpop.permute.xlu0 %1429
      %1431 = vrot.lane.b32.xlu0 %v903, 126
      %v1432 = vpop.permute.xlu0 %1431
      %1433 = vrot.lane.b32.xlu0 %v904, 126
      %v1434 = vpop.permute.xlu0 %1433
      %1435 = vrot.lane.b32.xlu0 %v905, 126
      %v1436 = vpop.permute.xlu0 %1435
      %1437 = vrot.lane.b32.xlu0 %v906, 126
      %v1438 = vpop.permute.xlu0 %1437
      %1439 = vrot.lane.b32.xlu0 %v907, 126
      %v1440 = vpop.permute.xlu0 %1439
      %1441 = vrot.lane.b32.xlu0 %v908, 126
      %v1442 = vpop.permute.xlu0 %1441
      %1443 = vrot.lane.b32.xlu0 %v909, 126
      %v1444 = vpop.permute.xlu0 %1443
      %vm1445 = vcmask 1031168
      %v1446 = vsel %vm1445, %v1426, %v1428
      %v1447 = vsel %vm1445, %v1428, %v1430
      %v1448 = vsel %vm1445, %v1430, %v1432
      %v1449 = vsel %vm1445, %v1432, %v1434
      %v1450 = vsel %vm1445, %v1434, %v1436
      %v1451 = vsel %vm1445, %v1436, %v1438
      %v1452 = vsel %vm1445, %v1438, %v1440
      %v1453 = vsel %vm1445, %v1440, %v1442
      %v1454 = vsel %vm1445, %v1442, %v1444
      %v1456 = vsel %vm953, %v1424, 0
      %v1459 = vsel %vm957, %v1446, 0
      %v1462 = vsel %vm957, %v1447, 0
      %v1465 = vsel %vm957, %v1448, 0
      %v1468 = vsel %vm957, %v1449, 0
      %v1471 = vsel %vm957, %v1450, 0
      %v1474 = vsel %vm957, %v1451, 0
      %v1477 = vsel %vm957, %v1452, 0
      %v1480 = vsel %vm957, %v1453, 0
      %v1483 = vsel %vm957, %v1454, 0
      %1485 = vmatprep.subr.bf16.mxu0 0
      %1486 = vmatpush1.bf16.msra.mxu0 0
      %1487 = vmatprep.subr.bf16.mxu0 0
      %1488 = vmatpush1.bf16.msra.mxu0 0
      %1489 = vmatprep.subr.bf16.mxu0 0
      %1490 = vmatpush1.bf16.msra.mxu0 0
      %1491 = vmatprep.subr.bf16.mxu0 0
      %1492 = vmatpush1.bf16.msra.mxu0 0
      %1493 = vmatprep.subr.bf16.mxu0 0
      %1494 = vmatpush1.bf16.msra.mxu0 0
      %1495 = vmatprep.subr.bf16.mxu0 0
      %1496 = vmatpush1.bf16.msra.mxu0 0
      %1497 = vmatprep.subr.bf16.mxu0 0
      %1498 = vmatpush1.bf16.msra.mxu0 0
      %1499 = vmatprep.subr.bf16.mxu0 %v1462
      %1500 = vmatpush1.bf16.msra.mxu0 %v1459
      %1501 = vmatprep.subr.bf16.mxu0 0
      %1502 = vmatpush2.bf16.msra.mxu0 0
      %1503 = vmatprep.subr.bf16.mxu0 0
      %1504 = vmatpush2.bf16.msra.mxu0 0
      %1505 = vmatprep.subr.bf16.mxu0 0
      %1506 = vmatpush2.bf16.msra.mxu0 0
      %1507 = vmatprep.subr.bf16.mxu0 0
      %1508 = vmatpush2.bf16.msra.mxu0 0
      %1509 = vmatprep.subr.bf16.mxu0 0
      %1510 = vmatpush2.bf16.msra.mxu0 0
      %1511 = vmatprep.subr.bf16.mxu0 0
      %1512 = vmatpush2.bf16.msra.mxu0 0
      %1513 = vmatprep.subr.bf16.mxu0 0
      %1514 = vmatpush2.bf16.msra.mxu0 0
      %1515 = vmatprep.subr.bf16.mxu0 0
      %1516 = vmatpush2.bf16.msra.mxu0 0
      %1517 = vmatprep.mubr.bf16.mxu0 0
      %1518 = vmatmul.mubr.bf16.gmra.mxu0 %v1456
      %v1519 = vpop.f32.mrf.mxu0
      %v1520 = vadd.f32 0.0, %v1519
      %v1521 = vpop.f32.mrf.mxu0
      %v1522 = vadd.f32 0.0, %v1521
      %v1523 = vpop.f32.mrf.mxu0
      %v1524 = vpop.f32.mrf.mxu0
      %1525 = vdwg.mxu0
      %1526 = vmatprep.subr.bf16.mxu0 0
      %1527 = vmatpush1.bf16.msra.mxu0 0
      %1528 = vmatprep.subr.bf16.mxu0 0
      %1529 = vmatpush1.bf16.msra.mxu0 0
      %1530 = vmatprep.subr.bf16.mxu0 0
      %1531 = vmatpush1.bf16.msra.mxu0 0
      %1532 = vmatprep.subr.bf16.mxu0 0
      %1533 = vmatpush1.bf16.msra.mxu0 0
      %1534 = vmatprep.subr.bf16.mxu0 0
      %1535 = vmatpush1.bf16.msra.mxu0 0
      %1536 = vmatprep.subr.bf16.mxu0 0
      %1537 = vmatpush1.bf16.msra.mxu0 0
      %1538 = vmatprep.subr.bf16.mxu0 0
      %1539 = vmatpush1.bf16.msra.mxu0 0
      %1540 = vmatprep.subr.bf16.mxu0 %v1468
      %1541 = vmatpush1.bf16.msra.mxu0 %v1465
      %1542 = vmatprep.subr.bf16.mxu0 0
      %1543 = vmatpush2.bf16.msra.mxu0 0
      %1544 = vmatprep.subr.bf16.mxu0 0
      %1545 = vmatpush2.bf16.msra.mxu0 0
      %1546 = vmatprep.subr.bf16.mxu0 0
      %1547 = vmatpush2.bf16.msra.mxu0 0
      %1548 = vmatprep.subr.bf16.mxu0 0
      %1549 = vmatpush2.bf16.msra.mxu0 0
      %1550 = vmatprep.subr.bf16.mxu0 0
      %1551 = vmatpush2.bf16.msra.mxu0 0
      %1552 = vmatprep.subr.bf16.mxu0 0
      %1553 = vmatpush2.bf16.msra.mxu0 0
      %1554 = vmatprep.subr.bf16.mxu0 0
      %1555 = vmatpush2.bf16.msra.mxu0 0
      %1556 = vmatprep.subr.bf16.mxu0 0
      %1557 = vmatpush2.bf16.msra.mxu0 0
      %1558 = vmatprep.mubr.bf16.mxu0 0
      %1559 = vmatmul.mubr.bf16.gmra.mxu0 %v1456
      %v1560 = vpop.f32.mrf.mxu0
      %v1561 = vadd.f32 0.0, %v1560
      %v1562 = vpop.f32.mrf.mxu0
      %v1563 = vadd.f32 0.0, %v1562
      %v1564 = vpop.f32.mrf.mxu0
      %v1565 = vpop.f32.mrf.mxu0
      %1566 = vdwg.mxu0
      %1567 = vmatprep.subr.bf16.mxu0 0
      %1568 = vmatpush1.bf16.msra.mxu0 0
      %1569 = vmatprep.subr.bf16.mxu0 0
      %1570 = vmatpush1.bf16.msra.mxu0 0
      %1571 = vmatprep.subr.bf16.mxu0 0
      %1572 = vmatpush1.bf16.msra.mxu0 0
      %1573 = vmatprep.subr.bf16.mxu0 0
      %1574 = vmatpush1.bf16.msra.mxu0 0
      %1575 = vmatprep.subr.bf16.mxu0 0
      %1576 = vmatpush1.bf16.msra.mxu0 0
      %1577 = vmatprep.subr.bf16.mxu0 0
      %1578 = vmatpush1.bf16.msra.mxu0 0
      %1579 = vmatprep.subr.bf16.mxu0 0
      %1580 = vmatpush1.bf16.msra.mxu0 0
      %1581 = vmatprep.subr.bf16.mxu0 %v1474
      %1582 = vmatpush1.bf16.msra.mxu0 %v1471
      %1583 = vmatprep.subr.bf16.mxu0 0
      %1584 = vmatpush2.bf16.msra.mxu0 0
      %1585 = vmatprep.subr.bf16.mxu0 0
      %1586 = vmatpush2.bf16.msra.mxu0 0
      %1587 = vmatprep.subr.bf16.mxu0 0
      %1588 = vmatpush2.bf16.msra.mxu0 0
      %1589 = vmatprep.subr.bf16.mxu0 0
      %1590 = vmatpush2.bf16.msra.mxu0 0
      %1591 = vmatprep.subr.bf16.mxu0 0
      %1592 = vmatpush2.bf16.msra.mxu0 0
      %1593 = vmatprep.subr.bf16.mxu0 0
      %1594 = vmatpush2.bf16.msra.mxu0 0
      %1595 = vmatprep.subr.bf16.mxu0 0
      %1596 = vmatpush2.bf16.msra.mxu0 0
      %1597 = vmatprep.subr.bf16.mxu0 0
      %1598 = vmatpush2.bf16.msra.mxu0 0
      %1599 = vmatprep.mubr.bf16.mxu0 0
      %1600 = vmatmul.mubr.bf16.gmra.mxu0 %v1456
      %v1601 = vpop.f32.mrf.mxu0
      %v1602 = vadd.f32 0.0, %v1601
      %v1603 = vpop.f32.mrf.mxu0
      %v1604 = vadd.f32 0.0, %v1603
      %v1605 = vpop.f32.mrf.mxu0
      %v1606 = vpop.f32.mrf.mxu0
      %1607 = vdwg.mxu0
      %1608 = vmatprep.subr.bf16.mxu0 0
      %1609 = vmatpush1.bf16.msra.mxu0 0
      %1610 = vmatprep.subr.bf16.mxu0 0
      %1611 = vmatpush1.bf16.msra.mxu0 0
      %1612 = vmatprep.subr.bf16.mxu0 0
      %1613 = vmatpush1.bf16.msra.mxu0 0
      %1614 = vmatprep.subr.bf16.mxu0 0
      %1615 = vmatpush1.bf16.msra.mxu0 0
      %1616 = vmatprep.subr.bf16.mxu0 0
      %1617 = vmatpush1.bf16.msra.mxu0 0
      %1618 = vmatprep.subr.bf16.mxu0 0
      %1619 = vmatpush1.bf16.msra.mxu0 0
      %1620 = vmatprep.subr.bf16.mxu0 0
      %1621 = vmatpush1.bf16.msra.mxu0 0
      %1622 = vmatprep.subr.bf16.mxu0 %v1480
      %1623 = vmatpush1.bf16.msra.mxu0 %v1477
      %1624 = vmatprep.subr.bf16.mxu0 0
      %1625 = vmatpush2.bf16.msra.mxu0 0
      %1626 = vmatprep.subr.bf16.mxu0 0
      %1627 = vmatpush2.bf16.msra.mxu0 0
      %1628 = vmatprep.subr.bf16.mxu0 0
      %1629 = vmatpush2.bf16.msra.mxu0 0
      %1630 = vmatprep.subr.bf16.mxu0 0
      %1631 = vmatpush2.bf16.msra.mxu0 0
      %1632 = vmatprep.subr.bf16.mxu0 0
      %1633 = vmatpush2.bf16.msra.mxu0 0
      %1634 = vmatprep.subr.bf16.mxu0 0
      %1635 = vmatpush2.bf16.msra.mxu0 0
      %1636 = vmatprep.subr.bf16.mxu0 0
      %1637 = vmatpush2.bf16.msra.mxu0 0
      %1638 = vmatprep.subr.bf16.mxu0 0
      %1639 = vmatpush2.bf16.msra.mxu0 0
      %1640 = vmatprep.mubr.bf16.mxu0 0
      %1641 = vmatmul.mubr.bf16.gmra.mxu0 %v1456
      %v1642 = vpop.f32.mrf.mxu0
      %v1643 = vadd.f32 0.0, %v1642
      %v1644 = vpop.f32.mrf.mxu0
      %v1645 = vadd.f32 0.0, %v1644
      %v1646 = vpop.f32.mrf.mxu0
      %v1647 = vpop.f32.mrf.mxu0
      %1648 = vdwg.mxu0
      %1649 = vmatprep.subr.bf16.mxu0 0
      %1650 = vmatpush1.bf16.msra.mxu0 0
      %1651 = vmatprep.subr.bf16.mxu0 0
      %1652 = vmatpush1.bf16.msra.mxu0 0
      %1653 = vmatprep.subr.bf16.mxu0 0
      %1654 = vmatpush1.bf16.msra.mxu0 0
      %1655 = vmatprep.subr.bf16.mxu0 0
      %1656 = vmatpush1.bf16.msra.mxu0 0
      %1657 = vmatprep.subr.bf16.mxu0 0
      %1658 = vmatpush1.bf16.msra.mxu0 0
      %1659 = vmatprep.subr.bf16.mxu0 0
      %1660 = vmatpush1.bf16.msra.mxu0 0
      %1661 = vmatprep.subr.bf16.mxu0 0
      %1662 = vmatpush1.bf16.msra.mxu0 0
      %1663 = vmatprep.subr.bf16.mxu0 0
      %1664 = vmatpush1.bf16.msra.mxu0 %v1483
      %1665 = vmatprep.subr.bf16.mxu0 0
      %1666 = vmatpush2.bf16.msra.mxu0 0
      %1667 = vmatprep.subr.bf16.mxu0 0
      %1668 = vmatpush2.bf16.msra.mxu0 0
      %1669 = vmatprep.subr.bf16.mxu0 0
      %1670 = vmatpush2.bf16.msra.mxu0 0
      %1671 = vmatprep.subr.bf16.mxu0 0
      %1672 = vmatpush2.bf16.msra.mxu0 0
      %1673 = vmatprep.subr.bf16.mxu0 0
      %1674 = vmatpush2.bf16.msra.mxu0 0
      %1675 = vmatprep.subr.bf16.mxu0 0
      %1676 = vmatpush2.bf16.msra.mxu0 0
      %1677 = vmatprep.subr.bf16.mxu0 0
      %1678 = vmatpush2.bf16.msra.mxu0 0
      %1679 = vmatprep.subr.bf16.mxu0 0
      %1680 = vmatpush2.bf16.msra.mxu0 0
      %1681 = vmatprep.mubr.bf16.mxu0 0
      %1682 = vmatmul.mubr.bf16.gmra.mxu0 %v1456
      %v1683 = vpop.f32.mrf.mxu0
      %v1684 = vadd.f32 0.0, %v1683
      %v1685 = vpop.f32.mrf.mxu0
      %v1686 = vpop.f32.mrf.mxu0
      %v1687 = vpop.f32.mrf.mxu0
      %1688 = vdwg.mxu0
      %v1689 = vadd.f32 %v1254, %v1520
      %v1690 = vadd.f32 %v1256, %v1522
      %v1691 = vadd.f32 %v1295, %v1561
      %v1692 = vadd.f32 %v1297, %v1563
      %v1693 = vadd.f32 %v1336, %v1602
      %v1694 = vadd.f32 %v1338, %v1604
      %v1695 = vadd.f32 %v1377, %v1643
      %v1696 = vadd.f32 %v1379, %v1645
      %v1697 = vadd.f32 %v1418, %v1684
      %s1698 = scalar_lea.vmem %s3, 6
      %v1699 = vld [vmem:[%s1698] sm:$0x3]
      %1700 = vrot.lane.b32.xlu0 %v900, 92
      %v1701 = vpop.permute.xlu0 %1700
      %1702 = vrot.lane.b32.xlu0 %v901, 92
      %v1703 = vpop.permute.xlu0 %1702
      %1704 = vrot.lane.b32.xlu0 %v902, 92
      %v1705 = vpop.permute.xlu0 %1704
      %1706 = vrot.lane.b32.xlu0 %v903, 92
      %v1707 = vpop.permute.xlu0 %1706
      %1708 = vrot.lane.b32.xlu0 %v904, 92
      %v1709 = vpop.permute.xlu0 %1708
      %1710 = vrot.lane.b32.xlu0 %v905, 92
      %v1711 = vpop.permute.xlu0 %1710
      %1712 = vrot.lane.b32.xlu0 %v906, 92
      %v1713 = vpop.permute.xlu0 %1712
      %1714 = vrot.lane.b32.xlu0 %v907, 92
      %v1715 = vpop.permute.xlu0 %1714
      %1716 = vrot.lane.b32.xlu0 %v908, 92
      %v1717 = vpop.permute.xlu0 %1716
      %1718 = vrot.lane.b32.xlu0 %v909, 92
      %v1719 = vpop.permute.xlu0 %1718
      %vm1720 = vcmask 752640
      %v1721 = vsel %vm1720, %v1701, %v1703
      %v1722 = vsel %vm1720, %v1703, %v1705
      %v1723 = vsel %vm1720, %v1705, %v1707
      %v1724 = vsel %vm1720, %v1707, %v1709
      %v1725 = vsel %vm1720, %v1709, %v1711
      %v1726 = vsel %vm1720, %v1711, %v1713
      %v1727 = vsel %vm1720, %v1713, %v1715
      %v1728 = vsel %vm1720, %v1715, %v1717
      %v1729 = vsel %vm1720, %v1717, %v1719
      %v1731 = vsel %vm953, %v1699, 0
      %v1734 = vsel %vm957, %v1721, 0
      %v1737 = vsel %vm957, %v1722, 0
      %v1740 = vsel %vm957, %v1723, 0
      %v1743 = vsel %vm957, %v1724, 0
      %v1746 = vsel %vm957, %v1725, 0
      %v1749 = vsel %vm957, %v1726, 0
      %v1752 = vsel %vm957, %v1727, 0
      %v1755 = vsel %vm957, %v1728, 0
      %v1758 = vsel %vm957, %v1729, 0
      %1760 = vmatprep.subr.bf16.mxu0 0
      %1761 = vmatpush1.bf16.msra.mxu0 0
      %1762 = vmatprep.subr.bf16.mxu0 0
      %1763 = vmatpush1.bf16.msra.mxu0 0
      %1764 = vmatprep.subr.bf16.mxu0 0
      %1765 = vmatpush1.bf16.msra.mxu0 0
      %1766 = vmatprep.subr.bf16.mxu0 0
      %1767 = vmatpush1.bf16.msra.mxu0 0
      %1768 = vmatprep.subr.bf16.mxu0 0
      %1769 = vmatpush1.bf16.msra.mxu0 0
      %1770 = vmatprep.subr.bf16.mxu0 0
      %1771 = vmatpush1.bf16.msra.mxu0 0
      %1772 = vmatprep.subr.bf16.mxu0 0
      %1773 = vmatpush1.bf16.msra.mxu0 0
      %1774 = vmatprep.subr.bf16.mxu0 %v1737
      %1775 = vmatpush1.bf16.msra.mxu0 %v1734
      %1776 = vmatprep.subr.bf16.mxu0 0
      %1777 = vmatpush2.bf16.msra.mxu0 0
      %1778 = vmatprep.subr.bf16.mxu0 0
      %1779 = vmatpush2.bf16.msra.mxu0 0
      %1780 = vmatprep.subr.bf16.mxu0 0
      %1781 = vmatpush2.bf16.msra.mxu0 0
      %1782 = vmatprep.subr.bf16.mxu0 0
      %1783 = vmatpush2.bf16.msra.mxu0 0
      %1784 = vmatprep.subr.bf16.mxu0 0
      %1785 = vmatpush2.bf16.msra.mxu0 0
      %1786 = vmatprep.subr.bf16.mxu0 0
      %1787 = vmatpush2.bf16.msra.mxu0 0
      %1788 = vmatprep.subr.bf16.mxu0 0
      %1789 = vmatpush2.bf16.msra.mxu0 0
      %1790 = vmatprep.subr.bf16.mxu0 0
      %1791 = vmatpush2.bf16.msra.mxu0 0
      %1792 = vmatprep.mubr.bf16.mxu0 0
      %1793 = vmatmul.mubr.bf16.gmra.mxu0 %v1731
      %v1794 = vpop.f32.mrf.mxu0
      %v1795 = vadd.f32 0.0, %v1794
      %v1796 = vpop.f32.mrf.mxu0
      %v1797 = vadd.f32 0.0, %v1796
      %v1798 = vpop.f32.mrf.mxu0
      %v1799 = vpop.f32.mrf.mxu0
      %1800 = vdwg.mxu0
      %1801 = vmatprep.subr.bf16.mxu0 0
      %1802 = vmatpush1.bf16.msra.mxu0 0
      %1803 = vmatprep.subr.bf16.mxu0 0
      %1804 = vmatpush1.bf16.msra.mxu0 0
      %1805 = vmatprep.subr.bf16.mxu0 0
      %1806 = vmatpush1.bf16.msra.mxu0 0
      %1807 = vmatprep.subr.bf16.mxu0 0
      %1808 = vmatpush1.bf16.msra.mxu0 0
      %1809 = vmatprep.subr.bf16.mxu0 0
      %1810 = vmatpush1.bf16.msra.mxu0 0
      %1811 = vmatprep.subr.bf16.mxu0 0
      %1812 = vmatpush1.bf16.msra.mxu0 0
      %1813 = vmatprep.subr.bf16.mxu0 0
      %1814 = vmatpush1.bf16.msra.mxu0 0
      %1815 = vmatprep.subr.bf16.mxu0 %v1743
      %1816 = vmatpush1.bf16.msra.mxu0 %v1740
      %1817 = vmatprep.subr.bf16.mxu0 0
      %1818 = vmatpush2.bf16.msra.mxu0 0
      %1819 = vmatprep.subr.bf16.mxu0 0
      %1820 = vmatpush2.bf16.msra.mxu0 0
      %1821 = vmatprep.subr.bf16.mxu0 0
      %1822 = vmatpush2.bf16.msra.mxu0 0
      %1823 = vmatprep.subr.bf16.mxu0 0
      %1824 = vmatpush2.bf16.msra.mxu0 0
      %1825 = vmatprep.subr.bf16.mxu0 0
      %1826 = vmatpush2.bf16.msra.mxu0 0
      %1827 = vmatprep.subr.bf16.mxu0 0
      %1828 = vmatpush2.bf16.msra.mxu0 0
      %1829 = vmatprep.subr.bf16.mxu0 0
      %1830 = vmatpush2.bf16.msra.mxu0 0
      %1831 = vmatprep.subr.bf16.mxu0 0
      %1832 = vmatpush2.bf16.msra.mxu0 0
      %1833 = vmatprep.mubr.bf16.mxu0 0
      %1834 = vmatmul.mubr.bf16.gmra.mxu0 %v1731
      %v1835 = vpop.f32.mrf.mxu0
      %v1836 = vadd.f32 0.0, %v1835
      %v1837 = vpop.f32.mrf.mxu0
      %v1838 = vadd.f32 0.0, %v1837
      %v1839 = vpop.f32.mrf.mxu0
      %v1840 = vpop.f32.mrf.mxu0
      %1841 = vdwg.mxu0
      %1842 = vmatprep.subr.bf16.mxu0 0
      %1843 = vmatpush1.bf16.msra.mxu0 0
      %1844 = vmatprep.subr.bf16.mxu0 0
      %1845 = vmatpush1.bf16.msra.mxu0 0
      %1846 = vmatprep.subr.bf16.mxu0 0
      %1847 = vmatpush1.bf16.msra.mxu0 0
      %1848 = vmatprep.subr.bf16.mxu0 0
      %1849 = vmatpush1.bf16.msra.mxu0 0
      %1850 = vmatprep.subr.bf16.mxu0 0
      %1851 = vmatpush1.bf16.msra.mxu0 0
      %1852 = vmatprep.subr.bf16.mxu0 0
      %1853 = vmatpush1.bf16.msra.mxu0 0
      %1854 = vmatprep.subr.bf16.mxu0 0
      %1855 = vmatpush1.bf16.msra.mxu0 0
      %1856 = vmatprep.subr.bf16.mxu0 %v1749
      %1857 = vmatpush1.bf16.msra.mxu0 %v1746
      %1858 = vmatprep.subr.bf16.mxu0 0
      %1859 = vmatpush2.bf16.msra.mxu0 0
      %1860 = vmatprep.subr.bf16.mxu0 0
      %1861 = vmatpush2.bf16.msra.mxu0 0
      %1862 = vmatprep.subr.bf16.mxu0 0
      %1863 = vmatpush2.bf16.msra.mxu0 0
      %1864 = vmatprep.subr.bf16.mxu0 0
      %1865 = vmatpush2.bf16.msra.mxu0 0
      %1866 = vmatprep.subr.bf16.mxu0 0
      %1867 = vmatpush2.bf16.msra.mxu0 0
      %1868 = vmatprep.subr.bf16.mxu0 0
      %1869 = vmatpush2.bf16.msra.mxu0 0
      %1870 = vmatprep.subr.bf16.mxu0 0
      %1871 = vmatpush2.bf16.msra.mxu0 0
      %1872 = vmatprep.subr.bf16.mxu0 0
      %1873 = vmatpush2.bf16.msra.mxu0 0
      %1874 = vmatprep.mubr.bf16.mxu0 0
      %1875 = vmatmul.mubr.bf16.gmra.mxu0 %v1731
      %v1876 = vpop.f32.mrf.mxu0
      %v1877 = vadd.f32 0.0, %v1876
      %v1878 = vpop.f32.mrf.mxu0
      %v1879 = vadd.f32 0.0, %v1878
      %v1880 = vpop.f32.mrf.mxu0
      %v1881 = vpop.f32.mrf.mxu0
      %1882 = vdwg.mxu0
      %1883 = vmatprep.subr.bf16.mxu0 0
      %1884 = vmatpush1.bf16.msra.mxu0 0
      %1885 = vmatprep.subr.bf16.mxu0 0
      %1886 = vmatpush1.bf16.msra.mxu0 0
      %1887 = vmatprep.subr.bf16.mxu0 0
      %1888 = vmatpush1.bf16.msra.mxu0 0
      %1889 = vmatprep.subr.bf16.mxu0 0
      %1890 = vmatpush1.bf16.msra.mxu0 0
      %1891 = vmatprep.subr.bf16.mxu0 0
      %1892 = vmatpush1.bf16.msra.mxu0 0
      %1893 = vmatprep.subr.bf16.mxu0 0
      %1894 = vmatpush1.bf16.msra.mxu0 0
      %1895 = vmatprep.subr.bf16.mxu0 0
      %1896 = vmatpush1.bf16.msra.mxu0 0
      %1897 = vmatprep.subr.bf16.mxu0 %v1755
      %1898 = vmatpush1.bf16.msra.mxu0 %v1752
      %1899 = vmatprep.subr.bf16.mxu0 0
      %1900 = vmatpush2.bf16.msra.mxu0 0
      %1901 = vmatprep.subr.bf16.mxu0 0
      %1902 = vmatpush2.bf16.msra.mxu0 0
      %1903 = vmatprep.subr.bf16.mxu0 0
      %1904 = vmatpush2.bf16.msra.mxu0 0
      %1905 = vmatprep.subr.bf16.mxu0 0
      %1906 = vmatpush2.bf16.msra.mxu0 0
      %1907 = vmatprep.subr.bf16.mxu0 0
      %1908 = vmatpush2.bf16.msra.mxu0 0
      %1909 = vmatprep.subr.bf16.mxu0 0
      %1910 = vmatpush2.bf16.msra.mxu0 0
      %1911 = vmatprep.subr.bf16.mxu0 0
      %1912 = vmatpush2.bf16.msra.mxu0 0
      %1913 = vmatprep.subr.bf16.mxu0 0
      %1914 = vmatpush2.bf16.msra.mxu0 0
      %1915 = vmatprep.mubr.bf16.mxu0 0
      %1916 = vmatmul.mubr.bf16.gmra.mxu0 %v1731
      %v1917 = vpop.f32.mrf.mxu0
      %v1918 = vadd.f32 0.0, %v1917
      %v1919 = vpop.f32.mrf.mxu0
      %v1920 = vadd.f32 0.0, %v1919
      %v1921 = vpop.f32.mrf.mxu0
      %v1922 = vpop.f32.mrf.mxu0
      %1923 = vdwg.mxu0
      %1924 = vmatprep.subr.bf16.mxu0 0
      %1925 = vmatpush1.bf16.msra.mxu0 0
      %1926 = vmatprep.subr.bf16.mxu0 0
      %1927 = vmatpush1.bf16.msra.mxu0 0
      %1928 = vmatprep.subr.bf16.mxu0 0
      %1929 = vmatpush1.bf16.msra.mxu0 0
      %1930 = vmatprep.subr.bf16.mxu0 0
      %1931 = vmatpush1.bf16.msra.mxu0 0
      %1932 = vmatprep.subr.bf16.mxu0 0
      %1933 = vmatpush1.bf16.msra.mxu0 0
      %1934 = vmatprep.subr.bf16.mxu0 0
      %1935 = vmatpush1.bf16.msra.mxu0 0
      %1936 = vmatprep.subr.bf16.mxu0 0
      %1937 = vmatpush1.bf16.msra.mxu0 0
      %1938 = vmatprep.subr.bf16.mxu0 0
      %1939 = vmatpush1.bf16.msra.mxu0 %v1758
      %1940 = vmatprep.subr.bf16.mxu0 0
      %1941 = vmatpush2.bf16.msra.mxu0 0
      %1942 = vmatprep.subr.bf16.mxu0 0
      %1943 = vmatpush2.bf16.msra.mxu0 0
      %1944 = vmatprep.subr.bf16.mxu0 0
      %1945 = vmatpush2.bf16.msra.mxu0 0
      %1946 = vmatprep.subr.bf16.mxu0 0
      %1947 = vmatpush2.bf16.msra.mxu0 0
      %1948 = vmatprep.subr.bf16.mxu0 0
      %1949 = vmatpush2.bf16.msra.mxu0 0
      %1950 = vmatprep.subr.bf16.mxu0 0
      %1951 = vmatpush2.bf16.msra.mxu0 0
      %1952 = vmatprep.subr.bf16.mxu0 0
      %1953 = vmatpush2.bf16.msra.mxu0 0
      %1954 = vmatprep.subr.bf16.mxu0 0
      %1955 = vmatpush2.bf16.msra.mxu0 0
      %1956 = vmatprep.mubr.bf16.mxu0 0
      %1957 = vmatmul.mubr.bf16.gmra.mxu0 %v1731
      %v1958 = vpop.f32.mrf.mxu0
      %v1959 = vadd.f32 0.0, %v1958
      %v1960 = vpop.f32.mrf.mxu0
      %v1961 = vpop.f32.mrf.mxu0
      %v1962 = vpop.f32.mrf.mxu0
      %1963 = vdwg.mxu0
      %v1964 = vadd.f32 %v1689, %v1795
      %v1965 = vadd.f32 %v1690, %v1797
      %v1966 = vadd.f32 %v1691, %v1836
      %v1967 = vadd.f32 %v1692, %v1838
      %v1968 = vadd.f32 %v1693, %v1877
      %v1969 = vadd.f32 %v1694, %v1879
      %v1970 = vadd.f32 %v1695, %v1918
      %v1971 = vadd.f32 %v1696, %v1920
      %v1972 = vadd.f32 %v1697, %v1959
      %s1973 = scalar_lea.vmem %s3, 8
      %v1974 = vld [vmem:[%s1973] sm:$0x3]
      %1975 = vrot.lane.b32.xlu0 %v900, 91
      %v1976 = vpop.permute.xlu0 %1975
      %1977 = vrot.lane.b32.xlu0 %v901, 91
      %v1978 = vpop.permute.xlu0 %1977
      %1979 = vrot.lane.b32.xlu0 %v902, 91
      %v1980 = vpop.permute.xlu0 %1979
      %1981 = vrot.lane.b32.xlu0 %v903, 91
      %v1982 = vpop.permute.xlu0 %1981
      %1983 = vrot.lane.b32.xlu0 %v904, 91
      %v1984 = vpop.permute.xlu0 %1983
      %1985 = vrot.lane.b32.xlu0 %v905, 91
      %v1986 = vpop.permute.xlu0 %1985
      %1987 = vrot.lane.b32.xlu0 %v906, 91
      %v1988 = vpop.permute.xlu0 %1987
      %1989 = vrot.lane.b32.xlu0 %v907, 91
      %v1990 = vpop.permute.xlu0 %1989
      %1991 = vrot.lane.b32.xlu0 %v908, 91
      %v1992 = vpop.permute.xlu0 %1991
      %1993 = vrot.lane.b32.xlu0 %v909, 91
      %v1994 = vpop.permute.xlu0 %1993
      %vm1995 = vcmask 744448
      %v1996 = vsel %vm1995, %v1976, %v1978
      %v1997 = vsel %vm1995, %v1978, %v1980
      %v1998 = vsel %vm1995, %v1980, %v1982
      %v1999 = vsel %vm1995, %v1982, %v1984
      %v2000 = vsel %vm1995, %v1984, %v1986
      %v2001 = vsel %vm1995, %v1986, %v1988
      %v2002 = vsel %vm1995, %v1988, %v1990
      %v2003 = vsel %vm1995, %v1990, %v1992
      %v2004 = vsel %vm1995, %v1992, %v1994
      %v2006 = vsel %vm953, %v1974, 0
      %v2009 = vsel %vm957, %v1996, 0
      %v2012 = vsel %vm957, %v1997, 0
      %v2015 = vsel %vm957, %v1998, 0
      %v2018 = vsel %vm957, %v1999, 0
      %v2021 = vsel %vm957, %v2000, 0
      %v2024 = vsel %vm957, %v2001, 0
      %v2027 = vsel %vm957, %v2002, 0
      %v2030 = vsel %vm957, %v2003, 0
      %v2033 = vsel %vm957, %v2004, 0
      %2035 = vmatprep.subr.bf16.mxu0 0
      %2036 = vmatpush1.bf16.msra.mxu0 0
      %2037 = vmatprep.subr.bf16.mxu0 0
      %2038 = vmatpush1.bf16.msra.mxu0 0
      %2039 = vmatprep.subr.bf16.mxu0 0
      %2040 = vmatpush1.bf16.msra.mxu0 0
      %2041 = vmatprep.subr.bf16.mxu0 0
      %2042 = vmatpush1.bf16.msra.mxu0 0
      %2043 = vmatprep.subr.bf16.mxu0 0
      %2044 = vmatpush1.bf16.msra.mxu0 0
      %2045 = vmatprep.subr.bf16.mxu0 0
      %2046 = vmatpush1.bf16.msra.mxu0 0
      %2047 = vmatprep.subr.bf16.mxu0 0
      %2048 = vmatpush1.bf16.msra.mxu0 0
      %2049 = vmatprep.subr.bf16.mxu0 %v2012
      %2050 = vmatpush1.bf16.msra.mxu0 %v2009
      %2051 = vmatprep.subr.bf16.mxu0 0
      %2052 = vmatpush2.bf16.msra.mxu0 0
      %2053 = vmatprep.subr.bf16.mxu0 0
      %2054 = vmatpush2.bf16.msra.mxu0 0
      %2055 = vmatprep.subr.bf16.mxu0 0
      %2056 = vmatpush2.bf16.msra.mxu0 0
      %2057 = vmatprep.subr.bf16.mxu0 0
      %2058 = vmatpush2.bf16.msra.mxu0 0
      %2059 = vmatprep.subr.bf16.mxu0 0
      %2060 = vmatpush2.bf16.msra.mxu0 0
      %2061 = vmatprep.subr.bf16.mxu0 0
      %2062 = vmatpush2.bf16.msra.mxu0 0
      %2063 = vmatprep.subr.bf16.mxu0 0
      %2064 = vmatpush2.bf16.msra.mxu0 0
      %2065 = vmatprep.subr.bf16.mxu0 0
      %2066 = vmatpush2.bf16.msra.mxu0 0
      %2067 = vmatprep.mubr.bf16.mxu0 0
      %2068 = vmatmul.mubr.bf16.gmra.mxu0 %v2006
      %v2069 = vpop.f32.mrf.mxu0
      %v2070 = vadd.f32 0.0, %v2069
      %v2071 = vpop.f32.mrf.mxu0
      %v2072 = vadd.f32 0.0, %v2071
      %v2073 = vpop.f32.mrf.mxu0
      %v2074 = vpop.f32.mrf.mxu0
      %2075 = vdwg.mxu0
      %2076 = vmatprep.subr.bf16.mxu0 0
      %2077 = vmatpush1.bf16.msra.mxu0 0
      %2078 = vmatprep.subr.bf16.mxu0 0
      %2079 = vmatpush1.bf16.msra.mxu0 0
      %2080 = vmatprep.subr.bf16.mxu0 0
      %2081 = vmatpush1.bf16.msra.mxu0 0
      %2082 = vmatprep.subr.bf16.mxu0 0
      %2083 = vmatpush1.bf16.msra.mxu0 0
      %2084 = vmatprep.subr.bf16.mxu0 0
      %2085 = vmatpush1.bf16.msra.mxu0 0
      %2086 = vmatprep.subr.bf16.mxu0 0
      %2087 = vmatpush1.bf16.msra.mxu0 0
      %2088 = vmatprep.subr.bf16.mxu0 0
      %2089 = vmatpush1.bf16.msra.mxu0 0
      %2090 = vmatprep.subr.bf16.mxu0 %v2018
      %2091 = vmatpush1.bf16.msra.mxu0 %v2015
      %2092 = vmatprep.subr.bf16.mxu0 0
      %2093 = vmatpush2.bf16.msra.mxu0 0
      %2094 = vmatprep.subr.bf16.mxu0 0
      %2095 = vmatpush2.bf16.msra.mxu0 0
      %2096 = vmatprep.subr.bf16.mxu0 0
      %2097 = vmatpush2.bf16.msra.mxu0 0
      %2098 = vmatprep.subr.bf16.mxu0 0
      %2099 = vmatpush2.bf16.msra.mxu0 0
      %2100 = vmatprep.subr.bf16.mxu0 0
      %2101 = vmatpush2.bf16.msra.mxu0 0
      %2102 = vmatprep.subr.bf16.mxu0 0
      %2103 = vmatpush2.bf16.msra.mxu0 0
      %2104 = vmatprep.subr.bf16.mxu0 0
      %2105 = vmatpush2.bf16.msra.mxu0 0
      %2106 = vmatprep.subr.bf16.mxu0 0
      %2107 = vmatpush2.bf16.msra.mxu0 0
      %2108 = vmatprep.mubr.bf16.mxu0 0
      %2109 = vmatmul.mubr.bf16.gmra.mxu0 %v2006
      %v2110 = vpop.f32.mrf.mxu0
      %v2111 = vadd.f32 0.0, %v2110
      %v2112 = vpop.f32.mrf.mxu0
      %v2113 = vadd.f32 0.0, %v2112
      %v2114 = vpop.f32.mrf.mxu0
      %v2115 = vpop.f32.mrf.mxu0
      %2116 = vdwg.mxu0
      %2117 = vmatprep.subr.bf16.mxu0 0
      %2118 = vmatpush1.bf16.msra.mxu0 0
      %2119 = vmatprep.subr.bf16.mxu0 0
      %2120 = vmatpush1.bf16.msra.mxu0 0
      %2121 = vmatprep.subr.bf16.mxu0 0
      %2122 = vmatpush1.bf16.msra.mxu0 0
      %2123 = vmatprep.subr.bf16.mxu0 0
      %2124 = vmatpush1.bf16.msra.mxu0 0
      %2125 = vmatprep.subr.bf16.mxu0 0
      %2126 = vmatpush1.bf16.msra.mxu0 0
      %2127 = vmatprep.subr.bf16.mxu0 0
      %2128 = vmatpush1.bf16.msra.mxu0 0
      %2129 = vmatprep.subr.bf16.mxu0 0
      %2130 = vmatpush1.bf16.msra.mxu0 0
      %2131 = vmatprep.subr.bf16.mxu0 %v2024
      %2132 = vmatpush1.bf16.msra.mxu0 %v2021
      %2133 = vmatprep.subr.bf16.mxu0 0
      %2134 = vmatpush2.bf16.msra.mxu0 0
      %2135 = vmatprep.subr.bf16.mxu0 0
      %2136 = vmatpush2.bf16.msra.mxu0 0
      %2137 = vmatprep.subr.bf16.mxu0 0
      %2138 = vmatpush2.bf16.msra.mxu0 0
      %2139 = vmatprep.subr.bf16.mxu0 0
      %2140 = vmatpush2.bf16.msra.mxu0 0
      %2141 = vmatprep.subr.bf16.mxu0 0
      %2142 = vmatpush2.bf16.msra.mxu0 0
      %2143 = vmatprep.subr.bf16.mxu0 0
      %2144 = vmatpush2.bf16.msra.mxu0 0
      %2145 = vmatprep.subr.bf16.mxu0 0
      %2146 = vmatpush2.bf16.msra.mxu0 0
      %2147 = vmatprep.subr.bf16.mxu0 0
      %2148 = vmatpush2.bf16.msra.mxu0 0
      %2149 = vmatprep.mubr.bf16.mxu0 0
      %2150 = vmatmul.mubr.bf16.gmra.mxu0 %v2006
      %v2151 = vpop.f32.mrf.mxu0
      %v2152 = vadd.f32 0.0, %v2151
      %v2153 = vpop.f32.mrf.mxu0
      %v2154 = vadd.f32 0.0, %v2153
      %v2155 = vpop.f32.mrf.mxu0
      %v2156 = vpop.f32.mrf.mxu0
      %2157 = vdwg.mxu0
      %2158 = vmatprep.subr.bf16.mxu0 0
      %2159 = vmatpush1.bf16.msra.mxu0 0
      %2160 = vmatprep.subr.bf16.mxu0 0
      %2161 = vmatpush1.bf16.msra.mxu0 0
      %2162 = vmatprep.subr.bf16.mxu0 0
      %2163 = vmatpush1.bf16.msra.mxu0 0
      %2164 = vmatprep.subr.bf16.mxu0 0
      %2165 = vmatpush1.bf16.msra.mxu0 0
      %2166 = vmatprep.subr.bf16.mxu0 0
      %2167 = vmatpush1.bf16.msra.mxu0 0
      %2168 = vmatprep.subr.bf16.mxu0 0
      %2169 = vmatpush1.bf16.msra.mxu0 0
      %2170 = vmatprep.subr.bf16.mxu0 0
      %2171 = vmatpush1.bf16.msra.mxu0 0
      %2172 = vmatprep.subr.bf16.mxu0 %v2030
      %2173 = vmatpush1.bf16.msra.mxu0 %v2027
      %2174 = vmatprep.subr.bf16.mxu0 0
      %2175 = vmatpush2.bf16.msra.mxu0 0
      %2176 = vmatprep.subr.bf16.mxu0 0
      %2177 = vmatpush2.bf16.msra.mxu0 0
      %2178 = vmatprep.subr.bf16.mxu0 0
      %2179 = vmatpush2.bf16.msra.mxu0 0
      %2180 = vmatprep.subr.bf16.mxu0 0
      %2181 = vmatpush2.bf16.msra.mxu0 0
      %2182 = vmatprep.subr.bf16.mxu0 0
      %2183 = vmatpush2.bf16.msra.mxu0 0
      %2184 = vmatprep.subr.bf16.mxu0 0
      %2185 = vmatpush2.bf16.msra.mxu0 0
      %2186 = vmatprep.subr.bf16.mxu0 0
      %2187 = vmatpush2.bf16.msra.mxu0 0
      %2188 = vmatprep.subr.bf16.mxu0 0
      %2189 = vmatpush2.bf16.msra.mxu0 0
      %2190 = vmatprep.mubr.bf16.mxu0 0
      %2191 = vmatmul.mubr.bf16.gmra.mxu0 %v2006
      %v2192 = vpop.f32.mrf.mxu0
      %v2193 = vadd.f32 0.0, %v2192
      %v2194 = vpop.f32.mrf.mxu0
      %v2195 = vadd.f32 0.0, %v2194
      %v2196 = vpop.f32.mrf.mxu0
      %v2197 = vpop.f32.mrf.mxu0
      %2198 = vdwg.mxu0
      %2199 = vmatprep.subr.bf16.mxu0 0
      %2200 = vmatpush1.bf16.msra.mxu0 0
      %2201 = vmatprep.subr.bf16.mxu0 0
      %2202 = vmatpush1.bf16.msra.mxu0 0
      %2203 = vmatprep.subr.bf16.mxu0 0
      %2204 = vmatpush1.bf16.msra.mxu0 0
      %2205 = vmatprep.subr.bf16.mxu0 0
      %2206 = vmatpush1.bf16.msra.mxu0 0
      %2207 = vmatprep.subr.bf16.mxu0 0
      %2208 = vmatpush1.bf16.msra.mxu0 0
      %2209 = vmatprep.subr.bf16.mxu0 0
      %2210 = vmatpush1.bf16.msra.mxu0 0
      %2211 = vmatprep.subr.bf16.mxu0 0
      %2212 = vmatpush1.bf16.msra.mxu0 0
      %2213 = vmatprep.subr.bf16.mxu0 0
      %2214 = vmatpush1.bf16.msra.mxu0 %v2033
      %2215 = vmatprep.subr.bf16.mxu0 0
      %2216 = vmatpush2.bf16.msra.mxu0 0
      %2217 = vmatprep.subr.bf16.mxu0 0
      %2218 = vmatpush2.bf16.msra.mxu0 0
      %2219 = vmatprep.subr.bf16.mxu0 0
      %2220 = vmatpush2.bf16.msra.mxu0 0
      %2221 = vmatprep.subr.bf16.mxu0 0
      %2222 = vmatpush2.bf16.msra.mxu0 0
      %2223 = vmatprep.subr.bf16.mxu0 0
      %2224 = vmatpush2.bf16.msra.mxu0 0
      %2225 = vmatprep.subr.bf16.mxu0 0
      %2226 = vmatpush2.bf16.msra.mxu0 0
      %2227 = vmatprep.subr.bf16.mxu0 0
      %2228 = vmatpush2.bf16.msra.mxu0 0
      %2229 = vmatprep.subr.bf16.mxu0 0
      %2230 = vmatpush2.bf16.msra.mxu0 0
      %2231 = vmatprep.mubr.bf16.mxu0 0
      %2232 = vmatmul.mubr.bf16.gmra.mxu0 %v2006
      %v2233 = vpop.f32.mrf.mxu0
      %v2234 = vadd.f32 0.0, %v2233
      %v2235 = vpop.f32.mrf.mxu0
      %v2236 = vpop.f32.mrf.mxu0
      %v2237 = vpop.f32.mrf.mxu0
      %2238 = vdwg.mxu0
      %v2239 = vadd.f32 %v1964, %v2070
      %v2240 = vadd.f32 %v1965, %v2072
      %v2241 = vadd.f32 %v1966, %v2111
      %v2242 = vadd.f32 %v1967, %v2113
      %v2243 = vadd.f32 %v1968, %v2152
      %v2244 = vadd.f32 %v1969, %v2154
      %v2245 = vadd.f32 %v1970, %v2193
      %v2246 = vadd.f32 %v1971, %v2195
      %v2247 = vadd.f32 %v1972, %v2234
      %s2248 = scalar_lea.vmem %s3, 10
      %v2249 = vld [vmem:[%s2248] sm:$0x3]
      %2250 = vrot.lane.b32.xlu0 %v900, 90
      %v2251 = vpop.permute.xlu0 %2250
      %2252 = vrot.lane.b32.xlu0 %v901, 90
      %v2253 = vpop.permute.xlu0 %2252
      %2254 = vrot.lane.b32.xlu0 %v902, 90
      %v2255 = vpop.permute.xlu0 %2254
      %2256 = vrot.lane.b32.xlu0 %v903, 90
      %v2257 = vpop.permute.xlu0 %2256
      %2258 = vrot.lane.b32.xlu0 %v904, 90
      %v2259 = vpop.permute.xlu0 %2258
      %2260 = vrot.lane.b32.xlu0 %v905, 90
      %v2261 = vpop.permute.xlu0 %2260
      %2262 = vrot.lane.b32.xlu0 %v906, 90
      %v2263 = vpop.permute.xlu0 %2262
      %2264 = vrot.lane.b32.xlu0 %v907, 90
      %v2265 = vpop.permute.xlu0 %2264
      %2266 = vrot.lane.b32.xlu0 %v908, 90
      %v2267 = vpop.permute.xlu0 %2266
      %2268 = vrot.lane.b32.xlu0 %v909, 90
      %v2269 = vpop.permute.xlu0 %2268
      %vm2270 = vcmask 736256
      %v2271 = vsel %vm2270, %v2251, %v2253
      %v2272 = vsel %vm2270, %v2253, %v2255
      %v2273 = vsel %vm2270, %v2255, %v2257
      %v2274 = vsel %vm2270, %v2257, %v2259
      %v2275 = vsel %vm2270, %v2259, %v2261
      %v2276 = vsel %vm2270, %v2261, %v2263
      %v2277 = vsel %vm2270, %v2263, %v2265
      %v2278 = vsel %vm2270, %v2265, %v2267
      %v2279 = vsel %vm2270, %v2267, %v2269
      %v2281 = vsel %vm953, %v2249, 0
      %v2284 = vsel %vm957, %v2271, 0
      %v2287 = vsel %vm957, %v2272, 0
      %v2290 = vsel %vm957, %v2273, 0
      %v2293 = vsel %vm957, %v2274, 0
      %v2296 = vsel %vm957, %v2275, 0
      %v2299 = vsel %vm957, %v2276, 0
      %v2302 = vsel %vm957, %v2277, 0
      %v2305 = vsel %vm957, %v2278, 0
      %v2308 = vsel %vm957, %v2279, 0
      %2310 = vmatprep.subr.bf16.mxu0 0
      %2311 = vmatpush1.bf16.msra.mxu0 0
      %2312 = vmatprep.subr.bf16.mxu0 0
      %2313 = vmatpush1.bf16.msra.mxu0 0
      %2314 = vmatprep.subr.bf16.mxu0 0
      %2315 = vmatpush1.bf16.msra.mxu0 0
      %2316 = vmatprep.subr.bf16.mxu0 0
      %2317 = vmatpush1.bf16.msra.mxu0 0
      %2318 = vmatprep.subr.bf16.mxu0 0
      %2319 = vmatpush1.bf16.msra.mxu0 0
      %2320 = vmatprep.subr.bf16.mxu0 0
      %2321 = vmatpush1.bf16.msra.mxu0 0
      %2322 = vmatprep.subr.bf16.mxu0 0
      %2323 = vmatpush1.bf16.msra.mxu0 0
      %2324 = vmatprep.subr.bf16.mxu0 %v2287
      %2325 = vmatpush1.bf16.msra.mxu0 %v2284
      %2326 = vmatprep.subr.bf16.mxu0 0
      %2327 = vmatpush2.bf16.msra.mxu0 0
      %2328 = vmatprep.subr.bf16.mxu0 0
      %2329 = vmatpush2.bf16.msra.mxu0 0
      %2330 = vmatprep.subr.bf16.mxu0 0
      %2331 = vmatpush2.bf16.msra.mxu0 0
      %2332 = vmatprep.subr.bf16.mxu0 0
      %2333 = vmatpush2.bf16.msra.mxu0 0
      %2334 = vmatprep.subr.bf16.mxu0 0
      %2335 = vmatpush2.bf16.msra.mxu0 0
      %2336 = vmatprep.subr.bf16.mxu0 0
      %2337 = vmatpush2.bf16.msra.mxu0 0
      %2338 = vmatprep.subr.bf16.mxu0 0
      %2339 = vmatpush2.bf16.msra.mxu0 0
      %2340 = vmatprep.subr.bf16.mxu0 0
      %2341 = vmatpush2.bf16.msra.mxu0 0
      %2342 = vmatprep.mubr.bf16.mxu0 0
      %2343 = vmatmul.mubr.bf16.gmra.mxu0 %v2281
      %v2344 = vpop.f32.mrf.mxu0
      %v2345 = vadd.f32 0.0, %v2344
      %v2346 = vpop.f32.mrf.mxu0
      %v2347 = vadd.f32 0.0, %v2346
      %v2348 = vpop.f32.mrf.mxu0
      %v2349 = vpop.f32.mrf.mxu0
      %2350 = vdwg.mxu0
      %2351 = vmatprep.subr.bf16.mxu0 0
      %2352 = vmatpush1.bf16.msra.mxu0 0
      %2353 = vmatprep.subr.bf16.mxu0 0
      %2354 = vmatpush1.bf16.msra.mxu0 0
      %2355 = vmatprep.subr.bf16.mxu0 0
      %2356 = vmatpush1.bf16.msra.mxu0 0
      %2357 = vmatprep.subr.bf16.mxu0 0
      %2358 = vmatpush1.bf16.msra.mxu0 0
      %2359 = vmatprep.subr.bf16.mxu0 0
      %2360 = vmatpush1.bf16.msra.mxu0 0
      %2361 = vmatprep.subr.bf16.mxu0 0
      %2362 = vmatpush1.bf16.msra.mxu0 0
      %2363 = vmatprep.subr.bf16.mxu0 0
      %2364 = vmatpush1.bf16.msra.mxu0 0
      %2365 = vmatprep.subr.bf16.mxu0 %v2293
      %2366 = vmatpush1.bf16.msra.mxu0 %v2290
      %2367 = vmatprep.subr.bf16.mxu0 0
      %2368 = vmatpush2.bf16.msra.mxu0 0
      %2369 = vmatprep.subr.bf16.mxu0 0
      %2370 = vmatpush2.bf16.msra.mxu0 0
      %2371 = vmatprep.subr.bf16.mxu0 0
      %2372 = vmatpush2.bf16.msra.mxu0 0
      %2373 = vmatprep.subr.bf16.mxu0 0
      %2374 = vmatpush2.bf16.msra.mxu0 0
      %2375 = vmatprep.subr.bf16.mxu0 0
      %2376 = vmatpush2.bf16.msra.mxu0 0
      %2377 = vmatprep.subr.bf16.mxu0 0
      %2378 = vmatpush2.bf16.msra.mxu0 0
      %2379 = vmatprep.subr.bf16.mxu0 0
      %2380 = vmatpush2.bf16.msra.mxu0 0
      %2381 = vmatprep.subr.bf16.mxu0 0
      %2382 = vmatpush2.bf16.msra.mxu0 0
      %2383 = vmatprep.mubr.bf16.mxu0 0
      %2384 = vmatmul.mubr.bf16.gmra.mxu0 %v2281
      %v2385 = vpop.f32.mrf.mxu0
      %v2386 = vadd.f32 0.0, %v2385
      %v2387 = vpop.f32.mrf.mxu0
      %v2388 = vadd.f32 0.0, %v2387
      %v2389 = vpop.f32.mrf.mxu0
      %v2390 = vpop.f32.mrf.mxu0
      %2391 = vdwg.mxu0
      %2392 = vmatprep.subr.bf16.mxu0 0
      %2393 = vmatpush1.bf16.msra.mxu0 0
      %2394 = vmatprep.subr.bf16.mxu0 0
      %2395 = vmatpush1.bf16.msra.mxu0 0
      %2396 = vmatprep.subr.bf16.mxu0 0
      %2397 = vmatpush1.bf16.msra.mxu0 0
      %2398 = vmatprep.subr.bf16.mxu0 0
      %2399 = vmatpush1.bf16.msra.mxu0 0
      %2400 = vmatprep.subr.bf16.mxu0 0
      %2401 = vmatpush1.bf16.msra.mxu0 0
      %2402 = vmatprep.subr.bf16.mxu0 0
      %2403 = vmatpush1.bf16.msra.mxu0 0
      %2404 = vmatprep.subr.bf16.mxu0 0
      %2405 = vmatpush1.bf16.msra.mxu0 0
      %2406 = vmatprep.subr.bf16.mxu0 %v2299
      %2407 = vmatpush1.bf16.msra.mxu0 %v2296
      %2408 = vmatprep.subr.bf16.mxu0 0
      %2409 = vmatpush2.bf16.msra.mxu0 0
      %2410 = vmatprep.subr.bf16.mxu0 0
      %2411 = vmatpush2.bf16.msra.mxu0 0
      %2412 = vmatprep.subr.bf16.mxu0 0
      %2413 = vmatpush2.bf16.msra.mxu0 0
      %2414 = vmatprep.subr.bf16.mxu0 0
      %2415 = vmatpush2.bf16.msra.mxu0 0
      %2416 = vmatprep.subr.bf16.mxu0 0
      %2417 = vmatpush2.bf16.msra.mxu0 0
      %2418 = vmatprep.subr.bf16.mxu0 0
      %2419 = vmatpush2.bf16.msra.mxu0 0
      %2420 = vmatprep.subr.bf16.mxu0 0
      %2421 = vmatpush2.bf16.msra.mxu0 0
      %2422 = vmatprep.subr.bf16.mxu0 0
      %2423 = vmatpush2.bf16.msra.mxu0 0
      %2424 = vmatprep.mubr.bf16.mxu0 0
      %2425 = vmatmul.mubr.bf16.gmra.mxu0 %v2281
      %v2426 = vpop.f32.mrf.mxu0
      %v2427 = vadd.f32 0.0, %v2426
      %v2428 = vpop.f32.mrf.mxu0
      %v2429 = vadd.f32 0.0, %v2428
      %v2430 = vpop.f32.mrf.mxu0
      %v2431 = vpop.f32.mrf.mxu0
      %2432 = vdwg.mxu0
      %2433 = vmatprep.subr.bf16.mxu0 0
      %2434 = vmatpush1.bf16.msra.mxu0 0
      %2435 = vmatprep.subr.bf16.mxu0 0
      %2436 = vmatpush1.bf16.msra.mxu0 0
      %2437 = vmatprep.subr.bf16.mxu0 0
      %2438 = vmatpush1.bf16.msra.mxu0 0
      %2439 = vmatprep.subr.bf16.mxu0 0
      %2440 = vmatpush1.bf16.msra.mxu0 0
      %2441 = vmatprep.subr.bf16.mxu0 0
      %2442 = vmatpush1.bf16.msra.mxu0 0
      %2443 = vmatprep.subr.bf16.mxu0 0
      %2444 = vmatpush1.bf16.msra.mxu0 0
      %2445 = vmatprep.subr.bf16.mxu0 0
      %2446 = vmatpush1.bf16.msra.mxu0 0
      %2447 = vmatprep.subr.bf16.mxu0 %v2305
      %2448 = vmatpush1.bf16.msra.mxu0 %v2302
      %2449 = vmatprep.subr.bf16.mxu0 0
      %2450 = vmatpush2.bf16.msra.mxu0 0
      %2451 = vmatprep.subr.bf16.mxu0 0
      %2452 = vmatpush2.bf16.msra.mxu0 0
      %2453 = vmatprep.subr.bf16.mxu0 0
      %2454 = vmatpush2.bf16.msra.mxu0 0
      %2455 = vmatprep.subr.bf16.mxu0 0
      %2456 = vmatpush2.bf16.msra.mxu0 0
      %2457 = vmatprep.subr.bf16.mxu0 0
      %2458 = vmatpush2.bf16.msra.mxu0 0
      %2459 = vmatprep.subr.bf16.mxu0 0
      %2460 = vmatpush2.bf16.msra.mxu0 0
      %2461 = vmatprep.subr.bf16.mxu0 0
      %2462 = vmatpush2.bf16.msra.mxu0 0
      %2463 = vmatprep.subr.bf16.mxu0 0
      %2464 = vmatpush2.bf16.msra.mxu0 0
      %2465 = vmatprep.mubr.bf16.mxu0 0
      %2466 = vmatmul.mubr.bf16.gmra.mxu0 %v2281
      %v2467 = vpop.f32.mrf.mxu0
      %v2468 = vadd.f32 0.0, %v2467
      %v2469 = vpop.f32.mrf.mxu0
      %v2470 = vadd.f32 0.0, %v2469
      %v2471 = vpop.f32.mrf.mxu0
      %v2472 = vpop.f32.mrf.mxu0
      %2473 = vdwg.mxu0
      %2474 = vmatprep.subr.bf16.mxu0 0
      %2475 = vmatpush1.bf16.msra.mxu0 0
      %2476 = vmatprep.subr.bf16.mxu0 0
      %2477 = vmatpush1.bf16.msra.mxu0 0
      %2478 = vmatprep.subr.bf16.mxu0 0
      %2479 = vmatpush1.bf16.msra.mxu0 0
      %2480 = vmatprep.subr.bf16.mxu0 0
      %2481 = vmatpush1.bf16.msra.mxu0 0
      %2482 = vmatprep.subr.bf16.mxu0 0
      %2483 = vmatpush1.bf16.msra.mxu0 0
      %2484 = vmatprep.subr.bf16.mxu0 0
      %2485 = vmatpush1.bf16.msra.mxu0 0
      %2486 = vmatprep.subr.bf16.mxu0 0
      %2487 = vmatpush1.bf16.msra.mxu0 0
      %2488 = vmatprep.subr.bf16.mxu0 0
      %2489 = vmatpush1.bf16.msra.mxu0 %v2308
      %2490 = vmatprep.subr.bf16.mxu0 0
      %2491 = vmatpush2.bf16.msra.mxu0 0
      %2492 = vmatprep.subr.bf16.mxu0 0
      %2493 = vmatpush2.bf16.msra.mxu0 0
      %2494 = vmatprep.subr.bf16.mxu0 0
      %2495 = vmatpush2.bf16.msra.mxu0 0
      %2496 = vmatprep.subr.bf16.mxu0 0
      %2497 = vmatpush2.bf16.msra.mxu0 0
      %2498 = vmatprep.subr.bf16.mxu0 0
      %2499 = vmatpush2.bf16.msra.mxu0 0
      %2500 = vmatprep.subr.bf16.mxu0 0
      %2501 = vmatpush2.bf16.msra.mxu0 0
      %2502 = vmatprep.subr.bf16.mxu0 0
      %2503 = vmatpush2.bf16.msra.mxu0 0
      %2504 = vmatprep.subr.bf16.mxu0 0
      %2505 = vmatpush2.bf16.msra.mxu0 0
      %2506 = vmatprep.mubr.bf16.mxu0 0
      %2507 = vmatmul.mubr.bf16.gmra.mxu0 %v2281
      %v2508 = vpop.f32.mrf.mxu0
      %v2509 = vadd.f32 0.0, %v2508
      %v2510 = vpop.f32.mrf.mxu0
      %v2511 = vpop.f32.mrf.mxu0
      %v2512 = vpop.f32.mrf.mxu0
      %2513 = vdwg.mxu0
      %v2514 = vadd.f32 %v2239, %v2345
      %v2515 = vadd.f32 %v2240, %v2347
      %v2516 = vadd.f32 %v2241, %v2386
      %v2517 = vadd.f32 %v2242, %v2388
      %v2518 = vadd.f32 %v2243, %v2427
      %v2519 = vadd.f32 %v2244, %v2429
      %v2520 = vadd.f32 %v2245, %v2468
      %v2521 = vadd.f32 %v2246, %v2470
      %v2522 = vadd.f32 %v2247, %v2509
      %s2523 = scalar_lea.vmem %s3, 12
      %v2524 = vld [vmem:[%s2523] sm:$0x3]
      %2525 = vrot.lane.b32.xlu0 %v900, 56
      %v2526 = vpop.permute.xlu0 %2525
      %2527 = vrot.lane.b32.xlu0 %v901, 56
      %v2528 = vpop.permute.xlu0 %2527
      %2529 = vrot.lane.b32.xlu0 %v902, 56
      %v2530 = vpop.permute.xlu0 %2529
      %2531 = vrot.lane.b32.xlu0 %v903, 56
      %v2532 = vpop.permute.xlu0 %2531
      %2533 = vrot.lane.b32.xlu0 %v904, 56
      %v2534 = vpop.permute.xlu0 %2533
      %2535 = vrot.lane.b32.xlu0 %v905, 56
      %v2536 = vpop.permute.xlu0 %2535
      %2537 = vrot.lane.b32.xlu0 %v906, 56
      %v2538 = vpop.permute.xlu0 %2537
      %2539 = vrot.lane.b32.xlu0 %v907, 56
      %v2540 = vpop.permute.xlu0 %2539
      %2541 = vrot.lane.b32.xlu0 %v908, 56
      %v2542 = vpop.permute.xlu0 %2541
      %2543 = vrot.lane.b32.xlu0 %v909, 56
      %v2544 = vpop.permute.xlu0 %2543
      %vm2545 = vcmask 457728
      %v2546 = vsel %vm2545, %v2526, %v2528
      %v2547 = vsel %vm2545, %v2528, %v2530
      %v2548 = vsel %vm2545, %v2530, %v2532
      %v2549 = vsel %vm2545, %v2532, %v2534
      %v2550 = vsel %vm2545, %v2534, %v2536
      %v2551 = vsel %vm2545, %v2536, %v2538
      %v2552 = vsel %vm2545, %v2538, %v2540
      %v2553 = vsel %vm2545, %v2540, %v2542
      %v2554 = vsel %vm2545, %v2542, %v2544
      %v2556 = vsel %vm953, %v2524, 0
      %v2559 = vsel %vm957, %v2546, 0
      %v2562 = vsel %vm957, %v2547, 0
      %v2565 = vsel %vm957, %v2548, 0
      %v2568 = vsel %vm957, %v2549, 0
      %v2571 = vsel %vm957, %v2550, 0
      %v2574 = vsel %vm957, %v2551, 0
      %v2577 = vsel %vm957, %v2552, 0
      %v2580 = vsel %vm957, %v2553, 0
      %v2583 = vsel %vm957, %v2554, 0
      %2585 = vmatprep.subr.bf16.mxu0 0
      %2586 = vmatpush1.bf16.msra.mxu0 0
      %2587 = vmatprep.subr.bf16.mxu0 0
      %2588 = vmatpush1.bf16.msra.mxu0 0
      %2589 = vmatprep.subr.bf16.mxu0 0
      %2590 = vmatpush1.bf16.msra.mxu0 0
      %2591 = vmatprep.subr.bf16.mxu0 0
      %2592 = vmatpush1.bf16.msra.mxu0 0
      %2593 = vmatprep.subr.bf16.mxu0 0
      %2594 = vmatpush1.bf16.msra.mxu0 0
      %2595 = vmatprep.subr.bf16.mxu0 0
      %2596 = vmatpush1.bf16.msra.mxu0 0
      %2597 = vmatprep.subr.bf16.mxu0 0
      %2598 = vmatpush1.bf16.msra.mxu0 0
      %2599 = vmatprep.subr.bf16.mxu0 %v2562
      %2600 = vmatpush1.bf16.msra.mxu0 %v2559
      %2601 = vmatprep.subr.bf16.mxu0 0
      %2602 = vmatpush2.bf16.msra.mxu0 0
      %2603 = vmatprep.subr.bf16.mxu0 0
      %2604 = vmatpush2.bf16.msra.mxu0 0
      %2605 = vmatprep.subr.bf16.mxu0 0
      %2606 = vmatpush2.bf16.msra.mxu0 0
      %2607 = vmatprep.subr.bf16.mxu0 0
      %2608 = vmatpush2.bf16.msra.mxu0 0
      %2609 = vmatprep.subr.bf16.mxu0 0
      %2610 = vmatpush2.bf16.msra.mxu0 0
      %2611 = vmatprep.subr.bf16.mxu0 0
      %2612 = vmatpush2.bf16.msra.mxu0 0
      %2613 = vmatprep.subr.bf16.mxu0 0
      %2614 = vmatpush2.bf16.msra.mxu0 0
      %2615 = vmatprep.subr.bf16.mxu0 0
      %2616 = vmatpush2.bf16.msra.mxu0 0
      %2617 = vmatprep.mubr.bf16.mxu0 0
      %2618 = vmatmul.mubr.bf16.gmra.mxu0 %v2556
      %v2619 = vpop.f32.mrf.mxu0
      %v2620 = vadd.f32 0.0, %v2619
      %v2621 = vpop.f32.mrf.mxu0
      %v2622 = vadd.f32 0.0, %v2621
      %v2623 = vpop.f32.mrf.mxu0
      %v2624 = vpop.f32.mrf.mxu0
      %2625 = vdwg.mxu0
      %2626 = vmatprep.subr.bf16.mxu0 0
      %2627 = vmatpush1.bf16.msra.mxu0 0
      %2628 = vmatprep.subr.bf16.mxu0 0
      %2629 = vmatpush1.bf16.msra.mxu0 0
      %2630 = vmatprep.subr.bf16.mxu0 0
      %2631 = vmatpush1.bf16.msra.mxu0 0
      %2632 = vmatprep.subr.bf16.mxu0 0
      %2633 = vmatpush1.bf16.msra.mxu0 0
      %2634 = vmatprep.subr.bf16.mxu0 0
      %2635 = vmatpush1.bf16.msra.mxu0 0
      %2636 = vmatprep.subr.bf16.mxu0 0
      %2637 = vmatpush1.bf16.msra.mxu0 0
      %2638 = vmatprep.subr.bf16.mxu0 0
      %2639 = vmatpush1.bf16.msra.mxu0 0
      %2640 = vmatprep.subr.bf16.mxu0 %v2568
      %2641 = vmatpush1.bf16.msra.mxu0 %v2565
      %2642 = vmatprep.subr.bf16.mxu0 0
      %2643 = vmatpush2.bf16.msra.mxu0 0
      %2644 = vmatprep.subr.bf16.mxu0 0
      %2645 = vmatpush2.bf16.msra.mxu0 0
      %2646 = vmatprep.subr.bf16.mxu0 0
      %2647 = vmatpush2.bf16.msra.mxu0 0
      %2648 = vmatprep.subr.bf16.mxu0 0
      %2649 = vmatpush2.bf16.msra.mxu0 0
      %2650 = vmatprep.subr.bf16.mxu0 0
      %2651 = vmatpush2.bf16.msra.mxu0 0
      %2652 = vmatprep.subr.bf16.mxu0 0
      %2653 = vmatpush2.bf16.msra.mxu0 0
      %2654 = vmatprep.subr.bf16.mxu0 0
      %2655 = vmatpush2.bf16.msra.mxu0 0
      %2656 = vmatprep.subr.bf16.mxu0 0
      %2657 = vmatpush2.bf16.msra.mxu0 0
      %2658 = vmatprep.mubr.bf16.mxu0 0
      %2659 = vmatmul.mubr.bf16.gmra.mxu0 %v2556
      %v2660 = vpop.f32.mrf.mxu0
      %v2661 = vadd.f32 0.0, %v2660
      %v2662 = vpop.f32.mrf.mxu0
      %v2663 = vadd.f32 0.0, %v2662
      %v2664 = vpop.f32.mrf.mxu0
      %v2665 = vpop.f32.mrf.mxu0
      %2666 = vdwg.mxu0
      %2667 = vmatprep.subr.bf16.mxu0 0
      %2668 = vmatpush1.bf16.msra.mxu0 0
      %2669 = vmatprep.subr.bf16.mxu0 0
      %2670 = vmatpush1.bf16.msra.mxu0 0
      %2671 = vmatprep.subr.bf16.mxu0 0
      %2672 = vmatpush1.bf16.msra.mxu0 0
      %2673 = vmatprep.subr.bf16.mxu0 0
      %2674 = vmatpush1.bf16.msra.mxu0 0
      %2675 = vmatprep.subr.bf16.mxu0 0
      %2676 = vmatpush1.bf16.msra.mxu0 0
      %2677 = vmatprep.subr.bf16.mxu0 0
      %2678 = vmatpush1.bf16.msra.mxu0 0
      %2679 = vmatprep.subr.bf16.mxu0 0
      %2680 = vmatpush1.bf16.msra.mxu0 0
      %2681 = vmatprep.subr.bf16.mxu0 %v2574
      %2682 = vmatpush1.bf16.msra.mxu0 %v2571
      %2683 = vmatprep.subr.bf16.mxu0 0
      %2684 = vmatpush2.bf16.msra.mxu0 0
      %2685 = vmatprep.subr.bf16.mxu0 0
      %2686 = vmatpush2.bf16.msra.mxu0 0
      %2687 = vmatprep.subr.bf16.mxu0 0
      %2688 = vmatpush2.bf16.msra.mxu0 0
      %2689 = vmatprep.subr.bf16.mxu0 0
      %2690 = vmatpush2.bf16.msra.mxu0 0
      %2691 = vmatprep.subr.bf16.mxu0 0
      %2692 = vmatpush2.bf16.msra.mxu0 0
      %2693 = vmatprep.subr.bf16.mxu0 0
      %2694 = vmatpush2.bf16.msra.mxu0 0
      %2695 = vmatprep.subr.bf16.mxu0 0
      %2696 = vmatpush2.bf16.msra.mxu0 0
      %2697 = vmatprep.subr.bf16.mxu0 0
      %2698 = vmatpush2.bf16.msra.mxu0 0
      %2699 = vmatprep.mubr.bf16.mxu0 0
      %2700 = vmatmul.mubr.bf16.gmra.mxu0 %v2556
      %v2701 = vpop.f32.mrf.mxu0
      %v2702 = vadd.f32 0.0, %v2701
      %v2703 = vpop.f32.mrf.mxu0
      %v2704 = vadd.f32 0.0, %v2703
      %v2705 = vpop.f32.mrf.mxu0
      %v2706 = vpop.f32.mrf.mxu0
      %2707 = vdwg.mxu0
      %2708 = vmatprep.subr.bf16.mxu0 0
      %2709 = vmatpush1.bf16.msra.mxu0 0
      %2710 = vmatprep.subr.bf16.mxu0 0
      %2711 = vmatpush1.bf16.msra.mxu0 0
      %2712 = vmatprep.subr.bf16.mxu0 0
      %2713 = vmatpush1.bf16.msra.mxu0 0
      %2714 = vmatprep.subr.bf16.mxu0 0
      %2715 = vmatpush1.bf16.msra.mxu0 0
      %2716 = vmatprep.subr.bf16.mxu0 0
      %2717 = vmatpush1.bf16.msra.mxu0 0
      %2718 = vmatprep.subr.bf16.mxu0 0
      %2719 = vmatpush1.bf16.msra.mxu0 0
      %2720 = vmatprep.subr.bf16.mxu0 0
      %2721 = vmatpush1.bf16.msra.mxu0 0
      %2722 = vmatprep.subr.bf16.mxu0 %v2580
      %2723 = vmatpush1.bf16.msra.mxu0 %v2577
      %2724 = vmatprep.subr.bf16.mxu0 0
      %2725 = vmatpush2.bf16.msra.mxu0 0
      %2726 = vmatprep.subr.bf16.mxu0 0
      %2727 = vmatpush2.bf16.msra.mxu0 0
      %2728 = vmatprep.subr.bf16.mxu0 0
      %2729 = vmatpush2.bf16.msra.mxu0 0
      %2730 = vmatprep.subr.bf16.mxu0 0
      %2731 = vmatpush2.bf16.msra.mxu0 0
      %2732 = vmatprep.subr.bf16.mxu0 0
      %2733 = vmatpush2.bf16.msra.mxu0 0
      %2734 = vmatprep.subr.bf16.mxu0 0
      %2735 = vmatpush2.bf16.msra.mxu0 0
      %2736 = vmatprep.subr.bf16.mxu0 0
      %2737 = vmatpush2.bf16.msra.mxu0 0
      %2738 = vmatprep.subr.bf16.mxu0 0
      %2739 = vmatpush2.bf16.msra.mxu0 0
      %2740 = vmatprep.mubr.bf16.mxu0 0
      %2741 = vmatmul.mubr.bf16.gmra.mxu0 %v2556
      %v2742 = vpop.f32.mrf.mxu0
      %v2743 = vadd.f32 0.0, %v2742
      %v2744 = vpop.f32.mrf.mxu0
      %v2745 = vadd.f32 0.0, %v2744
      %v2746 = vpop.f32.mrf.mxu0
      %v2747 = vpop.f32.mrf.mxu0
      %2748 = vdwg.mxu0
      %2749 = vmatprep.subr.bf16.mxu0 0
      %2750 = vmatpush1.bf16.msra.mxu0 0
      %2751 = vmatprep.subr.bf16.mxu0 0
      %2752 = vmatpush1.bf16.msra.mxu0 0
      %2753 = vmatprep.subr.bf16.mxu0 0
      %2754 = vmatpush1.bf16.msra.mxu0 0
      %2755 = vmatprep.subr.bf16.mxu0 0
      %2756 = vmatpush1.bf16.msra.mxu0 0
      %2757 = vmatprep.subr.bf16.mxu0 0
      %2758 = vmatpush1.bf16.msra.mxu0 0
      %2759 = vmatprep.subr.bf16.mxu0 0
      %2760 = vmatpush1.bf16.msra.mxu0 0
      %2761 = vmatprep.subr.bf16.mxu0 0
      %2762 = vmatpush1.bf16.msra.mxu0 0
      %2763 = vmatprep.subr.bf16.mxu0 0
      %2764 = vmatpush1.bf16.msra.mxu0 %v2583
      %2765 = vmatprep.subr.bf16.mxu0 0
      %2766 = vmatpush2.bf16.msra.mxu0 0
      %2767 = vmatprep.subr.bf16.mxu0 0
      %2768 = vmatpush2.bf16.msra.mxu0 0
      %2769 = vmatprep.subr.bf16.mxu0 0
      %2770 = vmatpush2.bf16.msra.mxu0 0
      %2771 = vmatprep.subr.bf16.mxu0 0
      %2772 = vmatpush2.bf16.msra.mxu0 0
      %2773 = vmatprep.subr.bf16.mxu0 0
      %2774 = vmatpush2.bf16.msra.mxu0 0
      %2775 = vmatprep.subr.bf16.mxu0 0
      %2776 = vmatpush2.bf16.msra.mxu0 0
      %2777 = vmatprep.subr.bf16.mxu0 0
      %2778 = vmatpush2.bf16.msra.mxu0 0
      %2779 = vmatprep.subr.bf16.mxu0 0
      %2780 = vmatpush2.bf16.msra.mxu0 0
      %2781 = vmatprep.mubr.bf16.mxu0 0
      %2782 = vmatmul.mubr.bf16.gmra.mxu0 %v2556
      %v2783 = vpop.f32.mrf.mxu0
      %v2784 = vadd.f32 0.0, %v2783
      %v2785 = vpop.f32.mrf.mxu0
      %v2786 = vpop.f32.mrf.mxu0
      %v2787 = vpop.f32.mrf.mxu0
      %2788 = vdwg.mxu0
      %v2789 = vadd.f32 %v2514, %v2620
      %v2790 = vadd.f32 %v2515, %v2622
      %v2791 = vadd.f32 %v2516, %v2661
      %v2792 = vadd.f32 %v2517, %v2663
      %v2793 = vadd.f32 %v2518, %v2702
      %v2794 = vadd.f32 %v2519, %v2704
      %v2795 = vadd.f32 %v2520, %v2743
      %v2796 = vadd.f32 %v2521, %v2745
      %v2797 = vadd.f32 %v2522, %v2784
      %s2798 = scalar_lea.vmem %s3, 14
      %v2799 = vld [vmem:[%s2798] sm:$0x3]
      %2800 = vrot.lane.b32.xlu0 %v900, 55
      %v2801 = vpop.permute.xlu0 %2800
      %2802 = vrot.lane.b32.xlu0 %v901, 55
      %v2803 = vpop.permute.xlu0 %2802
      %2804 = vrot.lane.b32.xlu0 %v902, 55
      %v2805 = vpop.permute.xlu0 %2804
      %2806 = vrot.lane.b32.xlu0 %v903, 55
      %v2807 = vpop.permute.xlu0 %2806
      %2808 = vrot.lane.b32.xlu0 %v904, 55
      %v2809 = vpop.permute.xlu0 %2808
      %2810 = vrot.lane.b32.xlu0 %v905, 55
      %v2811 = vpop.permute.xlu0 %2810
      %2812 = vrot.lane.b32.xlu0 %v906, 55
      %v2813 = vpop.permute.xlu0 %2812
      %2814 = vrot.lane.b32.xlu0 %v907, 55
      %v2815 = vpop.permute.xlu0 %2814
      %2816 = vrot.lane.b32.xlu0 %v908, 55
      %v2817 = vpop.permute.xlu0 %2816
      %2818 = vrot.lane.b32.xlu0 %v909, 55
      %v2819 = vpop.permute.xlu0 %2818
      %vm2820 = vcmask 449536
      %v2821 = vsel %vm2820, %v2801, %v2803
      %v2822 = vsel %vm2820, %v2803, %v2805
      %v2823 = vsel %vm2820, %v2805, %v2807
      %v2824 = vsel %vm2820, %v2807, %v2809
      %v2825 = vsel %vm2820, %v2809, %v2811
      %v2826 = vsel %vm2820, %v2811, %v2813
      %v2827 = vsel %vm2820, %v2813, %v2815
      %v2828 = vsel %vm2820, %v2815, %v2817
      %v2829 = vsel %vm2820, %v2817, %v2819
      %v2831 = vsel %vm953, %v2799, 0
      %v2834 = vsel %vm957, %v2821, 0
      %v2837 = vsel %vm957, %v2822, 0
      %v2840 = vsel %vm957, %v2823, 0
      %v2843 = vsel %vm957, %v2824, 0
      %v2846 = vsel %vm957, %v2825, 0
      %v2849 = vsel %vm957, %v2826, 0
      %v2852 = vsel %vm957, %v2827, 0
      %v2855 = vsel %vm957, %v2828, 0
      %v2858 = vsel %vm957, %v2829, 0
      %2860 = vmatprep.subr.bf16.mxu0 0
      %2861 = vmatpush1.bf16.msra.mxu0 0
      %2862 = vmatprep.subr.bf16.mxu0 0
      %2863 = vmatpush1.bf16.msra.mxu0 0
      %2864 = vmatprep.subr.bf16.mxu0 0
      %2865 = vmatpush1.bf16.msra.mxu0 0
      %2866 = vmatprep.subr.bf16.mxu0 0
      %2867 = vmatpush1.bf16.msra.mxu0 0
      %2868 = vmatprep.subr.bf16.mxu0 0
      %2869 = vmatpush1.bf16.msra.mxu0 0
      %2870 = vmatprep.subr.bf16.mxu0 0
      %2871 = vmatpush1.bf16.msra.mxu0 0
      %2872 = vmatprep.subr.bf16.mxu0 0
      %2873 = vmatpush1.bf16.msra.mxu0 0
      %2874 = vmatprep.subr.bf16.mxu0 %v2837
      %2875 = vmatpush1.bf16.msra.mxu0 %v2834
      %2876 = vmatprep.subr.bf16.mxu0 0
      %2877 = vmatpush2.bf16.msra.mxu0 0
      %2878 = vmatprep.subr.bf16.mxu0 0
      %2879 = vmatpush2.bf16.msra.mxu0 0
      %2880 = vmatprep.subr.bf16.mxu0 0
      %2881 = vmatpush2.bf16.msra.mxu0 0
      %2882 = vmatprep.subr.bf16.mxu0 0
      %2883 = vmatpush2.bf16.msra.mxu0 0
      %2884 = vmatprep.subr.bf16.mxu0 0
      %2885 = vmatpush2.bf16.msra.mxu0 0
      %2886 = vmatprep.subr.bf16.mxu0 0
      %2887 = vmatpush2.bf16.msra.mxu0 0
      %2888 = vmatprep.subr.bf16.mxu0 0
      %2889 = vmatpush2.bf16.msra.mxu0 0
      %2890 = vmatprep.subr.bf16.mxu0 0
      %2891 = vmatpush2.bf16.msra.mxu0 0
      %2892 = vmatprep.mubr.bf16.mxu0 0
      %2893 = vmatmul.mubr.bf16.gmra.mxu0 %v2831
      %v2894 = vpop.f32.mrf.mxu0
      %v2895 = vadd.f32 0.0, %v2894
      %v2896 = vpop.f32.mrf.mxu0
      %v2897 = vadd.f32 0.0, %v2896
      %v2898 = vpop.f32.mrf.mxu0
      %v2899 = vpop.f32.mrf.mxu0
      %2900 = vdwg.mxu0
      %2901 = vmatprep.subr.bf16.mxu0 0
      %2902 = vmatpush1.bf16.msra.mxu0 0
      %2903 = vmatprep.subr.bf16.mxu0 0
      %2904 = vmatpush1.bf16.msra.mxu0 0
      %2905 = vmatprep.subr.bf16.mxu0 0
      %2906 = vmatpush1.bf16.msra.mxu0 0
      %2907 = vmatprep.subr.bf16.mxu0 0
      %2908 = vmatpush1.bf16.msra.mxu0 0
      %2909 = vmatprep.subr.bf16.mxu0 0
      %2910 = vmatpush1.bf16.msra.mxu0 0
      %2911 = vmatprep.subr.bf16.mxu0 0
      %2912 = vmatpush1.bf16.msra.mxu0 0
      %2913 = vmatprep.subr.bf16.mxu0 0
      %2914 = vmatpush1.bf16.msra.mxu0 0
      %2915 = vmatprep.subr.bf16.mxu0 %v2843
      %2916 = vmatpush1.bf16.msra.mxu0 %v2840
      %2917 = vmatprep.subr.bf16.mxu0 0
      %2918 = vmatpush2.bf16.msra.mxu0 0
      %2919 = vmatprep.subr.bf16.mxu0 0
      %2920 = vmatpush2.bf16.msra.mxu0 0
      %2921 = vmatprep.subr.bf16.mxu0 0
      %2922 = vmatpush2.bf16.msra.mxu0 0
      %2923 = vmatprep.subr.bf16.mxu0 0
      %2924 = vmatpush2.bf16.msra.mxu0 0
      %2925 = vmatprep.subr.bf16.mxu0 0
      %2926 = vmatpush2.bf16.msra.mxu0 0
      %2927 = vmatprep.subr.bf16.mxu0 0
      %2928 = vmatpush2.bf16.msra.mxu0 0
      %2929 = vmatprep.subr.bf16.mxu0 0
      %2930 = vmatpush2.bf16.msra.mxu0 0
      %2931 = vmatprep.subr.bf16.mxu0 0
      %2932 = vmatpush2.bf16.msra.mxu0 0
      %2933 = vmatprep.mubr.bf16.mxu0 0
      %2934 = vmatmul.mubr.bf16.gmra.mxu0 %v2831
      %v2935 = vpop.f32.mrf.mxu0
      %v2936 = vadd.f32 0.0, %v2935
      %v2937 = vpop.f32.mrf.mxu0
      %v2938 = vadd.f32 0.0, %v2937
      %v2939 = vpop.f32.mrf.mxu0
      %v2940 = vpop.f32.mrf.mxu0
      %2941 = vdwg.mxu0
      %2942 = vmatprep.subr.bf16.mxu0 0
      %2943 = vmatpush1.bf16.msra.mxu0 0
      %2944 = vmatprep.subr.bf16.mxu0 0
      %2945 = vmatpush1.bf16.msra.mxu0 0
      %2946 = vmatprep.subr.bf16.mxu0 0
      %2947 = vmatpush1.bf16.msra.mxu0 0
      %2948 = vmatprep.subr.bf16.mxu0 0
      %2949 = vmatpush1.bf16.msra.mxu0 0
      %2950 = vmatprep.subr.bf16.mxu0 0
      %2951 = vmatpush1.bf16.msra.mxu0 0
      %2952 = vmatprep.subr.bf16.mxu0 0
      %2953 = vmatpush1.bf16.msra.mxu0 0
      %2954 = vmatprep.subr.bf16.mxu0 0
      %2955 = vmatpush1.bf16.msra.mxu0 0
      %2956 = vmatprep.subr.bf16.mxu0 %v2849
      %2957 = vmatpush1.bf16.msra.mxu0 %v2846
      %2958 = vmatprep.subr.bf16.mxu0 0
      %2959 = vmatpush2.bf16.msra.mxu0 0
      %2960 = vmatprep.subr.bf16.mxu0 0
      %2961 = vmatpush2.bf16.msra.mxu0 0
      %2962 = vmatprep.subr.bf16.mxu0 0
      %2963 = vmatpush2.bf16.msra.mxu0 0
      %2964 = vmatprep.subr.bf16.mxu0 0
      %2965 = vmatpush2.bf16.msra.mxu0 0
      %2966 = vmatprep.subr.bf16.mxu0 0
      %2967 = vmatpush2.bf16.msra.mxu0 0
      %2968 = vmatprep.subr.bf16.mxu0 0
      %2969 = vmatpush2.bf16.msra.mxu0 0
      %2970 = vmatprep.subr.bf16.mxu0 0
      %2971 = vmatpush2.bf16.msra.mxu0 0
      %2972 = vmatprep.subr.bf16.mxu0 0
      %2973 = vmatpush2.bf16.msra.mxu0 0
      %2974 = vmatprep.mubr.bf16.mxu0 0
      %2975 = vmatmul.mubr.bf16.gmra.mxu0 %v2831
      %v2976 = vpop.f32.mrf.mxu0
      %v2977 = vadd.f32 0.0, %v2976
      %v2978 = vpop.f32.mrf.mxu0
      %v2979 = vadd.f32 0.0, %v2978
      %v2980 = vpop.f32.mrf.mxu0
      %v2981 = vpop.f32.mrf.mxu0
      %2982 = vdwg.mxu0
      %2983 = vmatprep.subr.bf16.mxu0 0
      %2984 = vmatpush1.bf16.msra.mxu0 0
      %2985 = vmatprep.subr.bf16.mxu0 0
      %2986 = vmatpush1.bf16.msra.mxu0 0
      %2987 = vmatprep.subr.bf16.mxu0 0
      %2988 = vmatpush1.bf16.msra.mxu0 0
      %2989 = vmatprep.subr.bf16.mxu0 0
      %2990 = vmatpush1.bf16.msra.mxu0 0
      %2991 = vmatprep.subr.bf16.mxu0 0
      %2992 = vmatpush1.bf16.msra.mxu0 0
      %2993 = vmatprep.subr.bf16.mxu0 0
      %2994 = vmatpush1.bf16.msra.mxu0 0
      %2995 = vmatprep.subr.bf16.mxu0 0
      %2996 = vmatpush1.bf16.msra.mxu0 0
      %2997 = vmatprep.subr.bf16.mxu0 %v2855
      %2998 = vmatpush1.bf16.msra.mxu0 %v2852
      %2999 = vmatprep.subr.bf16.mxu0 0
      %3000 = vmatpush2.bf16.msra.mxu0 0
      %3001 = vmatprep.subr.bf16.mxu0 0
      %3002 = vmatpush2.bf16.msra.mxu0 0
      %3003 = vmatprep.subr.bf16.mxu0 0
      %3004 = vmatpush2.bf16.msra.mxu0 0
      %3005 = vmatprep.subr.bf16.mxu0 0
      %3006 = vmatpush2.bf16.msra.mxu0 0
      %3007 = vmatprep.subr.bf16.mxu0 0
      %3008 = vmatpush2.bf16.msra.mxu0 0
      %3009 = vmatprep.subr.bf16.mxu0 0
      %3010 = vmatpush2.bf16.msra.mxu0 0
      %3011 = vmatprep.subr.bf16.mxu0 0
      %3012 = vmatpush2.bf16.msra.mxu0 0
      %3013 = vmatprep.subr.bf16.mxu0 0
      %3014 = vmatpush2.bf16.msra.mxu0 0
      %3015 = vmatprep.mubr.bf16.mxu0 0
      %3016 = vmatmul.mubr.bf16.gmra.mxu0 %v2831
      %v3017 = vpop.f32.mrf.mxu0
      %v3018 = vadd.f32 0.0, %v3017
      %v3019 = vpop.f32.mrf.mxu0
      %v3020 = vadd.f32 0.0, %v3019
      %v3021 = vpop.f32.mrf.mxu0
      %v3022 = vpop.f32.mrf.mxu0
      %3023 = vdwg.mxu0
      %3024 = vmatprep.subr.bf16.mxu0 0
      %3025 = vmatpush1.bf16.msra.mxu0 0
      %3026 = vmatprep.subr.bf16.mxu0 0
      %3027 = vmatpush1.bf16.msra.mxu0 0
      %3028 = vmatprep.subr.bf16.mxu0 0
      %3029 = vmatpush1.bf16.msra.mxu0 0
      %3030 = vmatprep.subr.bf16.mxu0 0
      %3031 = vmatpush1.bf16.msra.mxu0 0
      %3032 = vmatprep.subr.bf16.mxu0 0
      %3033 = vmatpush1.bf16.msra.mxu0 0
      %3034 = vmatprep.subr.bf16.mxu0 0
      %3035 = vmatpush1.bf16.msra.mxu0 0
      %3036 = vmatprep.subr.bf16.mxu0 0
      %3037 = vmatpush1.bf16.msra.mxu0 0
      %3038 = vmatprep.subr.bf16.mxu0 0
      %3039 = vmatpush1.bf16.msra.mxu0 %v2858
      %3040 = vmatprep.subr.bf16.mxu0 0
      %3041 = vmatpush2.bf16.msra.mxu0 0
      %3042 = vmatprep.subr.bf16.mxu0 0
      %3043 = vmatpush2.bf16.msra.mxu0 0
      %3044 = vmatprep.subr.bf16.mxu0 0
      %3045 = vmatpush2.bf16.msra.mxu0 0
      %3046 = vmatprep.subr.bf16.mxu0 0
      %3047 = vmatpush2.bf16.msra.mxu0 0
      %3048 = vmatprep.subr.bf16.mxu0 0
      %3049 = vmatpush2.bf16.msra.mxu0 0
      %3050 = vmatprep.subr.bf16.mxu0 0
      %3051 = vmatpush2.bf16.msra.mxu0 0
      %3052 = vmatprep.subr.bf16.mxu0 0
      %3053 = vmatpush2.bf16.msra.mxu0 0
      %3054 = vmatprep.subr.bf16.mxu0 0
      %3055 = vmatpush2.bf16.msra.mxu0 0
      %3056 = vmatprep.mubr.bf16.mxu0 0
      %3057 = vmatmul.mubr.bf16.gmra.mxu0 %v2831
      %v3058 = vpop.f32.mrf.mxu0
      %v3059 = vadd.f32 0.0, %v3058
      %v3060 = vpop.f32.mrf.mxu0
      %v3061 = vpop.f32.mrf.mxu0
      %v3062 = vpop.f32.mrf.mxu0
      %3063 = vdwg.mxu0
      %v3064 = vadd.f32 %v2789, %v2895
      %v3065 = vadd.f32 %v2790, %v2897
      %v3066 = vadd.f32 %v2791, %v2936
      %v3067 = vadd.f32 %v2792, %v2938
      %v3068 = vadd.f32 %v2793, %v2977
      %v3069 = vadd.f32 %v2794, %v2979
      %v3070 = vadd.f32 %v2795, %v3018
      %v3071 = vadd.f32 %v2796, %v3020
      %v3072 = vadd.f32 %v2797, %v3059
      %s3073 = scalar_lea.vmem %s3, 16
      %v3074 = vld [vmem:[%s3073] sm:$0x3]
      %3075 = vrot.lane.b32.xlu0 %v900, 54
      %v3076 = vpop.permute.xlu0 %3075
      %3077 = vrot.lane.b32.xlu0 %v901, 54
      %v3078 = vpop.permute.xlu0 %3077
      %3079 = vrot.lane.b32.xlu0 %v902, 54
      %v3080 = vpop.permute.xlu0 %3079
      %3081 = vrot.lane.b32.xlu0 %v903, 54
      %v3082 = vpop.permute.xlu0 %3081
      %3083 = vrot.lane.b32.xlu0 %v904, 54
      %v3084 = vpop.permute.xlu0 %3083
      %3085 = vrot.lane.b32.xlu0 %v905, 54
      %v3086 = vpop.permute.xlu0 %3085
      %3087 = vrot.lane.b32.xlu0 %v906, 54
      %v3088 = vpop.permute.xlu0 %3087
      %3089 = vrot.lane.b32.xlu0 %v907, 54
      %v3090 = vpop.permute.xlu0 %3089
      %3091 = vrot.lane.b32.xlu0 %v908, 54
      %v3092 = vpop.permute.xlu0 %3091
      %3093 = vrot.lane.b32.xlu0 %v909, 54
      %v3094 = vpop.permute.xlu0 %3093
      %vm3095 = vcmask 441344
      %v3096 = vsel %vm3095, %v3076, %v3078
      %v3097 = vsel %vm3095, %v3078, %v3080
      %v3098 = vsel %vm3095, %v3080, %v3082
      %v3099 = vsel %vm3095, %v3082, %v3084
      %v3100 = vsel %vm3095, %v3084, %v3086
      %v3101 = vsel %vm3095, %v3086, %v3088
      %v3102 = vsel %vm3095, %v3088, %v3090
      %v3103 = vsel %vm3095, %v3090, %v3092
      %v3104 = vsel %vm3095, %v3092, %v3094
      %v3106 = vsel %vm953, %v3074, 0
      %v3109 = vsel %vm957, %v3096, 0
      %v3112 = vsel %vm957, %v3097, 0
      %v3115 = vsel %vm957, %v3098, 0
      %v3118 = vsel %vm957, %v3099, 0
      %v3121 = vsel %vm957, %v3100, 0
      %v3124 = vsel %vm957, %v3101, 0
      %v3127 = vsel %vm957, %v3102, 0
      %v3130 = vsel %vm957, %v3103, 0
      %v3133 = vsel %vm957, %v3104, 0
      %3135 = vmatprep.subr.bf16.mxu0 0
      %3136 = vmatpush1.bf16.msra.mxu0 0
      %3137 = vmatprep.subr.bf16.mxu0 0
      %3138 = vmatpush1.bf16.msra.mxu0 0
      %3139 = vmatprep.subr.bf16.mxu0 0
      %3140 = vmatpush1.bf16.msra.mxu0 0
      %3141 = vmatprep.subr.bf16.mxu0 0
      %3142 = vmatpush1.bf16.msra.mxu0 0
      %3143 = vmatprep.subr.bf16.mxu0 0
      %3144 = vmatpush1.bf16.msra.mxu0 0
      %3145 = vmatprep.subr.bf16.mxu0 0
      %3146 = vmatpush1.bf16.msra.mxu0 0
      %3147 = vmatprep.subr.bf16.mxu0 0
      %3148 = vmatpush1.bf16.msra.mxu0 0
      %3149 = vmatprep.subr.bf16.mxu0 %v3112
      %3150 = vmatpush1.bf16.msra.mxu0 %v3109
      %3151 = vmatprep.subr.bf16.mxu0 0
      %3152 = vmatpush2.bf16.msra.mxu0 0
      %3153 = vmatprep.subr.bf16.mxu0 0
      %3154 = vmatpush2.bf16.msra.mxu0 0
      %3155 = vmatprep.subr.bf16.mxu0 0
      %3156 = vmatpush2.bf16.msra.mxu0 0
      %3157 = vmatprep.subr.bf16.mxu0 0
      %3158 = vmatpush2.bf16.msra.mxu0 0
      %3159 = vmatprep.subr.bf16.mxu0 0
      %3160 = vmatpush2.bf16.msra.mxu0 0
      %3161 = vmatprep.subr.bf16.mxu0 0
      %3162 = vmatpush2.bf16.msra.mxu0 0
      %3163 = vmatprep.subr.bf16.mxu0 0
      %3164 = vmatpush2.bf16.msra.mxu0 0
      %3165 = vmatprep.subr.bf16.mxu0 0
      %3166 = vmatpush2.bf16.msra.mxu0 0
      %3167 = vmatprep.mubr.bf16.mxu0 0
      %3168 = vmatmul.mubr.bf16.gmra.mxu0 %v3106
      %v3169 = vpop.f32.mrf.mxu0
      %v3170 = vadd.f32 0.0, %v3169
      %v3171 = vpop.f32.mrf.mxu0
      %v3172 = vadd.f32 0.0, %v3171
      %v3173 = vpop.f32.mrf.mxu0
      %v3174 = vpop.f32.mrf.mxu0
      %3175 = vdwg.mxu0
      %3176 = vmatprep.subr.bf16.mxu0 0
      %3177 = vmatpush1.bf16.msra.mxu0 0
      %3178 = vmatprep.subr.bf16.mxu0 0
      %3179 = vmatpush1.bf16.msra.mxu0 0
      %3180 = vmatprep.subr.bf16.mxu0 0
      %3181 = vmatpush1.bf16.msra.mxu0 0
      %3182 = vmatprep.subr.bf16.mxu0 0
      %3183 = vmatpush1.bf16.msra.mxu0 0
      %3184 = vmatprep.subr.bf16.mxu0 0
      %3185 = vmatpush1.bf16.msra.mxu0 0
      %3186 = vmatprep.subr.bf16.mxu0 0
      %3187 = vmatpush1.bf16.msra.mxu0 0
      %3188 = vmatprep.subr.bf16.mxu0 0
      %3189 = vmatpush1.bf16.msra.mxu0 0
      %3190 = vmatprep.subr.bf16.mxu0 %v3118
      %3191 = vmatpush1.bf16.msra.mxu0 %v3115
      %3192 = vmatprep.subr.bf16.mxu0 0
      %3193 = vmatpush2.bf16.msra.mxu0 0
      %3194 = vmatprep.subr.bf16.mxu0 0
      %3195 = vmatpush2.bf16.msra.mxu0 0
      %3196 = vmatprep.subr.bf16.mxu0 0
      %3197 = vmatpush2.bf16.msra.mxu0 0
      %3198 = vmatprep.subr.bf16.mxu0 0
      %3199 = vmatpush2.bf16.msra.mxu0 0
      %3200 = vmatprep.subr.bf16.mxu0 0
      %3201 = vmatpush2.bf16.msra.mxu0 0
      %3202 = vmatprep.subr.bf16.mxu0 0
      %3203 = vmatpush2.bf16.msra.mxu0 0
      %3204 = vmatprep.subr.bf16.mxu0 0
      %3205 = vmatpush2.bf16.msra.mxu0 0
      %3206 = vmatprep.subr.bf16.mxu0 0
      %3207 = vmatpush2.bf16.msra.mxu0 0
      %3208 = vmatprep.mubr.bf16.mxu0 0
      %3209 = vmatmul.mubr.bf16.gmra.mxu0 %v3106
      %v3210 = vpop.f32.mrf.mxu0
      %v3211 = vadd.f32 0.0, %v3210
      %v3212 = vpop.f32.mrf.mxu0
      %v3213 = vadd.f32 0.0, %v3212
      %v3214 = vpop.f32.mrf.mxu0
      %v3215 = vpop.f32.mrf.mxu0
      %3216 = vdwg.mxu0
      %3217 = vmatprep.subr.bf16.mxu0 0
      %3218 = vmatpush1.bf16.msra.mxu0 0
      %3219 = vmatprep.subr.bf16.mxu0 0
      %3220 = vmatpush1.bf16.msra.mxu0 0
      %3221 = vmatprep.subr.bf16.mxu0 0
      %3222 = vmatpush1.bf16.msra.mxu0 0
      %3223 = vmatprep.subr.bf16.mxu0 0
      %3224 = vmatpush1.bf16.msra.mxu0 0
      %3225 = vmatprep.subr.bf16.mxu0 0
      %3226 = vmatpush1.bf16.msra.mxu0 0
      %3227 = vmatprep.subr.bf16.mxu0 0
      %3228 = vmatpush1.bf16.msra.mxu0 0
      %3229 = vmatprep.subr.bf16.mxu0 0
      %3230 = vmatpush1.bf16.msra.mxu0 0
      %3231 = vmatprep.subr.bf16.mxu0 %v3124
      %3232 = vmatpush1.bf16.msra.mxu0 %v3121
      %3233 = vmatprep.subr.bf16.mxu0 0
      %3234 = vmatpush2.bf16.msra.mxu0 0
      %3235 = vmatprep.subr.bf16.mxu0 0
      %3236 = vmatpush2.bf16.msra.mxu0 0
      %3237 = vmatprep.subr.bf16.mxu0 0
      %3238 = vmatpush2.bf16.msra.mxu0 0
      %3239 = vmatprep.subr.bf16.mxu0 0
      %3240 = vmatpush2.bf16.msra.mxu0 0
      %3241 = vmatprep.subr.bf16.mxu0 0
      %3242 = vmatpush2.bf16.msra.mxu0 0
      %3243 = vmatprep.subr.bf16.mxu0 0
      %3244 = vmatpush2.bf16.msra.mxu0 0
      %3245 = vmatprep.subr.bf16.mxu0 0
      %3246 = vmatpush2.bf16.msra.mxu0 0
      %3247 = vmatprep.subr.bf16.mxu0 0
      %3248 = vmatpush2.bf16.msra.mxu0 0
      %3249 = vmatprep.mubr.bf16.mxu0 0
      %3250 = vmatmul.mubr.bf16.gmra.mxu0 %v3106
      %v3251 = vpop.f32.mrf.mxu0
      %v3252 = vadd.f32 0.0, %v3251
      %v3253 = vpop.f32.mrf.mxu0
      %v3254 = vadd.f32 0.0, %v3253
      %v3255 = vpop.f32.mrf.mxu0
      %v3256 = vpop.f32.mrf.mxu0
      %3257 = vdwg.mxu0
      %3258 = vmatprep.subr.bf16.mxu0 0
      %3259 = vmatpush1.bf16.msra.mxu0 0
      %3260 = vmatprep.subr.bf16.mxu0 0
      %3261 = vmatpush1.bf16.msra.mxu0 0
      %3262 = vmatprep.subr.bf16.mxu0 0
      %3263 = vmatpush1.bf16.msra.mxu0 0
      %3264 = vmatprep.subr.bf16.mxu0 0
      %3265 = vmatpush1.bf16.msra.mxu0 0
      %3266 = vmatprep.subr.bf16.mxu0 0
      %3267 = vmatpush1.bf16.msra.mxu0 0
      %3268 = vmatprep.subr.bf16.mxu0 0
      %3269 = vmatpush1.bf16.msra.mxu0 0
      %3270 = vmatprep.subr.bf16.mxu0 0
      %3271 = vmatpush1.bf16.msra.mxu0 0
      %3272 = vmatprep.subr.bf16.mxu0 %v3130
      %3273 = vmatpush1.bf16.msra.mxu0 %v3127
      %3274 = vmatprep.subr.bf16.mxu0 0
      %3275 = vmatpush2.bf16.msra.mxu0 0
      %3276 = vmatprep.subr.bf16.mxu0 0
      %3277 = vmatpush2.bf16.msra.mxu0 0
      %3278 = vmatprep.subr.bf16.mxu0 0
      %3279 = vmatpush2.bf16.msra.mxu0 0
      %3280 = vmatprep.subr.bf16.mxu0 0
      %3281 = vmatpush2.bf16.msra.mxu0 0
      %3282 = vmatprep.subr.bf16.mxu0 0
      %3283 = vmatpush2.bf16.msra.mxu0 0
      %3284 = vmatprep.subr.bf16.mxu0 0
      %3285 = vmatpush2.bf16.msra.mxu0 0
      %3286 = vmatprep.subr.bf16.mxu0 0
      %3287 = vmatpush2.bf16.msra.mxu0 0
      %3288 = vmatprep.subr.bf16.mxu0 0
      %3289 = vmatpush2.bf16.msra.mxu0 0
      %3290 = vmatprep.mubr.bf16.mxu0 0
      %3291 = vmatmul.mubr.bf16.gmra.mxu0 %v3106
      %v3292 = vpop.f32.mrf.mxu0
      %v3293 = vadd.f32 0.0, %v3292
      %v3294 = vpop.f32.mrf.mxu0
      %v3295 = vadd.f32 0.0, %v3294
      %v3296 = vpop.f32.mrf.mxu0
      %v3297 = vpop.f32.mrf.mxu0
      %3298 = vdwg.mxu0
      %3299 = vmatprep.subr.bf16.mxu0 0
      %3300 = vmatpush1.bf16.msra.mxu0 0
      %3301 = vmatprep.subr.bf16.mxu0 0
      %3302 = vmatpush1.bf16.msra.mxu0 0
      %3303 = vmatprep.subr.bf16.mxu0 0
      %3304 = vmatpush1.bf16.msra.mxu0 0
      %3305 = vmatprep.subr.bf16.mxu0 0
      %3306 = vmatpush1.bf16.msra.mxu0 0
      %3307 = vmatprep.subr.bf16.mxu0 0
      %3308 = vmatpush1.bf16.msra.mxu0 0
      %3309 = vmatprep.subr.bf16.mxu0 0
      %3310 = vmatpush1.bf16.msra.mxu0 0
      %3311 = vmatprep.subr.bf16.mxu0 0
      %3312 = vmatpush1.bf16.msra.mxu0 0
      %3313 = vmatprep.subr.bf16.mxu0 0
      %3314 = vmatpush1.bf16.msra.mxu0 %v3133
      %3315 = vmatprep.subr.bf16.mxu0 0
      %3316 = vmatpush2.bf16.msra.mxu0 0
      %3317 = vmatprep.subr.bf16.mxu0 0
      %3318 = vmatpush2.bf16.msra.mxu0 0
      %3319 = vmatprep.subr.bf16.mxu0 0
      %3320 = vmatpush2.bf16.msra.mxu0 0
      %3321 = vmatprep.subr.bf16.mxu0 0
      %3322 = vmatpush2.bf16.msra.mxu0 0
      %3323 = vmatprep.subr.bf16.mxu0 0
      %3324 = vmatpush2.bf16.msra.mxu0 0
      %3325 = vmatprep.subr.bf16.mxu0 0
      %3326 = vmatpush2.bf16.msra.mxu0 0
      %3327 = vmatprep.subr.bf16.mxu0 0
      %3328 = vmatpush2.bf16.msra.mxu0 0
      %3329 = vmatprep.subr.bf16.mxu0 0
      %3330 = vmatpush2.bf16.msra.mxu0 0
      %3331 = vmatprep.mubr.bf16.mxu0 0
      %3332 = vmatmul.mubr.bf16.gmra.mxu0 %v3106
      %v3333 = vpop.f32.mrf.mxu0
      %v3334 = vadd.f32 0.0, %v3333
      %v3335 = vpop.f32.mrf.mxu0
      %v3336 = vpop.f32.mrf.mxu0
      %v3337 = vpop.f32.mrf.mxu0
      %3338 = vdwg.mxu0
      %v3339 = vadd.f32 %v3064, %v3170
      %v3340 = vadd.f32 %v3065, %v3172
      %v3341 = vadd.f32 %v3066, %v3211
      %v3342 = vadd.f32 %v3067, %v3213
      %v3343 = vadd.f32 %v3068, %v3252
      %v3344 = vadd.f32 %v3069, %v3254
      %v3345 = vadd.f32 %v3070, %v3293
      %v3346 = vadd.f32 %v3071, %v3295
      %v3347 = vadd.f32 %v3072, %v3334
      %v3348 = vld [vmem:[%s4] sm:$0xf]
      %3350 = vset.pattern.permute.xlu0 0
      %3351 = vperm.xlu0 %3350, %v3348
      %v3352 = vpop.permute.xlu0 %3351
      %v3354 = vadd.f32 %v3339, %v3352
      %v3355 = vadd.f32 %v3340, %v3352
      %v3356 = vadd.f32 %v3341, %v3352
      %v3357 = vadd.f32 %v3342, %v3352
      %v3358 = vadd.f32 %v3343, %v3352
      %v3359 = vadd.f32 %v3344, %v3352
      %v3360 = vadd.f32 %v3345, %v3352
      %v3361 = vadd.f32 %v3346, %v3352
      %v3362 = vadd.f32 %v3347, %v3352
      %v3363 = vtanh.pop %v3354
      %v3364 = vtanh.pop %v3355
      %v3365 = vtanh.pop %v3356
      %v3366 = vtanh.pop %v3357
      %v3367 = vtanh.pop %v3358
      %v3368 = vtanh.pop %v3359
      %v3369 = vtanh.pop %v3360
      %v3370 = vtanh.pop %v3361
      %v3371 = vtanh.pop %v3362
      %v3380 = vcombine.low %v3363, %v3364
      %v3381 = vcombine.low %v3365, %v3366
      %v3382 = vcombine.low %v3367, %v3368
      %v3383 = vcombine.low %v3369, %v3370
      %3388 = vst [vmem:[%s224] sm:$0xff] %v3380
      %3389 = vst [vmem:[%s224 + $0x8] sm:$0xff] %v3381
      %3390 = vst [vmem:[%s224 + $0x10] sm:$0xff] %v3382
      %3391 = vst [vmem:[%s224 + $0x18] sm:$0xff] %v3383
      %3392 = vst [vmem:[%s224 + $0x20] sm:$0xf] %v3371
      %p3393 = scmp.lt.s32.totalorder %s16, 1
      %s3394 = scalar_select %p3393, %s16, 1
      %s3395 = smul.addr %s3394, 9
      %s3396 = smul.addr %s3395, 4
      %s3397 = scalar_lea.vmem %s5, %s3396
      // Predicated region
      $region41: #{decoder_forward.5} parent=39 // pred_check
        %p3398 = pneg %p144
      $region42: #{decoder_forward.5} parent=39 // pred_check_branch
        %3400 = sbr.rel (%p3398) target = $region44
      $region43: #{decoder_forward.5} parent=39 // pred_region
        _
      $region44: #{decoder_forward.5} parent=39 // pred_fallthru
        _
    $region40: #{decoder_forward.5} parent=5 // pred_fallthru
      _
    %p3401 = scmp.le.s32.totalorder 2, %s11
    // Predicated region
    $region45: #{decoder_forward.5} parent=5 // pred_check
      %p3402 = pneg %p3401
    $region46: #{decoder_forward.5} parent=5 // pred_check_branch
      %3404 = sbr.rel (%p3402) target = $region48
    $region47: #{decoder_forward.5} parent=5 // pred_region
      %s3405 = ssub.s32 %s11, 2
      // Predicated region
      $region49: #{decoder_forward.5} parent=47 // pred_check
        %p3406 = pneg %p150
      $region50: #{decoder_forward.5} parent=47 // pred_check_branch
        %3408 = sbr.rel (%p3406) target = $region52
      $region51: #{decoder_forward.5} parent=47 // pred_region
        %p3409 = scmp.lt.s32.totalorder %s17, 1
        %s3410 = scalar_select %p3409, %s17, 1
        %s3411 = smul.addr %s3410, 9
        %s3412 = smul.addr %s3411, 4
        %s3413 = scalar_lea.vmem %s5, %s3412
      $region52: #{decoder_forward.5} parent=47 // pred_fallthru
        _
    $region48: #{decoder_forward.5} parent=5 // pred_fallthru
      _
  $region6: #{decoder_forward.5} parent=0 // loop_footer
    %s15 = sadd.s32 1, %s11
  $region7: #{decoder_forward.5} parent=0 // loop_footer_branch
    %10 = sbr.rel target = $region3
  $region8: #{decoder_forward.5} parent=0 // loop_exit
    _

</llo_original>
